<compile_context>
chip_gen: v7x
topology: tpu7x:2x2x1
jax: 0.10.0
libtpu: 0.0.40
codegen_flags: <defaults>
</compile_context>

<pallas_src>
import functools

import jax
import jax.numpy as jnp
import numpy as np
from jax.experimental import pallas as pl
from jax.experimental.pallas import tpu as pltpu

BN_EPS = 1e-5


def _xiconv_kernel(x_ref, wc_ref, wm_ref, g_ref, b_ref, pr_ref, pt_ref,
                   wpw_ref, wa_ref, out_ref, tpad_ref, apad_ref, *, n, h, w):
    rows = n * h
    wcmid = wc_ref.shape[1]        # W * Cmid
    wcout = wm_ref.shape[2]        # W * Cout
    wcatt = wpw_ref.shape[1]       # W * Catt

    # ---- compression 1x1 conv, skip branch folded into the contraction ----
    # x_ref: (N*H, W*(Cin+1)) bf16, wc_ref: block-diag (W*(Cin+1), W*Cmid) bf16
    t = jnp.dot(x_ref[...], wc_ref[...], preferred_element_type=jnp.float32)
    t = t.astype(jnp.bfloat16)                                # (rows, W*Cmid)

    # ---- main 3x3 SAME conv: 3 banded matmuls (one per vertical tap) -------
    # vertical SAME padding via a halo-padded scratch; only halo rows zeroed.
    tpad_ref[:, pl.ds(0, 1), :] = jnp.zeros((n, 1, wcmid), jnp.bfloat16)
    tpad_ref[:, pl.ds(h + 1, 1), :] = jnp.zeros((n, 1, wcmid), jnp.bfloat16)
    tpad_ref[:, pl.ds(1, h), :] = t.reshape(n, h, wcmid)

    y = jnp.zeros((rows, wcout), jnp.float32)
    for ky in range(3):
        s = tpad_ref[:, pl.ds(ky, h), :].reshape(rows, wcmid)
        y = y + jnp.dot(s, wm_ref[ky], preferred_element_type=jnp.float32)

    # ---- BatchNorm2d (training-mode batch stats), single pass --------------
    # channels are interleaved along lanes; fold the W blocks with pr_ref and
    # re-tile the per-channel scale/shift with pt_ref (tiny matmuls).
    inv_cnt = 1.0 / float(rows * w)
    csum = jnp.dot(jnp.sum(y, axis=0, keepdims=True), pr_ref[...],
                   preferred_element_type=jnp.float32)         # (1, Cout)
    csumsq = jnp.dot(jnp.sum(y * y, axis=0, keepdims=True), pr_ref[...],
                     preferred_element_type=jnp.float32)       # (1, Cout)
    mean = csum * inv_cnt
    var = csumsq * inv_cnt - mean * mean
    scale = g_ref[...] * jax.lax.rsqrt(var + BN_EPS)           # (1, Cout)
    shift = b_ref[...] - mean * scale
    scale_t = jnp.dot(scale, pt_ref[...], preferred_element_type=jnp.float32)
    shift_t = jnp.dot(shift, pt_ref[...], preferred_element_type=jnp.float32)
    y = y * scale_t + shift_t

    # ---- SiLU (sigmoid reciprocal on the EUP) -------------------------------
    y = y * pl.reciprocal(1.0 + jnp.exp(-y), approx=True)

    # ---- lite attention: 1x1 pw conv -> 3x3 SAME conv -> sigmoid -> gate ----
    a = jnp.dot(y.astype(jnp.bfloat16), wpw_ref[...],
                preferred_element_type=jnp.float32).astype(jnp.bfloat16)
    apad_ref[:, pl.ds(0, 1), :] = jnp.zeros((n, 1, wcatt), jnp.bfloat16)
    apad_ref[:, pl.ds(h + 1, 1), :] = jnp.zeros((n, 1, wcatt), jnp.bfloat16)
    apad_ref[:, pl.ds(1, h), :] = a.reshape(n, h, wcatt)

    att = jnp.zeros((rows, wcout), jnp.float32)
    for ky in range(3):
        s = apad_ref[:, pl.ds(ky, h), :].reshape(rows, wcatt)
        att = att + jnp.dot(s, wa_ref[ky], preferred_element_type=jnp.float32)
    att = pl.reciprocal(1.0 + jnp.exp(-att), approx=True)

    # ---- lane-dense store: (N*H, W*Cout) slab -------------------------------
    out_ref[...] = (y * att).astype(out_ref.dtype)


def _block_diag(mat, w):
    """kron(I_w, mat): per-pixel 1x1 conv in the merged (rows, W*C) layout."""
    return jnp.kron(jnp.eye(w, dtype=mat.dtype), mat)


def _banded_h(wm_ky, w):
    """Banded (W*Cin, W*Cout) matrix = horizontal taps of a 3-wide SAME conv.

    wm_ky: (3, Cin, Cout) — the kx taps for one vertical tap ky.
    """
    out = jnp.zeros((w * wm_ky.shape[1], w * wm_ky.shape[2]), wm_ky.dtype)
    for kx in range(3):
        sel = np.zeros((w, w), np.float32)
        for w1 in range(w):
            w2 = w1 + kx - 1
            if 0 <= w2 < w:                      # out-of-range == SAME zero pad
                sel[w2, w1] = 1.0
        out = out + jnp.kron(jnp.asarray(sel).astype(wm_ky.dtype), wm_ky[kx])
    return out


def init_params(key, c_in, c_out, gamma=4):
    comp = int(gamma)
    c_mid = c_out // comp
    c_att = c_out // comp // 2          # attention_lite_ch_in
    ks = jax.random.split(key, 7)

    def w(k, shape, fan_in):
        return jax.random.normal(k, shape, jnp.float32) * (1.0 / np.sqrt(fan_in))

    return dict(
        w_comp=w(ks[0], (c_in, c_mid), c_in),                 # compression 1x1
        w_skip=w(ks[1], (1, 1, 1, c_mid), 1),                 # skip 1x1 (1 in-ch)
        w_main=w(ks[2], (3, 3, c_mid, c_out), 9 * c_mid),     # main 3x3, HWIO
        bn_gamma=1.0 + 0.1 * jax.random.normal(ks[3], (1, c_out), jnp.float32),
        bn_beta=0.1 * jax.random.normal(ks[4], (1, c_out), jnp.float32),
        w_att_pw=w(ks[5], (c_out, c_att), c_out),             # attention pw 1x1
        w_att=w(ks[6], (3, 3, c_att, c_out), 9 * c_att),      # attention 3x3, HWIO
    )


def xiconv_forward(x_nchw, skip_nchw, params):
    """XiConv forward on list input [x, skip]; returns NCHW output."""
    N, Cin, H, W = x_nchw.shape
    _, Cs, Hs, Ws = skip_nchw.shape
    assert Cs == 1 and Hs % H == 0 and Ws % W == 0

    # AdaptiveAvgPool2d((H, W)) with integer ratio == non-overlapping avg pool.
    s = skip_nchw.reshape(N, Hs, Ws).reshape(N, H, Hs // H, W, Ws // W).mean(axis=(2, 4))
    s = s[..., None]                                       # (N, H, W, 1)

    # TODO(synk): in a full XiNet, keep activations NHWC end-to-end; the NCHW
    # transposes here only exist to match the PyTorch module interface.
    x = jnp.transpose(x_nchw, (0, 2, 3, 1))                # NCHW -> NHWC
    x_aug = jnp.concatenate([x, s], axis=-1)               # (N, H, W, Cin+1)
    x_m = x_aug.reshape(N * H, W * (Cin + 1)).astype(jnp.bfloat16)

    wc = params["w_comp"]
    ws = params["w_skip"].reshape(1, -1)                   # (1, Cmid)
    wm = params["w_main"]
    wap = params["w_att_pw"]
    wa = params["w_att"]
    Cmid, Cout, Catt = wc.shape[1], wm.shape[3], wap.shape[1]

    # Structured weights for the merged lane-dense layout (built once; tiny).
    wc_aug = jnp.concatenate([wc, ws], axis=0)             # (Cin+1, Cmid)
    wc_blk = _block_diag(wc_aug, W).astype(jnp.bfloat16)   # (W*(Cin+1), W*Cmid)
    wm_band = jnp.stack([_banded_h(wm[ky], W) for ky in range(3)]
                        ).astype(jnp.bfloat16)             # (3, W*Cmid, W*Cout)
    wpw_blk = _block_diag(wap, W).astype(jnp.bfloat16)     # (W*Cout, W*Catt)
    wa_band = jnp.stack([_banded_h(wa[ky], W) for ky in range(3)]
                        ).astype(jnp.bfloat16)             # (3, W*Catt, W*Cout)

    # BN channel fold / tile patterns (channels interleaved along lanes).
    p_reduce = jnp.kron(jnp.ones((W, 1), jnp.float32),
                        jnp.eye(Cout, dtype=jnp.float32))  # (W*Cout, Cout)
    p_tile = jnp.kron(jnp.ones((1, W), jnp.float32),
                      jnp.eye(Cout, dtype=jnp.float32))    # (Cout, W*Cout)

    g = params["bn_gamma"].reshape(1, Cout)
    b = params["bn_beta"].reshape(1, Cout)

    kern = functools.partial(_xiconv_kernel, n=N, h=H, w=W)
    vmem = pl.BlockSpec(memory_space=pltpu.MemorySpace.VMEM)
    out = pl.pallas_call(
        kern,
        out_shape=jax.ShapeDtypeStruct((N * H, W * Cout), jnp.float32),
        in_specs=[vmem] * 9,
        out_specs=vmem,
        scratch_shapes=[
            pltpu.VMEM((N, H + 2, W * Cmid), jnp.bfloat16),   # halo-padded t
            pltpu.VMEM((N, H + 2, W * Catt), jnp.bfloat16),   # halo-padded att-in
        ],
        compiler_params=pltpu.CompilerParams(vmem_limit_bytes=32 * 1024 * 1024),
    )(x_m, wc_blk, wm_band, g, b, p_reduce, p_tile, wpw_blk, wa_band)

    out_img = out.reshape(N, H, W, Cout)
    return jnp.transpose(out_img, (0, 3, 1, 2))            # NHWC -> NCHW


def xiconv_ref(x_nchw, skip_nchw, params):
    """Pure-JAX f32 reference (lax.conv) mirroring the PyTorch forward."""
    N, Cin, H, W = x_nchw.shape
    _, _, Hs, Ws = skip_nchw.shape
    x = jnp.transpose(x_nchw, (0, 2, 3, 1))
    s = skip_nchw.reshape(N, Hs, Ws).reshape(N, H, Hs // H, W, Ws // W).mean(axis=(2, 4))[..., None]

    conv = functools.partial(jax.lax.conv_general_dilated, window_strides=(1, 1),
                             dimension_numbers=("NHWC", "HWIO", "NHWC"),
                             precision=jax.lax.Precision.HIGHEST)
    t = conv(x, params["w_comp"][None, None], padding="VALID")
    t = t + conv(s, params["w_skip"].reshape(1, 1, 1, -1), padding="VALID")
    y = conv(t, params["w_main"], padding="SAME")
    mean = y.mean(axis=(0, 1, 2))
    var = ((y - mean) ** 2).mean(axis=(0, 1, 2))
    y = (y - mean) / jnp.sqrt(var + BN_EPS) * params["bn_gamma"].reshape(-1) + params["bn_beta"].reshape(-1)
    y = y * jax.nn.sigmoid(y)
    a = conv(y, params["w_att_pw"][None, None], padding="VALID")
    att = jax.nn.sigmoid(conv(a, params["w_att"], padding="SAME"))
    return jnp.transpose(y * att, (0, 3, 1, 2))


if __name__ == "__main__":
    key = jax.random.PRNGKey(0)
    kx, kskip, kp = jax.random.split(key, 3)

    N, Cin, Cout, H, W = 2, 8, 32, 16, 16
    x = jax.random.normal(kx, (N, Cin, H, W), jnp.float32)              # NCHW input
    skip = jax.random.normal(kskip, (N, 1, 2 * H, 2 * W), jnp.float32)  # skip, skip_res=(H, W)
    params = init_params(kp, Cin, Cout, gamma=4)

    out = jax.block_until_ready(xiconv_forward(x, skip, params))
    ref = jax.block_until_ready(xiconv_ref(x, skip, params))

    assert out.shape == (N, Cout, H, W)
    # bf16 MXU operands + approx reciprocal sigmoid: expect ~1e-3..1e-2 deviation
    # from the f32 reference.
    np.testing.assert_allclose(np.asarray(out), np.asarray(ref), atol=2e-2, rtol=2e-2)
    # TODO(synk): nn.MaxPool2d (pool=None) and nn.Dropout (dropout_rate=0) are
    # disabled in the default config and therefore not implemented in-kernel.
    print("KERNEL_OK")
</pallas_src>

<mosaic_0001>
module attributes {stable_mosaic.version = 11 : i64} {
  func.func @_xiconv_kernel(%arg0: memref<32x144xbf16, #tpu.memory_space<vmem>>, %arg1: memref<144x128xbf16, #tpu.memory_space<vmem>>, %arg2: memref<3x128x512xbf16, #tpu.memory_space<vmem>>, %arg3: memref<1x32xf32, #tpu.memory_space<vmem>>, %arg4: memref<1x32xf32, #tpu.memory_space<vmem>>, %arg5: memref<512x32xf32, #tpu.memory_space<vmem>>, %arg6: memref<32x512xf32, #tpu.memory_space<vmem>>, %arg7: memref<512x64xbf16, #tpu.memory_space<vmem>>, %arg8: memref<3x64x512xbf16, #tpu.memory_space<vmem>>, %arg9: memref<32x512xf32, #tpu.memory_space<vmem>>, %arg10: memref<2x18x128xbf16, #tpu.memory_space<vmem>>, %arg11: memref<2x18x64xbf16, #tpu.memory_space<vmem>>) attributes {dimension_semantics = [], scalar_prefetch = 0 : i64, scratch_operands = 2 : i64, tpu.core_type = #tpu.core_type<tc>} {
    %c0 = arith.constant 0 : index
    %c0_0 = arith.constant 0 : index
    %0 = vector.load %arg0[%c0, %c0_0] : memref<32x144xbf16, #tpu.memory_space<vmem>>, vector<32x144xbf16>
    %c0_1 = arith.constant 0 : index
    %c0_2 = arith.constant 0 : index
    %1 = vector.load %arg1[%c0_1, %c0_2] : memref<144x128xbf16, #tpu.memory_space<vmem>>, vector<144x128xbf16>
    %cst = arith.constant dense<0.000000e+00> : vector<32x128xf32>
    %2 = tpu.matmul %0, %1, %cst {dimension_numbers = #tpu.dot_dimension_numbers<[1], [0], [0], [1], [0, 0, 1, 1], [], []>} : vector<32x144xbf16>, vector<144x128xbf16>, vector<32x128xf32> -> vector<32x128xf32>
    %3 = arith.truncf %2 : vector<32x128xf32> to vector<32x128xbf16>
    %cst_3 = arith.constant 0.000000e+00 : bf16
    %4 = vector.broadcast %cst_3 : bf16 to vector<2x1x128xbf16>
    %c0_4 = arith.constant 0 : index
    %c0_5 = arith.constant 0 : index
    %c0_6 = arith.constant 0 : index
    %5 = vector.load %arg10[%c0_4, %c0_5, %c0_6] : memref<2x18x128xbf16, #tpu.memory_space<vmem>>, vector<2x1x128xbf16>
    tpu.vector_store %arg10[%c0_4, %c0_5, %c0_6], %4 {strides = array<i32>} : memref<2x18x128xbf16, #tpu.memory_space<vmem>>, vector<2x1x128xbf16>,
    %cst_7 = arith.constant 0.000000e+00 : bf16
    %6 = vector.broadcast %cst_7 : bf16 to vector<2x1x128xbf16>
    %c0_8 = arith.constant 0 : index
    %c17 = arith.constant 17 : index
    %c0_9 = arith.constant 0 : index
    %7 = vector.load %arg10[%c0_8, %c17, %c0_9] : memref<2x18x128xbf16, #tpu.memory_space<vmem>>, vector<2x1x128xbf16>
    tpu.vector_store %arg10[%c0_8, %c17, %c0_9], %6 {strides = array<i32>} : memref<2x18x128xbf16, #tpu.memory_space<vmem>>, vector<2x1x128xbf16>,
    %8 = vector.shape_cast %3 : vector<32x128xbf16> to vector<2x16x128xbf16>
    %c0_10 = arith.constant 0 : index
    %c1 = arith.constant 1 : index
    %c0_11 = arith.constant 0 : index
    %9 = vector.load %arg10[%c0_10, %c1, %c0_11] : memref<2x18x128xbf16, #tpu.memory_space<vmem>>, vector<2x16x128xbf16>
    tpu.vector_store %arg10[%c0_10, %c1, %c0_11], %8 {strides = array<i32>} : memref<2x18x128xbf16, #tpu.memory_space<vmem>>, vector<2x16x128xbf16>,
    %cst_12 = arith.constant 0.000000e+00 : f32
    %10 = vector.broadcast %cst_12 : f32 to vector<32x512xf32>
    %c0_13 = arith.constant 0 : index
    %c0_14 = arith.constant 0 : index
    %c0_15 = arith.constant 0 : index
    %11 = vector.load %arg10[%c0_13, %c0_14, %c0_15] : memref<2x18x128xbf16, #tpu.memory_space<vmem>>, vector<2x16x128xbf16>
    %12 = vector.shape_cast %11 : vector<2x16x128xbf16> to vector<32x128xbf16>
    %c0_16 = arith.constant 0 : index
    %c0_17 = arith.constant 0 : index
    %c0_18 = arith.constant 0 : index
    %13 = vector.load %arg2[%c0_16, %c0_17, %c0_18] : memref<3x128x512xbf16, #tpu.memory_space<vmem>>, vector<1x128x512xbf16>
    %14 = vector.shape_cast %13 : vector<1x128x512xbf16> to vector<128x512xbf16>
    %cst_19 = arith.constant dense<0.000000e+00> : vector<32x512xf32>
    %15 = tpu.matmul %12, %14, %cst_19 {dimension_numbers = #tpu.dot_dimension_numbers<[1], [0], [0], [1], [0, 0, 1, 1], [], []>} : vector<32x128xbf16>, vector<128x512xbf16>, vector<32x512xf32> -> vector<32x512xf32>
    %16 = arith.addf %10, %15 : vector<32x512xf32>
    %c0_20 = arith.constant 0 : index
    %c1_21 = arith.constant 1 : index
    %c0_22 = arith.constant 0 : index
    %17 = vector.load %arg10[%c0_20, %c1_21, %c0_22] : memref<2x18x128xbf16, #tpu.memory_space<vmem>>, vector<2x16x128xbf16>
    %18 = vector.shape_cast %17 : vector<2x16x128xbf16> to vector<32x128xbf16>
    %c1_23 = arith.constant 1 : index
    %c0_24 = arith.constant 0 : index
    %c0_25 = arith.constant 0 : index
    %19 = vector.load %arg2[%c1_23, %c0_24, %c0_25] : memref<3x128x512xbf16, #tpu.memory_space<vmem>>, vector<1x128x512xbf16>
    %20 = vector.shape_cast %19 : vector<1x128x512xbf16> to vector<128x512xbf16>
    %cst_26 = arith.constant dense<0.000000e+00> : vector<32x512xf32>
    %21 = tpu.matmul %18, %20, %cst_26 {dimension_numbers = #tpu.dot_dimension_numbers<[1], [0], [0], [1], [0, 0, 1, 1], [], []>} : vector<32x128xbf16>, vector<128x512xbf16>, vector<32x512xf32> -> vector<32x512xf32>
    %22 = arith.addf %16, %21 : vector<32x512xf32>
    %c0_27 = arith.constant 0 : index
    %c2 = arith.constant 2 : index
    %c0_28 = arith.constant 0 : index
    %23 = vector.load %arg10[%c0_27, %c2, %c0_28] : memref<2x18x128xbf16, #tpu.memory_space<vmem>>, vector<2x16x128xbf16>
    %24 = vector.shape_cast %23 : vector<2x16x128xbf16> to vector<32x128xbf16>
    %c2_29 = arith.constant 2 : index
    %c0_30 = arith.constant 0 : index
    %c0_31 = arith.constant 0 : index
    %25 = vector.load %arg2[%c2_29, %c0_30, %c0_31] : memref<3x128x512xbf16, #tpu.memory_space<vmem>>, vector<1x128x512xbf16>
    %26 = vector.shape_cast %25 : vector<1x128x512xbf16> to vector<128x512xbf16>
    %cst_32 = arith.constant dense<0.000000e+00> : vector<32x512xf32>
    %27 = tpu.matmul %24, %26, %cst_32 {dimension_numbers = #tpu.dot_dimension_numbers<[1], [0], [0], [1], [0, 0, 1, 1], [], []>} : vector<32x128xbf16>, vector<128x512xbf16>, vector<32x512xf32> -> vector<32x512xf32>
    %28 = arith.addf %22, %27 : vector<32x512xf32>
    %cst_33 = arith.constant dense<0.000000e+00> : vector<512xf32>
    %29 = vector.multi_reduction <add>, %28, %cst_33 [0] : vector<32x512xf32> to vector<512xf32>
    %30 = vector.shape_cast %29 : vector<512xf32> to vector<1x512xf32>
    %c0_34 = arith.constant 0 : index
    %c0_35 = arith.constant 0 : index
    %31 = vector.load %arg5[%c0_34, %c0_35] : memref<512x32xf32, #tpu.memory_space<vmem>>, vector<512x32xf32>
    %cst_36 = arith.constant dense<0.000000e+00> : vector<1x32xf32>
    %32 = tpu.matmul %30, %31, %cst_36 {dimension_numbers = #tpu.dot_dimension_numbers<[1], [0], [0], [1], [0, 0, 1, 1], [], []>} : vector<1x512xf32>, vector<512x32xf32>, vector<1x32xf32> -> vector<1x32xf32>
    %33 = arith.mulf %28, %28 : vector<32x512xf32>
    %cst_37 = arith.constant dense<0.000000e+00> : vector<512xf32>
    %34 = vector.multi_reduction <add>, %33, %cst_37 [0] : vector<32x512xf32> to vector<512xf32>
    %35 = vector.shape_cast %34 : vector<512xf32> to vector<1x512xf32>
    %c0_38 = arith.constant 0 : index
    %c0_39 = arith.constant 0 : index
    %36 = vector.load %arg5[%c0_38, %c0_39] : memref<512x32xf32, #tpu.memory_space<vmem>>, vector<512x32xf32>
    %cst_40 = arith.constant dense<0.000000e+00> : vector<1x32xf32>
    %37 = tpu.matmul %35, %36, %cst_40 {dimension_numbers = #tpu.dot_dimension_numbers<[1], [0], [0], [1], [0, 0, 1, 1], [], []>} : vector<1x512xf32>, vector<512x32xf32>, vector<1x32xf32> -> vector<1x32xf32>
    %cst_41 = arith.constant 0.001953125 : f32
    %38 = vector.broadcast %cst_41 : f32 to vector<1x32xf32>
    %39 = arith.mulf %32, %38 : vector<1x32xf32>
    %cst_42 = arith.constant 0.001953125 : f32
    %40 = vector.broadcast %cst_42 : f32 to vector<1x32xf32>
    %41 = arith.mulf %37, %40 : vector<1x32xf32>
    %42 = arith.mulf %39, %39 : vector<1x32xf32>
    %43 = arith.subf %41, %42 : vector<1x32xf32>
    %c0_43 = arith.constant 0 : index
    %c0_44 = arith.constant 0 : index
    %44 = vector.load %arg3[%c0_43, %c0_44] : memref<1x32xf32, #tpu.memory_space<vmem>>, vector<1x32xf32>
    %cst_45 = arith.constant 9.99999974E-6 : f32
    %45 = vector.broadcast %cst_45 : f32 to vector<1x32xf32>
    %46 = arith.addf %43, %45 : vector<1x32xf32>
    %47 = math.rsqrt %46 : vector<1x32xf32>
    %48 = arith.mulf %44, %47 : vector<1x32xf32>
    %c0_46 = arith.constant 0 : index
    %c0_47 = arith.constant 0 : index
    %49 = vector.load %arg4[%c0_46, %c0_47] : memref<1x32xf32, #tpu.memory_space<vmem>>, vector<1x32xf32>
    %50 = arith.mulf %39, %48 : vector<1x32xf32>
    %51 = arith.subf %49, %50 : vector<1x32xf32>
    %c0_48 = arith.constant 0 : index
    %c0_49 = arith.constant 0 : index
    %52 = vector.load %arg6[%c0_48, %c0_49] : memref<32x512xf32, #tpu.memory_space<vmem>>, vector<32x512xf32>
    %cst_50 = arith.constant dense<0.000000e+00> : vector<1x512xf32>
    %53 = tpu.matmul %48, %52, %cst_50 {dimension_numbers = #tpu.dot_dimension_numbers<[1], [0], [0], [1], [0, 0, 1, 1], [], []>} : vector<1x32xf32>, vector<32x512xf32>, vector<1x512xf32> -> vector<1x512xf32>
    %c0_51 = arith.constant 0 : index
    %c0_52 = arith.constant 0 : index
    %54 = vector.load %arg6[%c0_51, %c0_52] : memref<32x512xf32, #tpu.memory_space<vmem>>, vector<32x512xf32>
    %cst_53 = arith.constant dense<0.000000e+00> : vector<1x512xf32>
    %55 = tpu.matmul %51, %54, %cst_53 {dimension_numbers = #tpu.dot_dimension_numbers<[1], [0], [0], [1], [0, 0, 1, 1], [], []>} : vector<1x32xf32>, vector<32x512xf32>, vector<1x512xf32> -> vector<1x512xf32>
    %56 = vector.broadcast %53 : vector<1x512xf32> to vector<32x512xf32>
    %57 = arith.mulf %28, %56 : vector<32x512xf32>
    %58 = vector.broadcast %55 : vector<1x512xf32> to vector<32x512xf32>
    %59 = arith.addf %57, %58 : vector<32x512xf32>
    %cst_54 = arith.constant 0.000000e+00 : f32
    %60 = vector.broadcast %cst_54 : f32 to vector<32x512xf32>
    %61 = arith.subf %60, %59 : vector<32x512xf32>
    %62 = math.exp %61 : vector<32x512xf32>
    %cst_55 = arith.constant 1.000000e+00 : f32
    %63 = vector.broadcast %cst_55 : f32 to vector<32x512xf32>
    %64 = arith.addf %63, %62 : vector<32x512xf32>
    %65 = tpu.reciprocal %64 {approx = true} : vector<32x512xf32> -> vector<32x512xf32>
    %66 = arith.mulf %59, %65 : vector<32x512xf32>
    %67 = arith.truncf %66 : vector<32x512xf32> to vector<32x512xbf16>
    %c0_56 = arith.constant 0 : index
    %c0_57 = arith.constant 0 : index
    %68 = vector.load %arg7[%c0_56, %c0_57] : memref<512x64xbf16, #tpu.memory_space<vmem>>, vector<512x64xbf16>
    %cst_58 = arith.constant dense<0.000000e+00> : vector<32x64xf32>
    %69 = tpu.matmul %67, %68, %cst_58 {dimension_numbers = #tpu.dot_dimension_numbers<[1], [0], [0], [1], [0, 0, 1, 1], [], []>} : vector<32x512xbf16>, vector<512x64xbf16>, vector<32x64xf32> -> vector<32x64xf32>
    %70 = arith.truncf %69 : vector<32x64xf32> to vector<32x64xbf16>
    %cst_59 = arith.constant 0.000000e+00 : bf16
    %71 = vector.broadcast %cst_59 : bf16 to vector<2x1x64xbf16>
    %c0_60 = arith.constant 0 : index
    %c0_61 = arith.constant 0 : index
    %c0_62 = arith.constant 0 : index
    %72 = vector.load %arg11[%c0_60, %c0_61, %c0_62] : memref<2x18x64xbf16, #tpu.memory_space<vmem>>, vector<2x1x64xbf16>
    tpu.vector_store %arg11[%c0_60, %c0_61, %c0_62], %71 {strides = array<i32>} : memref<2x18x64xbf16, #tpu.memory_space<vmem>>, vector<2x1x64xbf16>,
    %cst_63 = arith.constant 0.000000e+00 : bf16
    %73 = vector.broadcast %cst_63 : bf16 to vector<2x1x64xbf16>
    %c0_64 = arith.constant 0 : index
    %c17_65 = arith.constant 17 : index
    %c0_66 = arith.constant 0 : index
    %74 = vector.load %arg11[%c0_64, %c17_65, %c0_66] : memref<2x18x64xbf16, #tpu.memory_space<vmem>>, vector<2x1x64xbf16>
    tpu.vector_store %arg11[%c0_64, %c17_65, %c0_66], %73 {strides = array<i32>} : memref<2x18x64xbf16, #tpu.memory_space<vmem>>, vector<2x1x64xbf16>,
    %75 = vector.shape_cast %70 : vector<32x64xbf16> to vector<2x16x64xbf16>
    %c0_67 = arith.constant 0 : index
    %c1_68 = arith.constant 1 : index
    %c0_69 = arith.constant 0 : index
    %76 = vector.load %arg11[%c0_67, %c1_68, %c0_69] : memref<2x18x64xbf16, #tpu.memory_space<vmem>>, vector<2x16x64xbf16>
    tpu.vector_store %arg11[%c0_67, %c1_68, %c0_69], %75 {strides = array<i32>} : memref<2x18x64xbf16, #tpu.memory_space<vmem>>, vector<2x16x64xbf16>,
    %cst_70 = arith.constant 0.000000e+00 : f32
    %77 = vector.broadcast %cst_70 : f32 to vector<32x512xf32>
    %c0_71 = arith.constant 0 : index
    %c0_72 = arith.constant 0 : index
    %c0_73 = arith.constant 0 : index
    %78 = vector.load %arg11[%c0_71, %c0_72, %c0_73] : memref<2x18x64xbf16, #tpu.memory_space<vmem>>, vector<2x16x64xbf16>
    %79 = vector.shape_cast %78 : vector<2x16x64xbf16> to vector<32x64xbf16>
    %c0_74 = arith.constant 0 : index
    %c0_75 = arith.constant 0 : index
    %c0_76 = arith.constant 0 : index
    %80 = vector.load %arg8[%c0_74, %c0_75, %c0_76] : memref<3x64x512xbf16, #tpu.memory_space<vmem>>, vector<1x64x512xbf16>
    %81 = vector.shape_cast %80 : vector<1x64x512xbf16> to vector<64x512xbf16>
    %cst_77 = arith.constant dense<0.000000e+00> : vector<32x512xf32>
    %82 = tpu.matmul %79, %81, %cst_77 {dimension_numbers = #tpu.dot_dimension_numbers<[1], [0], [0], [1], [0, 0, 1, 1], [], []>} : vector<32x64xbf16>, vector<64x512xbf16>, vector<32x512xf32> -> vector<32x512xf32>
    %83 = arith.addf %77, %82 : vector<32x512xf32>
    %c0_78 = arith.constant 0 : index
    %c1_79 = arith.constant 1 : index
    %c0_80 = arith.constant 0 : index
    %84 = vector.load %arg11[%c0_78, %c1_79, %c0_80] : memref<2x18x64xbf16, #tpu.memory_space<vmem>>, vector<2x16x64xbf16>
    %85 = vector.shape_cast %84 : vector<2x16x64xbf16> to vector<32x64xbf16>
    %c1_81 = arith.constant 1 : index
    %c0_82 = arith.constant 0 : index
    %c0_83 = arith.constant 0 : index
    %86 = vector.load %arg8[%c1_81, %c0_82, %c0_83] : memref<3x64x512xbf16, #tpu.memory_space<vmem>>, vector<1x64x512xbf16>
    %87 = vector.shape_cast %86 : vector<1x64x512xbf16> to vector<64x512xbf16>
    %cst_84 = arith.constant dense<0.000000e+00> : vector<32x512xf32>
    %88 = tpu.matmul %85, %87, %cst_84 {dimension_numbers = #tpu.dot_dimension_numbers<[1], [0], [0], [1], [0, 0, 1, 1], [], []>} : vector<32x64xbf16>, vector<64x512xbf16>, vector<32x512xf32> -> vector<32x512xf32>
    %89 = arith.addf %83, %88 : vector<32x512xf32>
    %c0_85 = arith.constant 0 : index
    %c2_86 = arith.constant 2 : index
    %c0_87 = arith.constant 0 : index
    %90 = vector.load %arg11[%c0_85, %c2_86, %c0_87] : memref<2x18x64xbf16, #tpu.memory_space<vmem>>, vector<2x16x64xbf16>
    %91 = vector.shape_cast %90 : vector<2x16x64xbf16> to vector<32x64xbf16>
    %c2_88 = arith.constant 2 : index
    %c0_89 = arith.constant 0 : index
    %c0_90 = arith.constant 0 : index
    %92 = vector.load %arg8[%c2_88, %c0_89, %c0_90] : memref<3x64x512xbf16, #tpu.memory_space<vmem>>, vector<1x64x512xbf16>
    %93 = vector.shape_cast %92 : vector<1x64x512xbf16> to vector<64x512xbf16>
    %cst_91 = arith.constant dense<0.000000e+00> : vector<32x512xf32>
    %94 = tpu.matmul %91, %93, %cst_91 {dimension_numbers = #tpu.dot_dimension_numbers<[1], [0], [0], [1], [0, 0, 1, 1], [], []>} : vector<32x64xbf16>, vector<64x512xbf16>, vector<32x512xf32> -> vector<32x512xf32>
    %95 = arith.addf %89, %94 : vector<32x512xf32>
    %cst_92 = arith.constant 0.000000e+00 : f32
    %96 = vector.broadcast %cst_92 : f32 to vector<32x512xf32>
    %97 = arith.subf %96, %95 : vector<32x512xf32>
    %98 = math.exp %97 : vector<32x512xf32>
    %cst_93 = arith.constant 1.000000e+00 : f32
    %99 = vector.broadcast %cst_93 : f32 to vector<32x512xf32>
    %100 = arith.addf %99, %98 : vector<32x512xf32>
    %101 = tpu.reciprocal %100 {approx = true} : vector<32x512xf32> -> vector<32x512xf32>
    %102 = arith.mulf %66, %101 : vector<32x512xf32>
    %c0_94 = arith.constant 0 : index
    %c0_95 = arith.constant 0 : index
    %103 = vector.load %arg9[%c0_94, %c0_95] : memref<32x512xf32, #tpu.memory_space<vmem>>, vector<32x512xf32>
    tpu.vector_store %arg9[%c0_94, %c0_95], %102 {strides = array<i32>} : memref<32x512xf32, #tpu.memory_space<vmem>>, vector<32x512xf32>,
    return
  }
}

</mosaic_0001>

<llo_original>
// kernel: tpu_custom_call.1
$region0: #{tpu_custom_call.1}
  #allocation0 [shape = 'u32[]', space=smem, size = 0x4, offset = 0x4, fixed_abs, tag = 'smem constant byte address 0x4 - core index']
  #allocation1 [shape = 'u32[144,128]{1,0:T(1,128)}', space=vmem, size = 0x12000, scoped, tag = 'internal scratch']
  #allocation2 [shape = 'bf16[2,18,128]{2,1,0:T(8,128)(2,1)}', space=vmem, size = 0x3000, scoped, tag = 'scratch operand']
  #allocation3 [shape = 'bf16[2,18,64]{2,1,0:T(8,128)(2,1)}', space=vmem, size = 0x3000, scoped, tag = 'scratch operand']
  %s0 = inlined_call_operand.hbm [shape: bf16[32,144], index: 0, kind: input, shape index: {}]
  %s1 = inlined_call_operand.hbm [shape: bf16[144,128], index: 1, kind: input, shape index: {}]
  %s2 = inlined_call_operand.vmem [shape: bf16[3,128,512], index: 2, kind: input, shape index: {}]
  %s3 = inlined_call_operand.vmem [shape: f32[1,32], index: 3, kind: input, shape index: {}]
  %s4 = inlined_call_operand.vmem [shape: f32[1,32], index: 4, kind: input, shape index: {}]
  %s5 = inlined_call_operand.vmem [shape: f32[512,32], index: 5, kind: input, shape index: {}]
  %s6 = inlined_call_operand.vmem [shape: f32[32,512], index: 6, kind: input, shape index: {}]
  %s7 = inlined_call_operand.vmem [shape: bf16[512,64], index: 7, kind: input, shape index: {}]
  %s8 = inlined_call_operand.hbm [shape: bf16[3,64,512], index: 8, kind: input, shape index: {}]
  %s9 = inlined_call_operand.hbm [shape: f32[32,512], index: 9, kind: output, shape index: {}]
  %s10 = sld [smem:[#allocation0]]
  $region58: #{tpu_custom_call.1} parent=0
    _
  %s12 = ssub.s32 1, %s10
  %s13 = scalar_select 0, %s12, %s10
  $region1: #{tpu_custom_call.1} parent=0
    #allocation4 [shape = 'u8[16384]{0}', space=vmem, size = 0x4000, scoped, tag = 'input window, operand 0, single buffered']
    #allocation5 [shape = 's32[1]{0}', space=sflag, size = 0x4, scoped, tag = 'scoped memory for tpu_custom_call.1']
    #allocation6 [shape = 's32[1]{0}', space=sflag, size = 0x4, scoped, tag = 'scoped memory for tpu_custom_call.1']
    #allocation7 [shape = 'u8[36864]{0}', space=vmem, size = 0x9000, scoped, tag = 'input window, operand 1, single buffered']
    #allocation8 [shape = 's32[1]{0}', space=sflag, size = 0x4, scoped, tag = 'scoped memory for tpu_custom_call.1']
    #allocation9 [shape = 'u8[196608]{0}', space=vmem, size = 0x30000, scoped, tag = 'input window, operand 8, single buffered']
    #allocation10 [shape = 'u8[65536]{0}', space=vmem, size = 0x10000, scoped, tag = 'output window, operand 0, single buffered']
    %14 = vsyncpa [#allocation5], 0
    %15 = vsyncpa [#allocation8], 0
    %16 = vsyncpa [#allocation6], 0
    // Predicated region
    $region2: #{tpu_custom_call.1} parent=1 // pred_check
      _
    $region3: #{tpu_custom_call.1} parent=1 // pred_check_branch
      %18 = sbr.rel (0) target = $region5
    $region4: #{tpu_custom_call.1} parent=1 // pred_region
      %s20 = ssub.s32 512, 512
      %21 = vsyncadd [#allocation5], %s20
      %s22 = sshll.u32 [#allocation4], 4
      %s23 = int_to_ptr.vmem [resolvable:$true] %s22
      %28 = dma.hbm_to_vmem [thread:$0]  %s0, 512, %s23, [#allocation5], 128, 128, 8
    $region5: #{tpu_custom_call.1} parent=1 // pred_fallthru
      _
    // Predicated region
    $region6: #{tpu_custom_call.1} parent=1 // pred_check
      _
    $region7: #{tpu_custom_call.1} parent=1 // pred_check_branch
      %30 = sbr.rel (0) target = $region9
    $region8: #{tpu_custom_call.1} parent=1 // pred_region
      %s32 = ssub.s32 1152, 1152
      %33 = vsyncadd [#allocation8], %s32
      %s34 = sshll.u32 [#allocation7], 4
      %s35 = int_to_ptr.vmem [resolvable:$true] %s34
      %40 = dma.hbm_to_vmem [thread:$0]  %s1, 1152, %s35, [#allocation8], 64, 64, 4
    $region9: #{tpu_custom_call.1} parent=1 // pred_fallthru
      _
    // Predicated region
    $region10: #{tpu_custom_call.1} parent=1 // pred_check
      _
    $region11: #{tpu_custom_call.1} parent=1 // pred_check_branch
      %42 = sbr.rel (0) target = $region13
    $region12: #{tpu_custom_call.1} parent=1 // pred_region
      _
    $region13: #{tpu_custom_call.1} parent=1 // pred_fallthru
      _
    // Predicated region
    $region14: #{tpu_custom_call.1} parent=1 // pred_check
      _
    $region15: #{tpu_custom_call.1} parent=1 // pred_check_branch
      %44 = sbr.rel (0) target = $region17
    $region16: #{tpu_custom_call.1} parent=1 // pred_region
      _
    $region17: #{tpu_custom_call.1} parent=1 // pred_fallthru
      _
    // Predicated region
    $region18: #{tpu_custom_call.1} parent=1 // pred_check
      _
    $region19: #{tpu_custom_call.1} parent=1 // pred_check_branch
      %46 = sbr.rel (0) target = $region21
    $region20: #{tpu_custom_call.1} parent=1 // pred_region
      _
    $region21: #{tpu_custom_call.1} parent=1 // pred_fallthru
      _
    // Predicated region
    $region22: #{tpu_custom_call.1} parent=1 // pred_check
      _
    $region23: #{tpu_custom_call.1} parent=1 // pred_check_branch
      %48 = sbr.rel (0) target = $region25
    $region24: #{tpu_custom_call.1} parent=1 // pred_region
      _
    $region25: #{tpu_custom_call.1} parent=1 // pred_fallthru
      _
    // Predicated region
    $region26: #{tpu_custom_call.1} parent=1 // pred_check
      _
    $region27: #{tpu_custom_call.1} parent=1 // pred_check_branch
      %50 = sbr.rel (0) target = $region29
    $region28: #{tpu_custom_call.1} parent=1 // pred_region
      _
    $region29: #{tpu_custom_call.1} parent=1 // pred_fallthru
      _
    // Predicated region
    $region30: #{tpu_custom_call.1} parent=1 // pred_check
      _
    $region31: #{tpu_custom_call.1} parent=1 // pred_check_branch
      %52 = sbr.rel (0) target = $region33
    $region32: #{tpu_custom_call.1} parent=1 // pred_region
      _
    $region33: #{tpu_custom_call.1} parent=1 // pred_fallthru
      _
    // Predicated region
    $region34: #{tpu_custom_call.1} parent=1 // pred_check
      _
    $region35: #{tpu_custom_call.1} parent=1 // pred_check_branch
      %54 = sbr.rel (0) target = $region37
    $region36: #{tpu_custom_call.1} parent=1 // pred_region
      %s56 = ssub.s32 6144, 6144
      %57 = vsyncadd [#allocation8], %s56
      %s58 = sshll.u32 [#allocation9], 4
      %s59 = int_to_ptr.vmem [resolvable:$true] %s58
      %64 = dma.hbm_to_vmem [thread:$0]  %s8, 6144, %s59, [#allocation8], 256, 256, 16
    $region37: #{tpu_custom_call.1} parent=1 // pred_fallthru
      _
    // Predicated region
    $region38: #{tpu_custom_call.1} parent=1 // pred_check
      _
    $region39: #{tpu_custom_call.1} parent=1 // pred_check_branch
      %66 = sbr.rel (0) target = $region41
    $region40: #{tpu_custom_call.1} parent=1 // pred_region
      %67 = dma.done [#allocation5], 512
    $region41: #{tpu_custom_call.1} parent=1 // pred_fallthru
      _
    // Predicated region
    $region42: #{tpu_custom_call.1} parent=1 // pred_check
      _
    $region43: #{tpu_custom_call.1} parent=1 // pred_check_branch
      %69 = sbr.rel (0) target = $region45
    $region44: #{tpu_custom_call.1} parent=1 // pred_region
      %70 = dma.done [#allocation8], 1152
    $region45: #{tpu_custom_call.1} parent=1 // pred_fallthru
      _
    // Predicated region
    $region46: #{tpu_custom_call.1} parent=1 // pred_check
      _
    $region47: #{tpu_custom_call.1} parent=1 // pred_check_branch
      %72 = sbr.rel (0) target = $region49
    $region48: #{tpu_custom_call.1} parent=1 // pred_region
      %73 = dma.done [#allocation8], 6144
    $region49: #{tpu_custom_call.1} parent=1 // pred_fallthru
      _
    %v75 = vld [vmem:[#allocation4] sm:$0xff]
    %v76 = vld [vmem:[#allocation4 + $0x8] sm:$0xff]
    %v77 = vld [vmem:[#allocation4 + $0x10] sm:$0xff]
    %v78 = vld [vmem:[#allocation4 + $0x18] sm:$0xff]
    %v79 = vld [vmem:[#allocation7] sm:$0xf]
    %v80 = vld [vmem:[#allocation7 + $0x4] sm:$0xf]
    %v81 = vld [vmem:[#allocation7 + $0x8] sm:$0xf]
    %v82 = vld [vmem:[#allocation7 + $0xc] sm:$0xf]
    %v83 = vld [vmem:[#allocation7 + $0x10] sm:$0xf]
    %v84 = vld [vmem:[#allocation7 + $0x14] sm:$0xf]
    %v85 = vld [vmem:[#allocation7 + $0x18] sm:$0xf]
    %v86 = vld [vmem:[#allocation7 + $0x1c] sm:$0xf]
    %v87 = vld [vmem:[#allocation7 + $0x20] sm:$0xf]
    %v88 = vld [vmem:[#allocation7 + $0x24] sm:$0xf]
    %v89 = vld [vmem:[#allocation7 + $0x28] sm:$0xf]
    %v90 = vld [vmem:[#allocation7 + $0x2c] sm:$0xf]
    %v91 = vld [vmem:[#allocation7 + $0x30] sm:$0xf]
    %v92 = vld [vmem:[#allocation7 + $0x34] sm:$0xf]
    %v93 = vld [vmem:[#allocation7 + $0x38] sm:$0xf]
    %v94 = vld [vmem:[#allocation7 + $0x3c] sm:$0xf]
    %v95 = vld [vmem:[#allocation7 + $0x40] sm:$0xf]
    %v96 = vld [vmem:[#allocation7 + $0x44] sm:$0xf]
    %v101 = vunpack.c.l.b16 %v75
    %v102 = vunpack.c.h.b16 %v75
    %v103 = vunpack.c.l.b16 %v76
    %v104 = vunpack.c.h.b16 %v76
    %v105 = vunpack.c.l.b16 %v77
    %v106 = vunpack.c.h.b16 %v77
    %v107 = vunpack.c.l.b16 %v78
    %v108 = vunpack.c.h.b16 %v78
    %v109 = vpack.c.b16 %v103, %v101
    %v110 = vpack.c.b16 %v104, %v102
    %v111 = vpack.c.b16 %v107, %v105
    %v112 = vpack.c.b16 %v108, %v106
    %v133 = vunpack.c.l.b16 %v79
    %v134 = vunpack.c.l.b16 %v80
    %v135 = vunpack.c.l.b16 %v81
    %v136 = vunpack.c.l.b16 %v82
    %v137 = vunpack.c.l.b16 %v83
    %v138 = vunpack.c.l.b16 %v84
    %v139 = vunpack.c.l.b16 %v85
    %v140 = vunpack.c.l.b16 %v86
    %v141 = vunpack.c.l.b16 %v87
    %v142 = vunpack.c.l.b16 %v88
    %v143 = vunpack.c.l.b16 %v89
    %v144 = vunpack.c.l.b16 %v90
    %v145 = vunpack.c.l.b16 %v91
    %v146 = vunpack.c.l.b16 %v92
    %v147 = vunpack.c.l.b16 %v93
    %v148 = vunpack.c.l.b16 %v94
    %v149 = vunpack.c.l.b16 %v95
    %v150 = vunpack.c.l.b16 %v96
    %v151 = vpack.c.b16 %v134, %v133
    %v152 = vpack.c.b16 %v136, %v135
    %v153 = vpack.c.b16 %v138, %v137
    %v154 = vpack.c.b16 %v140, %v139
    %v155 = vpack.c.b16 %v142, %v141
    %v156 = vpack.c.b16 %v144, %v143
    %v157 = vpack.c.b16 %v146, %v145
    %v158 = vpack.c.b16 %v148, %v147
    %v159 = vpack.c.b16 %v150, %v149
    %vm169 = vcmask 130048
    %v171 = vsel %vm169, %v110, 0
    %v174 = vsel %vm169, %v112, 0
    %176 = vmatprep.subr.bf16.mxu0 0
    %177 = vmatpush1.bf16.msra.mxu0 %v151
    %178 = vmatprep.subr.bf16.mxu0 0
    %179 = vmatpush1.bf16.msra.mxu0 %v152
    %180 = vmatprep.subr.bf16.mxu0 0
    %181 = vmatpush1.bf16.msra.mxu0 %v153
    %182 = vmatprep.subr.bf16.mxu0 0
    %183 = vmatpush1.bf16.msra.mxu0 %v154
    %184 = vmatprep.subr.bf16.mxu0 0
    %185 = vmatpush1.bf16.msra.mxu0 %v155
    %186 = vmatprep.subr.bf16.mxu0 0
    %187 = vmatpush1.bf16.msra.mxu0 %v156
    %188 = vmatprep.subr.bf16.mxu0 0
    %189 = vmatpush1.bf16.msra.mxu0 %v157
    %190 = vmatprep.subr.bf16.mxu0 0
    %191 = vmatpush1.bf16.msra.mxu0 %v158
    %192 = vmatprep.subr.bf16.mxu0 0
    %193 = vmatpush1.bf16.msra.mxu0 %v159
    %194 = vmatprep.subr.bf16.mxu0 0
    %195 = vmatpush1.bf16.msra.mxu0 0
    %196 = vmatprep.subr.bf16.mxu0 0
    %197 = vmatpush1.bf16.msra.mxu0 0
    %198 = vmatprep.subr.bf16.mxu0 0
    %199 = vmatpush1.bf16.msra.mxu0 0
    %200 = vmatprep.subr.bf16.mxu0 0
    %201 = vmatpush1.bf16.msra.mxu0 0
    %202 = vmatprep.subr.bf16.mxu0 0
    %203 = vmatpush1.bf16.msra.mxu0 0
    %204 = vmatprep.subr.bf16.mxu0 0
    %205 = vmatpush1.bf16.msra.mxu0 0
    %206 = vmatprep.subr.bf16.mxu0 0
    %207 = vmatpush1.bf16.msra.mxu0 0
    %208 = vmatprep.mubr.bf16.mxu0 %v171
    %209 = vmatmul.mubr.bf16.gmra.mrb[0].mxu0 %v109
    %v210 = vpop.f32.mrb[0].mxu0
    %v211 = vadd.f32 0.0, %v210
    %v212 = vpop.f32.mrb[0].mxu0
    %v213 = vpop.f32.mrb[0].mxu0
    %v214 = vadd.f32 0.0, %v213
    %v215 = vpop.f32.mrb[0].mxu0
    %216 = vmatprep.mubr.bf16.mxu0 %v174
    %217 = vmatmul.mubr.bf16.gmra.mrb[0].mxu0 %v111
    %v218 = vpop.f32.mrb[0].mxu0
    %v219 = vadd.f32 0.0, %v218
    %v220 = vpop.f32.mrb[0].mxu0
    %v221 = vpop.f32.mrb[0].mxu0
    %v222 = vadd.f32 0.0, %v221
    %v223 = vpop.f32.mrb[0].mxu0
    %224 = vdwg.mxu0
    %v225 = vpack.c.bf16 %v214, %v211
    %v226 = vpack.c.bf16 %v222, %v219
    %vm227 = vcmask 1040384
    %vm228 = vsmask.f32 256
    %vm229 = vmand %vm227, %vm228
    %v230 = vld [vmem:[#allocation2] sm:$0x1]
    %v231 = vsel %vm229, 0, %v230
    %232 = vst [vmem:[#allocation2] sm:$0x1] %v231
    %v233 = vld [vmem:[#allocation2 + $0xc] sm:$0x1]
    %v234 = vsel %vm229, 0, %v233
    %235 = vst [vmem:[#allocation2 + $0xc] sm:$0x1] %v234
    %vm236 = vsmask.f32 7938
    %vm237 = vmand %vm227, %vm236
    %v238 = vld [vmem:[#allocation2 + $0x8] sm:$0x1]
    %v239 = vsel %vm237, 0, %v238
    %240 = vst [vmem:[#allocation2 + $0x8] sm:$0x1] %v239
    %v241 = vld [vmem:[#allocation2 + $0x14] sm:$0x1]
    %v242 = vsel %vm237, 0, %v241
    %243 = vst [vmem:[#allocation2 + $0x14] sm:$0x1] %v242
    %v246 = vunpack.c.l.b16 %v225
    %v247 = vunpack.c.h.b16 %v225
    %v248 = vunpack.c.l.b16 %v226
    %v249 = vunpack.c.h.b16 %v226
    %v250 = vpack.c.b16 %v246, %v246
    %v251 = vpack.c.b16 %v247, %v247
    %v252 = vpack.c.b16 %v248, %v248
    %v253 = vpack.c.b16 %v249, %v249
    %vm254 = vsmask.f32 4368
    %vm255 = vmor %vm228, %vm254
    %v257 = vshrl.u32 %v250, 16
    %v259 = vrot.slane %v257, 7
    %v260 = vshll.u32 %v250, 16
    %v262 = vor.u32 %v259, %v260
    %v263 = vrot.slane %v259, 4
    %v265 = vshrl.u32 %v251, 16
    %v267 = vrot.slane %v265, 7
    %v268 = vshll.u32 %v251, 16
    %v270 = vor.u32 %v267, %v268
    %v271 = vsel %vm255, %v263, %v270
    %v272 = vrot.slane %v267, 4
    %v274 = vshrl.u32 %v252, 16
    %v276 = vrot.slane %v274, 7
    %v277 = vshll.u32 %v252, 16
    %v279 = vor.u32 %v276, %v277
    %v280 = vrot.slane %v276, 4
    %v282 = vshrl.u32 %v253, 16
    %v284 = vrot.slane %v282, 7
    %v285 = vshll.u32 %v253, 16
    %v287 = vor.u32 %v284, %v285
    %v288 = vsel %vm255, %v280, %v287
    %v289 = vrot.slane %v284, 4
    %vm296 = vcmask 1043456
    %vm297 = vmand %vm296, %vm236
    %v298 = vld [vmem:[#allocation2] sm:$0xf]
    %v299 = vsel %vm297, %v262, %v298
    %300 = vst [vmem:[#allocation2] sm:$0xf] %v299
    %301 = vst [vmem:[#allocation2 + $0x4] sm:$0xf] %v271
    %v302 = vld [vmem:[#allocation2 + $0x8] sm:$0x1]
    %v303 = vsel %vm229, %v272, %v302
    %304 = vst [vmem:[#allocation2 + $0x8] sm:$0x1] %v303
    %v305 = vld [vmem:[#allocation2 + $0xc] sm:$0xf]
    %v306 = vsel %vm297, %v279, %v305
    %307 = vst [vmem:[#allocation2 + $0xc] sm:$0xf] %v306
    %308 = vst [vmem:[#allocation2 + $0x10] sm:$0xf] %v288
    %v309 = vld [vmem:[#allocation2 + $0x14] sm:$0x1]
    %v310 = vsel %vm229, %v289, %v309
    %311 = vst [vmem:[#allocation2 + $0x14] sm:$0x1] %v310
    %v312 = vld [vmem:[#allocation2] sm:$0xf]
    %v313 = vld [vmem:[#allocation2 + $0x4] sm:$0xf]
    %v314 = vld [vmem:[#allocation2 + $0xc] sm:$0xf]
    %v315 = vld [vmem:[#allocation2 + $0x10] sm:$0xf]
    %v316 = vld [vmem:[%s2] sm:$0xff]
    %v317 = vld [vmem:[%s2 + $0x8] sm:$0xff]
    %v318 = vld [vmem:[%s2 + $0x10] sm:$0xff]
    %v319 = vld [vmem:[%s2 + $0x18] sm:$0xff]
    %v320 = vld [vmem:[%s2 + $0x20] sm:$0xff]
    %v321 = vld [vmem:[%s2 + $0x28] sm:$0xff]
    %v322 = vld [vmem:[%s2 + $0x30] sm:$0xff]
    %v323 = vld [vmem:[%s2 + $0x38] sm:$0xff]
    %v324 = vld [vmem:[%s2 + $0x40] sm:$0xff]
    %v325 = vld [vmem:[%s2 + $0x48] sm:$0xff]
    %v326 = vld [vmem:[%s2 + $0x50] sm:$0xff]
    %v327 = vld [vmem:[%s2 + $0x58] sm:$0xff]
    %v328 = vld [vmem:[%s2 + $0x60] sm:$0xff]
    %v329 = vld [vmem:[%s2 + $0x68] sm:$0xff]
    %v330 = vld [vmem:[%s2 + $0x70] sm:$0xff]
    %v331 = vld [vmem:[%s2 + $0x78] sm:$0xff]
    %v332 = vld [vmem:[%s2 + $0x80] sm:$0xff]
    %v333 = vld [vmem:[%s2 + $0x88] sm:$0xff]
    %v334 = vld [vmem:[%s2 + $0x90] sm:$0xff]
    %v335 = vld [vmem:[%s2 + $0x98] sm:$0xff]
    %v336 = vld [vmem:[%s2 + $0xa0] sm:$0xff]
    %v337 = vld [vmem:[%s2 + $0xa8] sm:$0xff]
    %v338 = vld [vmem:[%s2 + $0xb0] sm:$0xff]
    %v339 = vld [vmem:[%s2 + $0xb8] sm:$0xff]
    %v340 = vld [vmem:[%s2 + $0xc0] sm:$0xff]
    %v341 = vld [vmem:[%s2 + $0xc8] sm:$0xff]
    %v342 = vld [vmem:[%s2 + $0xd0] sm:$0xff]
    %v343 = vld [vmem:[%s2 + $0xd8] sm:$0xff]
    %v344 = vld [vmem:[%s2 + $0xe0] sm:$0xff]
    %v345 = vld [vmem:[%s2 + $0xe8] sm:$0xff]
    %v346 = vld [vmem:[%s2 + $0xf0] sm:$0xff]
    %v347 = vld [vmem:[%s2 + $0xf8] sm:$0xff]
    %v348 = vld [vmem:[#allocation2 + $0x8] sm:$0x1]
    %v349 = vld [vmem:[#allocation2 + $0x14] sm:$0x1]
    %vm350 = vsmask.f32 3328
    %vm351 = vsmask.f32 7440
    %vm352 = vmor %vm350, %vm351
    %v354 = vshrl.u32 %v312, 16
    %v356 = vrot.slane %v354, 4
    %v357 = vshll.u32 %v312, 16
    %v359 = vrot.slane %v357, 5
    %v360 = vor.u32 %v356, %v359
    %v361 = vrot.slane %v360, 4
    %v363 = vshll.u32 %v313, 16
    %v365 = vrot.slane %v363, 5
    %v366 = vsel %vm352, %v361, %v365
    %v367 = vshrl.u32 %v313, 16
    %v369 = vrot.slane %v367, 4
    %v370 = vor.u32 %v369, %v365
    %v371 = vrot.slane %v370, 4
    %v373 = vshll.u32 %v348, 16
    %v375 = vrot.slane %v373, 5
    %v376 = vsel %vm352, %v371, %v375
    %v378 = vshrl.u32 %v314, 16
    %v380 = vrot.slane %v378, 4
    %v381 = vshll.u32 %v314, 16
    %v383 = vrot.slane %v381, 5
    %v384 = vor.u32 %v380, %v383
    %v385 = vrot.slane %v384, 4
    %v387 = vshll.u32 %v315, 16
    %v389 = vrot.slane %v387, 5
    %v390 = vsel %vm352, %v385, %v389
    %v391 = vshrl.u32 %v315, 16
    %v393 = vrot.slane %v391, 4
    %v394 = vor.u32 %v393, %v389
    %v395 = vrot.slane %v394, 4
    %v397 = vshll.u32 %v349, 16
    %v399 = vrot.slane %v397, 5
    %v400 = vsel %vm352, %v395, %v399
    %s401 = scalar_lea.vmem %s2, 256
    %v402 = vld [vmem:[%s401] sm:$0xff]
    %v403 = vld [vmem:[%s401 + $0x8] sm:$0xff]
    %v404 = vld [vmem:[%s401 + $0x10] sm:$0xff]
    %v405 = vld [vmem:[%s401 + $0x18] sm:$0xff]
    %v406 = vld [vmem:[%s401 + $0x20] sm:$0xff]
    %v407 = vld [vmem:[%s401 + $0x28] sm:$0xff]
    %v408 = vld [vmem:[%s401 + $0x30] sm:$0xff]
    %v409 = vld [vmem:[%s401 + $0x38] sm:$0xff]
    %v410 = vld [vmem:[%s401 + $0x40] sm:$0xff]
    %v411 = vld [vmem:[%s401 + $0x48] sm:$0xff]
    %v412 = vld [vmem:[%s401 + $0x50] sm:$0xff]
    %v413 = vld [vmem:[%s401 + $0x58] sm:$0xff]
    %v414 = vld [vmem:[%s401 + $0x60] sm:$0xff]
    %v415 = vld [vmem:[%s401 + $0x68] sm:$0xff]
    %v416 = vld [vmem:[%s401 + $0x70] sm:$0xff]
    %v417 = vld [vmem:[%s401 + $0x78] sm:$0xff]
    %v418 = vld [vmem:[%s401 + $0x80] sm:$0xff]
    %v419 = vld [vmem:[%s401 + $0x88] sm:$0xff]
    %v420 = vld [vmem:[%s401 + $0x90] sm:$0xff]
    %v421 = vld [vmem:[%s401 + $0x98] sm:$0xff]
    %v422 = vld [vmem:[%s401 + $0xa0] sm:$0xff]
    %v423 = vld [vmem:[%s401 + $0xa8] sm:$0xff]
    %v424 = vld [vmem:[%s401 + $0xb0] sm:$0xff]
    %v425 = vld [vmem:[%s401 + $0xb8] sm:$0xff]
    %v426 = vld [vmem:[%s401 + $0xc0] sm:$0xff]
    %v427 = vld [vmem:[%s401 + $0xc8] sm:$0xff]
    %v428 = vld [vmem:[%s401 + $0xd0] sm:$0xff]
    %v429 = vld [vmem:[%s401 + $0xd8] sm:$0xff]
    %v430 = vld [vmem:[%s401 + $0xe0] sm:$0xff]
    %v431 = vld [vmem:[%s401 + $0xe8] sm:$0xff]
    %v432 = vld [vmem:[%s401 + $0xf0] sm:$0xff]
    %v433 = vld [vmem:[%s401 + $0xf8] sm:$0xff]
    %v434 = vunpack.c.l.b16 %v366
    %v435 = vunpack.c.l.b16 %v376
    %v436 = vunpack.c.l.b16 %v390
    %v437 = vunpack.c.l.b16 %v400
    %v438 = vpack.c.b16 %v435, %v434
    %v439 = vpack.c.b16 %v437, %v436
    %v474 = vunpack.c.l.b16 %v402
    %v475 = vunpack.c.h.b16 %v402
    %v476 = vunpack.c.l.b16 %v403
    %v477 = vunpack.c.h.b16 %v403
    %v478 = vunpack.c.l.b16 %v404
    %v479 = vunpack.c.h.b16 %v404
    %v480 = vunpack.c.l.b16 %v405
    %v481 = vunpack.c.h.b16 %v405
    %v482 = vunpack.c.l.b16 %v406
    %v483 = vunpack.c.h.b16 %v406
    %v484 = vunpack.c.l.b16 %v407
    %v485 = vunpack.c.h.b16 %v407
    %v486 = vunpack.c.l.b16 %v408
    %v487 = vunpack.c.h.b16 %v408
    %v488 = vunpack.c.l.b16 %v409
    %v489 = vunpack.c.h.b16 %v409
    %v490 = vunpack.c.l.b16 %v410
    %v491 = vunpack.c.h.b16 %v410
    %v492 = vunpack.c.l.b16 %v411
    %v493 = vunpack.c.h.b16 %v411
    %v494 = vunpack.c.l.b16 %v412
    %v495 = vunpack.c.h.b16 %v412
    %v496 = vunpack.c.l.b16 %v413
    %v497 = vunpack.c.h.b16 %v413
    %v498 = vunpack.c.l.b16 %v414
    %v499 = vunpack.c.h.b16 %v414
    %v500 = vunpack.c.l.b16 %v415
    %v501 = vunpack.c.h.b16 %v415
    %v502 = vunpack.c.l.b16 %v416
    %v503 = vunpack.c.h.b16 %v416
    %v504 = vunpack.c.l.b16 %v417
    %v505 = vunpack.c.h.b16 %v417
    %v506 = vunpack.c.l.b16 %v418
    %v507 = vunpack.c.h.b16 %v418
    %v508 = vunpack.c.l.b16 %v419
    %v509 = vunpack.c.h.b16 %v419
    %v510 = vunpack.c.l.b16 %v420
    %v511 = vunpack.c.h.b16 %v420
    %v512 = vunpack.c.l.b16 %v421
    %v513 = vunpack.c.h.b16 %v421
    %v514 = vunpack.c.l.b16 %v422
    %v515 = vunpack.c.h.b16 %v422
    %v516 = vunpack.c.l.b16 %v423
    %v517 = vunpack.c.h.b16 %v423
    %v518 = vunpack.c.l.b16 %v424
    %v519 = vunpack.c.h.b16 %v424
    %v520 = vunpack.c.l.b16 %v425
    %v521 = vunpack.c.h.b16 %v425
    %v522 = vunpack.c.l.b16 %v426
    %v523 = vunpack.c.h.b16 %v426
    %v524 = vunpack.c.l.b16 %v427
    %v525 = vunpack.c.h.b16 %v427
    %v526 = vunpack.c.l.b16 %v428
    %v527 = vunpack.c.h.b16 %v428
    %v528 = vunpack.c.l.b16 %v429
    %v529 = vunpack.c.h.b16 %v429
    %v530 = vunpack.c.l.b16 %v430
    %v531 = vunpack.c.h.b16 %v430
    %v532 = vunpack.c.l.b16 %v431
    %v533 = vunpack.c.h.b16 %v431
    %v534 = vunpack.c.l.b16 %v432
    %v535 = vunpack.c.h.b16 %v432
    %v536 = vunpack.c.l.b16 %v433
    %v537 = vunpack.c.h.b16 %v433
    %v538 = vpack.c.b16 %v478, %v474
    %v539 = vpack.c.b16 %v479, %v475
    %v540 = vpack.c.b16 %v480, %v476
    %v541 = vpack.c.b16 %v481, %v477
    %v542 = vpack.c.b16 %v486, %v482
    %v543 = vpack.c.b16 %v487, %v483
    %v544 = vpack.c.b16 %v488, %v484
    %v545 = vpack.c.b16 %v489, %v485
    %v546 = vpack.c.b16 %v494, %v490
    %v547 = vpack.c.b16 %v495, %v491
    %v548 = vpack.c.b16 %v496, %v492
    %v549 = vpack.c.b16 %v497, %v493
    %v550 = vpack.c.b16 %v502, %v498
    %v551 = vpack.c.b16 %v503, %v499
    %v552 = vpack.c.b16 %v504, %v500
    %v553 = vpack.c.b16 %v505, %v501
    %v554 = vpack.c.b16 %v510, %v506
    %v555 = vpack.c.b16 %v511, %v507
    %v556 = vpack.c.b16 %v512, %v508
    %v557 = vpack.c.b16 %v513, %v509
    %v558 = vpack.c.b16 %v518, %v514
    %v559 = vpack.c.b16 %v519, %v515
    %v560 = vpack.c.b16 %v520, %v516
    %v561 = vpack.c.b16 %v521, %v517
    %v562 = vpack.c.b16 %v526, %v522
    %v563 = vpack.c.b16 %v527, %v523
    %v564 = vpack.c.b16 %v528, %v524
    %v565 = vpack.c.b16 %v529, %v525
    %v566 = vpack.c.b16 %v534, %v530
    %v567 = vpack.c.b16 %v535, %v531
    %v568 = vpack.c.b16 %v536, %v532
    %v569 = vpack.c.b16 %v537, %v533
    %602 = vmatprep.subr.bf16.mxu0 %v539
    %603 = vmatpush1.bf16.msra.mxu0 %v538
    %604 = vmatprep.subr.bf16.mxu0 %v543
    %605 = vmatpush1.bf16.msra.mxu0 %v542
    %606 = vmatprep.subr.bf16.mxu0 %v547
    %607 = vmatpush1.bf16.msra.mxu0 %v546
    %608 = vmatprep.subr.bf16.mxu0 %v551
    %609 = vmatpush1.bf16.msra.mxu0 %v550
    %610 = vmatprep.subr.bf16.mxu0 %v555
    %611 = vmatpush1.bf16.msra.mxu0 %v554
    %612 = vmatprep.subr.bf16.mxu0 %v559
    %613 = vmatpush1.bf16.msra.mxu0 %v558
    %614 = vmatprep.subr.bf16.mxu0 %v563
    %615 = vmatpush1.bf16.msra.mxu0 %v562
    %616 = vmatprep.subr.bf16.mxu0 %v567
    %617 = vmatpush1.bf16.msra.mxu0 %v566
    %618 = vmatprep.subr.bf16.mxu0 0
    %619 = vmatpush1.bf16.msra.mxu0 0
    %620 = vmatprep.subr.bf16.mxu0 0
    %621 = vmatpush1.bf16.msra.mxu0 0
    %622 = vmatprep.subr.bf16.mxu0 0
    %623 = vmatpush1.bf16.msra.mxu0 0
    %624 = vmatprep.subr.bf16.mxu0 0
    %625 = vmatpush1.bf16.msra.mxu0 0
    %626 = vmatprep.subr.bf16.mxu0 0
    %627 = vmatpush1.bf16.msra.mxu0 0
    %628 = vmatprep.subr.bf16.mxu0 0
    %629 = vmatpush1.bf16.msra.mxu0 0
    %630 = vmatprep.subr.bf16.mxu0 0
    %631 = vmatpush1.bf16.msra.mxu0 0
    %632 = vmatprep.subr.bf16.mxu0 0
    %633 = vmatpush1.bf16.msra.mxu0 0
    %634 = vmatprep.mubr.bf16.mxu0 0
    %635 = vmatmul.mubr.bf16.gmra.mrb[0].mxu0 %v438
    %v636 = vpop.f32.mrb[0].mxu0
    %v637 = vadd.f32 0.0, %v636
    %v638 = vpop.f32.mrb[0].mxu0
    %v639 = vadd.f32 0.0, %v638
    %v640 = vpop.f32.mrb[0].mxu0
    %v641 = vadd.f32 0.0, %v640
    %v642 = vpop.f32.mrb[0].mxu0
    %v643 = vadd.f32 0.0, %v642
    %644 = vmatprep.mubr.bf16.mxu0 0
    %645 = vmatmul.mubr.bf16.gmra.mrb[0].mxu0 %v439
    %v646 = vpop.f32.mrb[0].mxu0
    %v647 = vadd.f32 0.0, %v646
    %v648 = vpop.f32.mrb[0].mxu0
    %v649 = vadd.f32 0.0, %v648
    %v650 = vpop.f32.mrb[0].mxu0
    %v651 = vadd.f32 0.0, %v650
    %v652 = vpop.f32.mrb[0].mxu0
    %v653 = vadd.f32 0.0, %v652
    %654 = vdwg.mxu0
    %655 = vmatprep.subr.bf16.mxu0 %v541
    %656 = vmatpush1.bf16.msra.mxu0 %v540
    %657 = vmatprep.subr.bf16.mxu0 %v545
    %658 = vmatpush1.bf16.msra.mxu0 %v544
    %659 = vmatprep.subr.bf16.mxu0 %v549
    %660 = vmatpush1.bf16.msra.mxu0 %v548
    %661 = vmatprep.subr.bf16.mxu0 %v553
    %662 = vmatpush1.bf16.msra.mxu0 %v552
    %663 = vmatprep.subr.bf16.mxu0 %v557
    %664 = vmatpush1.bf16.msra.mxu0 %v556
    %665 = vmatprep.subr.bf16.mxu0 %v561
    %666 = vmatpush1.bf16.msra.mxu0 %v560
    %667 = vmatprep.subr.bf16.mxu0 %v565
    %668 = vmatpush1.bf16.msra.mxu0 %v564
    %669 = vmatprep.subr.bf16.mxu0 %v569
    %670 = vmatpush1.bf16.msra.mxu0 %v568
    %671 = vmatprep.subr.bf16.mxu0 0
    %672 = vmatpush1.bf16.msra.mxu0 0
    %673 = vmatprep.subr.bf16.mxu0 0
    %674 = vmatpush1.bf16.msra.mxu0 0
    %675 = vmatprep.subr.bf16.mxu0 0
    %676 = vmatpush1.bf16.msra.mxu0 0
    %677 = vmatprep.subr.bf16.mxu0 0
    %678 = vmatpush1.bf16.msra.mxu0 0
    %679 = vmatprep.subr.bf16.mxu0 0
    %680 = vmatpush1.bf16.msra.mxu0 0
    %681 = vmatprep.subr.bf16.mxu0 0
    %682 = vmatpush1.bf16.msra.mxu0 0
    %683 = vmatprep.subr.bf16.mxu0 0
    %684 = vmatpush1.bf16.msra.mxu0 0
    %685 = vmatprep.subr.bf16.mxu0 0
    %686 = vmatpush1.bf16.msra.mxu0 0
    %687 = vmatprep.mubr.bf16.mxu0 0
    %688 = vmatmul.mubr.bf16.gmra.mrb[0].mxu0 %v438
    %v689 = vpop.f32.mrb[0].mxu0
    %v690 = vadd.f32 0.0, %v689
    %v691 = vpop.f32.mrb[0].mxu0
    %v692 = vadd.f32 0.0, %v691
    %v693 = vpop.f32.mrb[0].mxu0
    %v694 = vadd.f32 0.0, %v693
    %v695 = vpop.f32.mrb[0].mxu0
    %v696 = vadd.f32 0.0, %v695
    %697 = vmatprep.mubr.bf16.mxu0 0
    %698 = vmatmul.mubr.bf16.gmra.mrb[0].mxu0 %v439
    %v699 = vpop.f32.mrb[0].mxu0
    %v700 = vadd.f32 0.0, %v699
    %v701 = vpop.f32.mrb[0].mxu0
    %v702 = vadd.f32 0.0, %v701
    %v703 = vpop.f32.mrb[0].mxu0
    %v704 = vadd.f32 0.0, %v703
    %v705 = vpop.f32.mrb[0].mxu0
    %v706 = vadd.f32 0.0, %v705
    %707 = vdwg.mxu0
    %v712 = vunpack.c.l.b16 %v312
    %v713 = vunpack.c.l.b16 %v313
    %v714 = vunpack.c.l.b16 %v314
    %v715 = vunpack.c.l.b16 %v315
    %v716 = vpack.c.b16 %v713, %v712
    %v717 = vpack.c.b16 %v715, %v714
    %v752 = vunpack.c.l.b16 %v316
    %v753 = vunpack.c.h.b16 %v316
    %v754 = vunpack.c.l.b16 %v317
    %v755 = vunpack.c.h.b16 %v317
    %v756 = vunpack.c.l.b16 %v318
    %v757 = vunpack.c.h.b16 %v318
    %v758 = vunpack.c.l.b16 %v319
    %v759 = vunpack.c.h.b16 %v319
    %v760 = vunpack.c.l.b16 %v320
    %v761 = vunpack.c.h.b16 %v320
    %v762 = vunpack.c.l.b16 %v321
    %v763 = vunpack.c.h.b16 %v321
    %v764 = vunpack.c.l.b16 %v322
    %v765 = vunpack.c.h.b16 %v322
    %v766 = vunpack.c.l.b16 %v323
    %v767 = vunpack.c.h.b16 %v323
    %v768 = vunpack.c.l.b16 %v324
    %v769 = vunpack.c.h.b16 %v324
    %v770 = vunpack.c.l.b16 %v325
    %v771 = vunpack.c.h.b16 %v325
    %v772 = vunpack.c.l.b16 %v326
    %v773 = vunpack.c.h.b16 %v326
    %v774 = vunpack.c.l.b16 %v327
    %v775 = vunpack.c.h.b16 %v327
    %v776 = vunpack.c.l.b16 %v328
    %v777 = vunpack.c.h.b16 %v328
    %v778 = vunpack.c.l.b16 %v329
    %v779 = vunpack.c.h.b16 %v329
    %v780 = vunpack.c.l.b16 %v330
    %v781 = vunpack.c.h.b16 %v330
    %v782 = vunpack.c.l.b16 %v331
    %v783 = vunpack.c.h.b16 %v331
    %v784 = vunpack.c.l.b16 %v332
    %v785 = vunpack.c.h.b16 %v332
    %v786 = vunpack.c.l.b16 %v333
    %v787 = vunpack.c.h.b16 %v333
    %v788 = vunpack.c.l.b16 %v334
    %v789 = vunpack.c.h.b16 %v334
    %v790 = vunpack.c.l.b16 %v335
    %v791 = vunpack.c.h.b16 %v335
    %v792 = vunpack.c.l.b16 %v336
    %v793 = vunpack.c.h.b16 %v336
    %v794 = vunpack.c.l.b16 %v337
    %v795 = vunpack.c.h.b16 %v337
    %v796 = vunpack.c.l.b16 %v338
    %v797 = vunpack.c.h.b16 %v338
    %v798 = vunpack.c.l.b16 %v339
    %v799 = vunpack.c.h.b16 %v339
    %v800 = vunpack.c.l.b16 %v340
    %v801 = vunpack.c.h.b16 %v340
    %v802 = vunpack.c.l.b16 %v341
    %v803 = vunpack.c.h.b16 %v341
    %v804 = vunpack.c.l.b16 %v342
    %v805 = vunpack.c.h.b16 %v342
    %v806 = vunpack.c.l.b16 %v343
    %v807 = vunpack.c.h.b16 %v343
    %v808 = vunpack.c.l.b16 %v344
    %v809 = vunpack.c.h.b16 %v344
    %v810 = vunpack.c.l.b16 %v345
    %v811 = vunpack.c.h.b16 %v345
    %v812 = vunpack.c.l.b16 %v346
    %v813 = vunpack.c.h.b16 %v346
    %v814 = vunpack.c.l.b16 %v347
    %v815 = vunpack.c.h.b16 %v347
    %v816 = vpack.c.b16 %v756, %v752
    %v817 = vpack.c.b16 %v757, %v753
    %v818 = vpack.c.b16 %v758, %v754
    %v819 = vpack.c.b16 %v759, %v755
    %v820 = vpack.c.b16 %v764, %v760
    %v821 = vpack.c.b16 %v765, %v761
    %v822 = vpack.c.b16 %v766, %v762
    %v823 = vpack.c.b16 %v767, %v763
    %v824 = vpack.c.b16 %v772, %v768
    %v825 = vpack.c.b16 %v773, %v769
    %v826 = vpack.c.b16 %v774, %v770
    %v827 = vpack.c.b16 %v775, %v771
    %v828 = vpack.c.b16 %v780, %v776
    %v829 = vpack.c.b16 %v781, %v777
    %v830 = vpack.c.b16 %v782, %v778
    %v831 = vpack.c.b16 %v783, %v779
    %v832 = vpack.c.b16 %v788, %v784
    %v833 = vpack.c.b16 %v789, %v785
    %v834 = vpack.c.b16 %v790, %v786
    %v835 = vpack.c.b16 %v791, %v787
    %v836 = vpack.c.b16 %v796, %v792
    %v837 = vpack.c.b16 %v797, %v793
    %v838 = vpack.c.b16 %v798, %v794
    %v839 = vpack.c.b16 %v799, %v795
    %v840 = vpack.c.b16 %v804, %v800
    %v841 = vpack.c.b16 %v805, %v801
    %v842 = vpack.c.b16 %v806, %v802
    %v843 = vpack.c.b16 %v807, %v803
    %v844 = vpack.c.b16 %v812, %v808
    %v845 = vpack.c.b16 %v813, %v809
    %v846 = vpack.c.b16 %v814, %v810
    %v847 = vpack.c.b16 %v815, %v811
    %880 = vmatprep.subr.bf16.mxu0 %v817
    %881 = vmatpush1.bf16.msra.mxu0 %v816
    %882 = vmatprep.subr.bf16.mxu0 %v821
    %883 = vmatpush1.bf16.msra.mxu0 %v820
    %884 = vmatprep.subr.bf16.mxu0 %v825
    %885 = vmatpush1.bf16.msra.mxu0 %v824
    %886 = vmatprep.subr.bf16.mxu0 %v829
    %887 = vmatpush1.bf16.msra.mxu0 %v828
    %888 = vmatprep.subr.bf16.mxu0 %v833
    %889 = vmatpush1.bf16.msra.mxu0 %v832
    %890 = vmatprep.subr.bf16.mxu0 %v837
    %891 = vmatpush1.bf16.msra.mxu0 %v836
    %892 = vmatprep.subr.bf16.mxu0 %v841
    %893 = vmatpush1.bf16.msra.mxu0 %v840
    %894 = vmatprep.subr.bf16.mxu0 %v845
    %895 = vmatpush1.bf16.msra.mxu0 %v844
    %896 = vmatprep.subr.bf16.mxu0 0
    %897 = vmatpush1.bf16.msra.mxu0 0
    %898 = vmatprep.subr.bf16.mxu0 0
    %899 = vmatpush1.bf16.msra.mxu0 0
    %900 = vmatprep.subr.bf16.mxu0 0
    %901 = vmatpush1.bf16.msra.mxu0 0
    %902 = vmatprep.subr.bf16.mxu0 0
    %903 = vmatpush1.bf16.msra.mxu0 0
    %904 = vmatprep.subr.bf16.mxu0 0
    %905 = vmatpush1.bf16.msra.mxu0 0
    %906 = vmatprep.subr.bf16.mxu0 0
    %907 = vmatpush1.bf16.msra.mxu0 0
    %908 = vmatprep.subr.bf16.mxu0 0
    %909 = vmatpush1.bf16.msra.mxu0 0
    %910 = vmatprep.subr.bf16.mxu0 0
    %911 = vmatpush1.bf16.msra.mxu0 0
    %912 = vmatprep.mubr.bf16.mxu0 0
    %913 = vmatmul.mubr.bf16.gmra.mrb[0].mxu0 %v716
    %v914 = vpop.f32.mrb[0].mxu0
    %v915 = vadd.f32 %v637, %v914
    %v916 = vpop.f32.mrb[0].mxu0
    %v917 = vadd.f32 %v639, %v916
    %v918 = vpop.f32.mrb[0].mxu0
    %v919 = vadd.f32 %v641, %v918
    %v920 = vpop.f32.mrb[0].mxu0
    %v921 = vadd.f32 %v643, %v920
    %922 = vmatprep.mubr.bf16.mxu0 0
    %923 = vmatmul.mubr.bf16.gmra.mrb[0].mxu0 %v717
    %v924 = vpop.f32.mrb[0].mxu0
    %v925 = vadd.f32 %v647, %v924
    %v926 = vpop.f32.mrb[0].mxu0
    %v927 = vadd.f32 %v649, %v926
    %v928 = vpop.f32.mrb[0].mxu0
    %v929 = vadd.f32 %v651, %v928
    %v930 = vpop.f32.mrb[0].mxu0
    %v931 = vadd.f32 %v653, %v930
    %932 = vdwg.mxu0
    %933 = vmatprep.subr.bf16.mxu0 %v819
    %934 = vmatpush1.bf16.msra.mxu0 %v818
    %935 = vmatprep.subr.bf16.mxu0 %v823
    %936 = vmatpush1.bf16.msra.mxu0 %v822
    %937 = vmatprep.subr.bf16.mxu0 %v827
    %938 = vmatpush1.bf16.msra.mxu0 %v826
    %939 = vmatprep.subr.bf16.mxu0 %v831
    %940 = vmatpush1.bf16.msra.mxu0 %v830
    %941 = vmatprep.subr.bf16.mxu0 %v835
    %942 = vmatpush1.bf16.msra.mxu0 %v834
    %943 = vmatprep.subr.bf16.mxu0 %v839
    %944 = vmatpush1.bf16.msra.mxu0 %v838
    %945 = vmatprep.subr.bf16.mxu0 %v843
    %946 = vmatpush1.bf16.msra.mxu0 %v842
    %947 = vmatprep.subr.bf16.mxu0 %v847
    %948 = vmatpush1.bf16.msra.mxu0 %v846
    %949 = vmatprep.subr.bf16.mxu0 0
    %950 = vmatpush1.bf16.msra.mxu0 0
    %951 = vmatprep.subr.bf16.mxu0 0
    %952 = vmatpush1.bf16.msra.mxu0 0
    %953 = vmatprep.subr.bf16.mxu0 0
    %954 = vmatpush1.bf16.msra.mxu0 0
    %955 = vmatprep.subr.bf16.mxu0 0
    %956 = vmatpush1.bf16.msra.mxu0 0
    %957 = vmatprep.subr.bf16.mxu0 0
    %958 = vmatpush1.bf16.msra.mxu0 0
    %959 = vmatprep.subr.bf16.mxu0 0
    %960 = vmatpush1.bf16.msra.mxu0 0
    %961 = vmatprep.subr.bf16.mxu0 0
    %962 = vmatpush1.bf16.msra.mxu0 0
    %963 = vmatprep.subr.bf16.mxu0 0
    %964 = vmatpush1.bf16.msra.mxu0 0
    %965 = vmatprep.mubr.bf16.mxu0 0
    %966 = vmatmul.mubr.bf16.gmra.mrb[0].mxu0 %v716
    %v967 = vpop.f32.mrb[0].mxu0
    %v968 = vadd.f32 %v690, %v967
    %v969 = vpop.f32.mrb[0].mxu0
    %v970 = vadd.f32 %v692, %v969
    %v971 = vpop.f32.mrb[0].mxu0
    %v972 = vadd.f32 %v694, %v971
    %v973 = vpop.f32.mrb[0].mxu0
    %v974 = vadd.f32 %v696, %v973
    %975 = vmatprep.mubr.bf16.mxu0 0
    %976 = vmatmul.mubr.bf16.gmra.mrb[0].mxu0 %v717
    %v977 = vpop.f32.mrb[0].mxu0
    %v978 = vadd.f32 %v700, %v977
    %v979 = vpop.f32.mrb[0].mxu0
    %v980 = vadd.f32 %v702, %v979
    %v981 = vpop.f32.mrb[0].mxu0
    %v982 = vadd.f32 %v704, %v981
    %v983 = vpop.f32.mrb[0].mxu0
    %v984 = vadd.f32 %v706, %v983
    %985 = vdwg.mxu0
    %v986 = vld [vmem:[#allocation2] sm:$0xe]
    %v987 = vld [vmem:[#allocation2 + $0xc] sm:$0xe]
    %vm992 = vcmask 1042432
    %vm993 = vcmask 1046532
    %vm994 = vmor %vm992, %vm993
    %v995 = vrot.slane %v986, 5
    %v996 = vrot.slane %v995, 4
    %v997 = vrot.slane %v313, 5
    %v998 = vsel %vm994, %v996, %v997
    %v999 = vrot.slane %v997, 4
    %v1000 = vrot.slane %v348, 5
    %v1001 = vsel %vm994, %v999, %v1000
    %v1002 = vrot.slane %v987, 5
    %v1003 = vrot.slane %v1002, 4
    %v1004 = vrot.slane %v315, 5
    %v1005 = vsel %vm994, %v1003, %v1004
    %v1006 = vrot.slane %v1004, 4
    %v1007 = vrot.slane %v349, 5
    %v1008 = vsel %vm994, %v1006, %v1007
    %s1009 = scalar_lea.vmem %s2, 512
    %v1010 = vld [vmem:[%s1009] sm:$0xff]
    %v1011 = vld [vmem:[%s1009 + $0x8] sm:$0xff]
    %v1012 = vld [vmem:[%s1009 + $0x10] sm:$0xff]
    %v1013 = vld [vmem:[%s1009 + $0x18] sm:$0xff]
    %v1014 = vld [vmem:[%s1009 + $0x20] sm:$0xff]
    %v1015 = vld [vmem:[%s1009 + $0x28] sm:$0xff]
    %v1016 = vld [vmem:[%s1009 + $0x30] sm:$0xff]
    %v1017 = vld [vmem:[%s1009 + $0x38] sm:$0xff]
    %v1018 = vld [vmem:[%s1009 + $0x40] sm:$0xff]
    %v1019 = vld [vmem:[%s1009 + $0x48] sm:$0xff]
    %v1020 = vld [vmem:[%s1009 + $0x50] sm:$0xff]
    %v1021 = vld [vmem:[%s1009 + $0x58] sm:$0xff]
    %v1022 = vld [vmem:[%s1009 + $0x60] sm:$0xff]
    %v1023 = vld [vmem:[%s1009 + $0x68] sm:$0xff]
    %v1024 = vld [vmem:[%s1009 + $0x70] sm:$0xff]
    %v1025 = vld [vmem:[%s1009 + $0x78] sm:$0xff]
    %v1026 = vld [vmem:[%s1009 + $0x80] sm:$0xff]
    %v1027 = vld [vmem:[%s1009 + $0x88] sm:$0xff]
    %v1028 = vld [vmem:[%s1009 + $0x90] sm:$0xff]
    %v1029 = vld [vmem:[%s1009 + $0x98] sm:$0xff]
    %v1030 = vld [vmem:[%s1009 + $0xa0] sm:$0xff]
    %v1031 = vld [vmem:[%s1009 + $0xa8] sm:$0xff]
    %v1032 = vld [vmem:[%s1009 + $0xb0] sm:$0xff]
    %v1033 = vld [vmem:[%s1009 + $0xb8] sm:$0xff]
    %v1034 = vld [vmem:[%s1009 + $0xc0] sm:$0xff]
    %v1035 = vld [vmem:[%s1009 + $0xc8] sm:$0xff]
    %v1036 = vld [vmem:[%s1009 + $0xd0] sm:$0xff]
    %v1037 = vld [vmem:[%s1009 + $0xd8] sm:$0xff]
    %v1038 = vld [vmem:[%s1009 + $0xe0] sm:$0xff]
    %v1039 = vld [vmem:[%s1009 + $0xe8] sm:$0xff]
    %v1040 = vld [vmem:[%s1009 + $0xf0] sm:$0xff]
    %v1041 = vld [vmem:[%s1009 + $0xf8] sm:$0xff]
    %v1042 = vunpack.c.l.b16 %v998
    %v1043 = vunpack.c.l.b16 %v1001
    %v1044 = vunpack.c.l.b16 %v1005
    %v1045 = vunpack.c.l.b16 %v1008
    %v1046 = vpack.c.b16 %v1043, %v1042
    %v1047 = vpack.c.b16 %v1045, %v1044
    %v1082 = vunpack.c.l.b16 %v1010
    %v1083 = vunpack.c.h.b16 %v1010
    %v1084 = vunpack.c.l.b16 %v1011
    %v1085 = vunpack.c.h.b16 %v1011
    %v1086 = vunpack.c.l.b16 %v1012
    %v1087 = vunpack.c.h.b16 %v1012
    %v1088 = vunpack.c.l.b16 %v1013
    %v1089 = vunpack.c.h.b16 %v1013
    %v1090 = vunpack.c.l.b16 %v1014
    %v1091 = vunpack.c.h.b16 %v1014
    %v1092 = vunpack.c.l.b16 %v1015
    %v1093 = vunpack.c.h.b16 %v1015
    %v1094 = vunpack.c.l.b16 %v1016
    %v1095 = vunpack.c.h.b16 %v1016
    %v1096 = vunpack.c.l.b16 %v1017
    %v1097 = vunpack.c.h.b16 %v1017
    %v1098 = vunpack.c.l.b16 %v1018
    %v1099 = vunpack.c.h.b16 %v1018
    %v1100 = vunpack.c.l.b16 %v1019
    %v1101 = vunpack.c.h.b16 %v1019
    %v1102 = vunpack.c.l.b16 %v1020
    %v1103 = vunpack.c.h.b16 %v1020
    %v1104 = vunpack.c.l.b16 %v1021
    %v1105 = vunpack.c.h.b16 %v1021
    %v1106 = vunpack.c.l.b16 %v1022
    %v1107 = vunpack.c.h.b16 %v1022
    %v1108 = vunpack.c.l.b16 %v1023
    %v1109 = vunpack.c.h.b16 %v1023
    %v1110 = vunpack.c.l.b16 %v1024
    %v1111 = vunpack.c.h.b16 %v1024
    %v1112 = vunpack.c.l.b16 %v1025
    %v1113 = vunpack.c.h.b16 %v1025
    %v1114 = vunpack.c.l.b16 %v1026
    %v1115 = vunpack.c.h.b16 %v1026
    %v1116 = vunpack.c.l.b16 %v1027
    %v1117 = vunpack.c.h.b16 %v1027
    %v1118 = vunpack.c.l.b16 %v1028
    %v1119 = vunpack.c.h.b16 %v1028
    %v1120 = vunpack.c.l.b16 %v1029
    %v1121 = vunpack.c.h.b16 %v1029
    %v1122 = vunpack.c.l.b16 %v1030
    %v1123 = vunpack.c.h.b16 %v1030
    %v1124 = vunpack.c.l.b16 %v1031
    %v1125 = vunpack.c.h.b16 %v1031
    %v1126 = vunpack.c.l.b16 %v1032
    %v1127 = vunpack.c.h.b16 %v1032
    %v1128 = vunpack.c.l.b16 %v1033
    %v1129 = vunpack.c.h.b16 %v1033
    %v1130 = vunpack.c.l.b16 %v1034
    %v1131 = vunpack.c.h.b16 %v1034
    %v1132 = vunpack.c.l.b16 %v1035
    %v1133 = vunpack.c.h.b16 %v1035
    %v1134 = vunpack.c.l.b16 %v1036
    %v1135 = vunpack.c.h.b16 %v1036
    %v1136 = vunpack.c.l.b16 %v1037
    %v1137 = vunpack.c.h.b16 %v1037
    %v1138 = vunpack.c.l.b16 %v1038
    %v1139 = vunpack.c.h.b16 %v1038
    %v1140 = vunpack.c.l.b16 %v1039
    %v1141 = vunpack.c.h.b16 %v1039
    %v1142 = vunpack.c.l.b16 %v1040
    %v1143 = vunpack.c.h.b16 %v1040
    %v1144 = vunpack.c.l.b16 %v1041
    %v1145 = vunpack.c.h.b16 %v1041
    %v1146 = vpack.c.b16 %v1086, %v1082
    %v1147 = vpack.c.b16 %v1087, %v1083
    %v1148 = vpack.c.b16 %v1088, %v1084
    %v1149 = vpack.c.b16 %v1089, %v1085
    %v1150 = vpack.c.b16 %v1094, %v1090
    %v1151 = vpack.c.b16 %v1095, %v1091
    %v1152 = vpack.c.b16 %v1096, %v1092
    %v1153 = vpack.c.b16 %v1097, %v1093
    %v1154 = vpack.c.b16 %v1102, %v1098
    %v1155 = vpack.c.b16 %v1103, %v1099
    %v1156 = vpack.c.b16 %v1104, %v1100
    %v1157 = vpack.c.b16 %v1105, %v1101
    %v1158 = vpack.c.b16 %v1110, %v1106
    %v1159 = vpack.c.b16 %v1111, %v1107
    %v1160 = vpack.c.b16 %v1112, %v1108
    %v1161 = vpack.c.b16 %v1113, %v1109
    %v1162 = vpack.c.b16 %v1118, %v1114
    %v1163 = vpack.c.b16 %v1119, %v1115
    %v1164 = vpack.c.b16 %v1120, %v1116
    %v1165 = vpack.c.b16 %v1121, %v1117
    %v1166 = vpack.c.b16 %v1126, %v1122
    %v1167 = vpack.c.b16 %v1127, %v1123
    %v1168 = vpack.c.b16 %v1128, %v1124
    %v1169 = vpack.c.b16 %v1129, %v1125
    %v1170 = vpack.c.b16 %v1134, %v1130
    %v1171 = vpack.c.b16 %v1135, %v1131
    %v1172 = vpack.c.b16 %v1136, %v1132
    %v1173 = vpack.c.b16 %v1137, %v1133
    %v1174 = vpack.c.b16 %v1142, %v1138
    %v1175 = vpack.c.b16 %v1143, %v1139
    %v1176 = vpack.c.b16 %v1144, %v1140
    %v1177 = vpack.c.b16 %v1145, %v1141
    %1210 = vmatprep.subr.bf16.mxu0 %v1147
    %1211 = vmatpush1.bf16.msra.mxu0 %v1146
    %1212 = vmatprep.subr.bf16.mxu0 %v1151
    %1213 = vmatpush1.bf16.msra.mxu0 %v1150
    %1214 = vmatprep.subr.bf16.mxu0 %v1155
    %1215 = vmatpush1.bf16.msra.mxu0 %v1154
    %1216 = vmatprep.subr.bf16.mxu0 %v1159
    %1217 = vmatpush1.bf16.msra.mxu0 %v1158
    %1218 = vmatprep.subr.bf16.mxu0 %v1163
    %1219 = vmatpush1.bf16.msra.mxu0 %v1162
    %1220 = vmatprep.subr.bf16.mxu0 %v1167
    %1221 = vmatpush1.bf16.msra.mxu0 %v1166
    %1222 = vmatprep.subr.bf16.mxu0 %v1171
    %1223 = vmatpush1.bf16.msra.mxu0 %v1170
    %1224 = vmatprep.subr.bf16.mxu0 %v1175
    %1225 = vmatpush1.bf16.msra.mxu0 %v1174
    %1226 = vmatprep.subr.bf16.mxu0 0
    %1227 = vmatpush1.bf16.msra.mxu0 0
    %1228 = vmatprep.subr.bf16.mxu0 0
    %1229 = vmatpush1.bf16.msra.mxu0 0
    %1230 = vmatprep.subr.bf16.mxu0 0
    %1231 = vmatpush1.bf16.msra.mxu0 0
    %1232 = vmatprep.subr.bf16.mxu0 0
    %1233 = vmatpush1.bf16.msra.mxu0 0
    %1234 = vmatprep.subr.bf16.mxu0 0
    %1235 = vmatpush1.bf16.msra.mxu0 0
    %1236 = vmatprep.subr.bf16.mxu0 0
    %1237 = vmatpush1.bf16.msra.mxu0 0
    %1238 = vmatprep.subr.bf16.mxu0 0
    %1239 = vmatpush1.bf16.msra.mxu0 0
    %1240 = vmatprep.subr.bf16.mxu0 0
    %1241 = vmatpush1.bf16.msra.mxu0 0
    %1242 = vmatprep.mubr.bf16.mxu0 0
    %1243 = vmatmul.mubr.bf16.gmra.mrb[0].mxu0 %v1046
    %v1244 = vpop.f32.mrb[0].mxu0
    %v1245 = vadd.f32 0.0, %v1244
    %v1246 = vpop.f32.mrb[0].mxu0
    %v1247 = vadd.f32 0.0, %v1246
    %v1248 = vpop.f32.mrb[0].mxu0
    %v1249 = vadd.f32 0.0, %v1248
    %v1250 = vpop.f32.mrb[0].mxu0
    %v1251 = vadd.f32 0.0, %v1250
    %1252 = vmatprep.mubr.bf16.mxu0 0
    %1253 = vmatmul.mubr.bf16.gmra.mrb[0].mxu0 %v1047
    %v1254 = vpop.f32.mrb[0].mxu0
    %v1255 = vadd.f32 0.0, %v1254
    %v1256 = vpop.f32.mrb[0].mxu0
    %v1257 = vadd.f32 0.0, %v1256
    %v1258 = vpop.f32.mrb[0].mxu0
    %v1259 = vadd.f32 0.0, %v1258
    %v1260 = vpop.f32.mrb[0].mxu0
    %v1261 = vadd.f32 0.0, %v1260
    %1262 = vdwg.mxu0
    %1263 = vmatprep.subr.bf16.mxu0 %v1149
    %1264 = vmatpush1.bf16.msra.mxu0 %v1148
    %1265 = vmatprep.subr.bf16.mxu0 %v1153
    %1266 = vmatpush1.bf16.msra.mxu0 %v1152
    %1267 = vmatprep.subr.bf16.mxu0 %v1157
    %1268 = vmatpush1.bf16.msra.mxu0 %v1156
    %1269 = vmatprep.subr.bf16.mxu0 %v1161
    %1270 = vmatpush1.bf16.msra.mxu0 %v1160
    %1271 = vmatprep.subr.bf16.mxu0 %v1165
    %1272 = vmatpush1.bf16.msra.mxu0 %v1164
    %1273 = vmatprep.subr.bf16.mxu0 %v1169
    %1274 = vmatpush1.bf16.msra.mxu0 %v1168
    %1275 = vmatprep.subr.bf16.mxu0 %v1173
    %1276 = vmatpush1.bf16.msra.mxu0 %v1172
    %1277 = vmatprep.subr.bf16.mxu0 %v1177
    %1278 = vmatpush1.bf16.msra.mxu0 %v1176
    %1279 = vmatprep.subr.bf16.mxu0 0
    %1280 = vmatpush1.bf16.msra.mxu0 0
    %1281 = vmatprep.subr.bf16.mxu0 0
    %1282 = vmatpush1.bf16.msra.mxu0 0
    %1283 = vmatprep.subr.bf16.mxu0 0
    %1284 = vmatpush1.bf16.msra.mxu0 0
    %1285 = vmatprep.subr.bf16.mxu0 0
    %1286 = vmatpush1.bf16.msra.mxu0 0
    %1287 = vmatprep.subr.bf16.mxu0 0
    %1288 = vmatpush1.bf16.msra.mxu0 0
    %1289 = vmatprep.subr.bf16.mxu0 0
    %1290 = vmatpush1.bf16.msra.mxu0 0
    %1291 = vmatprep.subr.bf16.mxu0 0
    %1292 = vmatpush1.bf16.msra.mxu0 0
    %1293 = vmatprep.subr.bf16.mxu0 0
    %1294 = vmatpush1.bf16.msra.mxu0 0
    %1295 = vmatprep.mubr.bf16.mxu0 0
    %1296 = vmatmul.mubr.bf16.gmra.mrb[0].mxu0 %v1046
    %v1297 = vpop.f32.mrb[0].mxu0
    %v1298 = vadd.f32 0.0, %v1297
    %v1299 = vpop.f32.mrb[0].mxu0
    %v1300 = vadd.f32 0.0, %v1299
    %v1301 = vpop.f32.mrb[0].mxu0
    %v1302 = vadd.f32 0.0, %v1301
    %v1303 = vpop.f32.mrb[0].mxu0
    %v1304 = vadd.f32 0.0, %v1303
    %1305 = vmatprep.mubr.bf16.mxu0 0
    %1306 = vmatmul.mubr.bf16.gmra.mrb[0].mxu0 %v1047
    %v1307 = vpop.f32.mrb[0].mxu0
    %v1308 = vadd.f32 0.0, %v1307
    %v1309 = vpop.f32.mrb[0].mxu0
    %v1310 = vadd.f32 0.0, %v1309
    %v1311 = vpop.f32.mrb[0].mxu0
    %v1312 = vadd.f32 0.0, %v1311
    %v1313 = vpop.f32.mrb[0].mxu0
    %v1314 = vadd.f32 0.0, %v1313
    %1315 = vdwg.mxu0
    %v1316 = vadd.f32 %v915, %v1245
    %v1317 = vadd.f32 %v917, %v1247
    %v1318 = vadd.f32 %v968, %v1298
    %v1319 = vadd.f32 %v970, %v1300
    %v1320 = vadd.f32 %v919, %v1249
    %v1321 = vadd.f32 %v921, %v1251
    %v1322 = vadd.f32 %v972, %v1302
    %v1323 = vadd.f32 %v974, %v1304
    %v1324 = vadd.f32 %v925, %v1255
    %v1325 = vadd.f32 %v927, %v1257
    %v1326 = vadd.f32 %v978, %v1308
    %v1327 = vadd.f32 %v980, %v1310
    %v1328 = vadd.f32 %v929, %v1259
    %v1329 = vadd.f32 %v931, %v1261
    %v1330 = vadd.f32 %v982, %v1312
    %v1331 = vadd.f32 %v984, %v1314
    %v1332 = vadd.f32 %v1316, %v1320
    %v1333 = vadd.f32 %v1332, %v1324
    %v1334 = vadd.f32 %v1333, %v1328
    %v1335 = vrot.slane %v1334, 4
    %v1336 = vadd.f32 %v1334, %v1335
    %v1337 = vrot.slane %v1336, 2
    %v1338 = vadd.f32 %v1336, %v1337
    %v1339 = vrot.slane %v1338, 1
    %v1340 = vadd.f32 %v1338, %v1339
    %v1341 = vadd.f32 %v1317, %v1321
    %v1342 = vadd.f32 %v1341, %v1325
    %v1343 = vadd.f32 %v1342, %v1329
    %v1344 = vrot.slane %v1343, 4
    %v1345 = vadd.f32 %v1343, %v1344
    %v1346 = vrot.slane %v1345, 2
    %v1347 = vadd.f32 %v1345, %v1346
    %v1348 = vrot.slane %v1347, 1
    %v1349 = vadd.f32 %v1347, %v1348
    %v1350 = vadd.f32 %v1318, %v1322
    %v1351 = vadd.f32 %v1350, %v1326
    %v1352 = vadd.f32 %v1351, %v1330
    %v1353 = vrot.slane %v1352, 4
    %v1354 = vadd.f32 %v1352, %v1353
    %v1355 = vrot.slane %v1354, 2
    %v1356 = vadd.f32 %v1354, %v1355
    %v1357 = vrot.slane %v1356, 1
    %v1358 = vadd.f32 %v1356, %v1357
    %v1359 = vadd.f32 %v1319, %v1323
    %v1360 = vadd.f32 %v1359, %v1327
    %v1361 = vadd.f32 %v1360, %v1331
    %v1362 = vrot.slane %v1361, 4
    %v1363 = vadd.f32 %v1361, %v1362
    %v1364 = vrot.slane %v1363, 2
    %v1365 = vadd.f32 %v1363, %v1364
    %v1366 = vrot.slane %v1365, 1
    %v1367 = vadd.f32 %v1365, %v1366
    %v1368 = vld [vmem:[%s5] sm:$0xff]
    %v1369 = vld [vmem:[%s5 + $0x8] sm:$0xff]
    %v1370 = vld [vmem:[%s5 + $0x10] sm:$0xff]
    %v1371 = vld [vmem:[%s5 + $0x18] sm:$0xff]
    %v1372 = vld [vmem:[%s5 + $0x20] sm:$0xff]
    %v1373 = vld [vmem:[%s5 + $0x28] sm:$0xff]
    %v1374 = vld [vmem:[%s5 + $0x30] sm:$0xff]
    %v1375 = vld [vmem:[%s5 + $0x38] sm:$0xff]
    %v1376 = vld [vmem:[%s5 + $0x40] sm:$0xff]
    %v1377 = vld [vmem:[%s5 + $0x48] sm:$0xff]
    %v1378 = vld [vmem:[%s5 + $0x50] sm:$0xff]
    %v1379 = vld [vmem:[%s5 + $0x58] sm:$0xff]
    %v1380 = vld [vmem:[%s5 + $0x60] sm:$0xff]
    %v1381 = vld [vmem:[%s5 + $0x68] sm:$0xff]
    %v1382 = vld [vmem:[%s5 + $0x70] sm:$0xff]
    %v1383 = vld [vmem:[%s5 + $0x78] sm:$0xff]
    %v1384 = vld [vmem:[%s5 + $0x80] sm:$0xff]
    %v1385 = vld [vmem:[%s5 + $0x88] sm:$0xff]
    %v1386 = vld [vmem:[%s5 + $0x90] sm:$0xff]
    %v1387 = vld [vmem:[%s5 + $0x98] sm:$0xff]
    %v1388 = vld [vmem:[%s5 + $0xa0] sm:$0xff]
    %v1389 = vld [vmem:[%s5 + $0xa8] sm:$0xff]
    %v1390 = vld [vmem:[%s5 + $0xb0] sm:$0xff]
    %v1391 = vld [vmem:[%s5 + $0xb8] sm:$0xff]
    %v1392 = vld [vmem:[%s5 + $0xc0] sm:$0xff]
    %v1393 = vld [vmem:[%s5 + $0xc8] sm:$0xff]
    %v1394 = vld [vmem:[%s5 + $0xd0] sm:$0xff]
    %v1395 = vld [vmem:[%s5 + $0xd8] sm:$0xff]
    %v1396 = vld [vmem:[%s5 + $0xe0] sm:$0xff]
    %v1397 = vld [vmem:[%s5 + $0xe8] sm:$0xff]
    %v1398 = vld [vmem:[%s5 + $0xf0] sm:$0xff]
    %v1399 = vld [vmem:[%s5 + $0xf8] sm:$0xff]
    %v1400 = vld [vmem:[%s5 + $0x100] sm:$0xff]
    %v1401 = vld [vmem:[%s5 + $0x108] sm:$0xff]
    %v1402 = vld [vmem:[%s5 + $0x110] sm:$0xff]
    %v1403 = vld [vmem:[%s5 + $0x118] sm:$0xff]
    %v1404 = vld [vmem:[%s5 + $0x120] sm:$0xff]
    %v1405 = vld [vmem:[%s5 + $0x128] sm:$0xff]
    %v1406 = vld [vmem:[%s5 + $0x130] sm:$0xff]
    %v1407 = vld [vmem:[%s5 + $0x138] sm:$0xff]
    %v1408 = vld [vmem:[%s5 + $0x140] sm:$0xff]
    %v1409 = vld [vmem:[%s5 + $0x148] sm:$0xff]
    %v1410 = vld [vmem:[%s5 + $0x150] sm:$0xff]
    %v1411 = vld [vmem:[%s5 + $0x158] sm:$0xff]
    %v1412 = vld [vmem:[%s5 + $0x160] sm:$0xff]
    %v1413 = vld [vmem:[%s5 + $0x168] sm:$0xff]
    %v1414 = vld [vmem:[%s5 + $0x170] sm:$0xff]
    %v1415 = vld [vmem:[%s5 + $0x178] sm:$0xff]
    %v1416 = vld [vmem:[%s5 + $0x180] sm:$0xff]
    %v1417 = vld [vmem:[%s5 + $0x188] sm:$0xff]
    %v1418 = vld [vmem:[%s5 + $0x190] sm:$0xff]
    %v1419 = vld [vmem:[%s5 + $0x198] sm:$0xff]
    %v1420 = vld [vmem:[%s5 + $0x1a0] sm:$0xff]
    %v1421 = vld [vmem:[%s5 + $0x1a8] sm:$0xff]
    %v1422 = vld [vmem:[%s5 + $0x1b0] sm:$0xff]
    %v1423 = vld [vmem:[%s5 + $0x1b8] sm:$0xff]
    %v1424 = vld [vmem:[%s5 + $0x1c0] sm:$0xff]
    %v1425 = vld [vmem:[%s5 + $0x1c8] sm:$0xff]
    %v1426 = vld [vmem:[%s5 + $0x1d0] sm:$0xff]
    %v1427 = vld [vmem:[%s5 + $0x1d8] sm:$0xff]
    %v1428 = vld [vmem:[%s5 + $0x1e0] sm:$0xff]
    %v1429 = vld [vmem:[%s5 + $0x1e8] sm:$0xff]
    %v1430 = vld [vmem:[%s5 + $0x1f0] sm:$0xff]
    %v1431 = vld [vmem:[%s5 + $0x1f8] sm:$0xff]
    %1432 = vmatprep.subr.mxu0 0.0
    %1433 = vmatpush1.msra.mxu0 %v1368
    %1434 = vmatprep.subr.mxu0 0.0
    %1435 = vmatpush1.msra.mxu0 %v1369
    %1436 = vmatprep.subr.mxu0 0.0
    %1437 = vmatpush1.msra.mxu0 %v1370
    %1438 = vmatprep.subr.mxu0 0.0
    %1439 = vmatpush1.msra.mxu0 %v1371
    %1440 = vmatprep.subr.mxu0 0.0
    %1441 = vmatpush1.msra.mxu0 %v1372
    %1442 = vmatprep.subr.mxu0 0.0
    %1443 = vmatpush1.msra.mxu0 %v1373
    %1444 = vmatprep.subr.mxu0 0.0
    %1445 = vmatpush1.msra.mxu0 %v1374
    %1446 = vmatprep.subr.mxu0 0.0
    %1447 = vmatpush1.msra.mxu0 %v1375
    %1448 = vmatprep.subr.mxu0 0.0
    %1449 = vmatpush1.msra.mxu0 %v1376
    %1450 = vmatprep.subr.mxu0 0.0
    %1451 = vmatpush1.msra.mxu0 %v1377
    %1452 = vmatprep.subr.mxu0 0.0
    %1453 = vmatpush1.msra.mxu0 %v1378
    %1454 = vmatprep.subr.mxu0 0.0
    %1455 = vmatpush1.msra.mxu0 %v1379
    %1456 = vmatprep.subr.mxu0 0.0
    %1457 = vmatpush1.msra.mxu0 %v1380
    %1458 = vmatprep.subr.mxu0 0.0
    %1459 = vmatpush1.msra.mxu0 %v1381
    %1460 = vmatprep.subr.mxu0 0.0
    %1461 = vmatpush1.msra.mxu0 %v1382
    %1462 = vmatprep.subr.mxu0 0.0
    %1463 = vmatpush1.msra.mxu0 %v1383
    %1464 = vmatprep.subr.mxu0 0.0
    %1465 = vmatpush1.msra.mxu0 %v1384
    %1466 = vmatprep.subr.mxu0 0.0
    %1467 = vmatpush1.msra.mxu0 %v1385
    %1468 = vmatprep.subr.mxu0 0.0
    %1469 = vmatpush1.msra.mxu0 %v1386
    %1470 = vmatprep.subr.mxu0 0.0
    %1471 = vmatpush1.msra.mxu0 %v1387
    %1472 = vmatprep.subr.mxu0 0.0
    %1473 = vmatpush1.msra.mxu0 %v1388
    %1474 = vmatprep.subr.mxu0 0.0
    %1475 = vmatpush1.msra.mxu0 %v1389
    %1476 = vmatprep.subr.mxu0 0.0
    %1477 = vmatpush1.msra.mxu0 %v1390
    %1478 = vmatprep.subr.mxu0 0.0
    %1479 = vmatpush1.msra.mxu0 %v1391
    %1480 = vmatprep.subr.mxu0 0.0
    %1481 = vmatpush1.msra.mxu0 %v1392
    %1482 = vmatprep.subr.mxu0 0.0
    %1483 = vmatpush1.msra.mxu0 %v1393
    %1484 = vmatprep.subr.mxu0 0.0
    %1485 = vmatpush1.msra.mxu0 %v1394
    %1486 = vmatprep.subr.mxu0 0.0
    %1487 = vmatpush1.msra.mxu0 %v1395
    %1488 = vmatprep.subr.mxu0 0.0
    %1489 = vmatpush1.msra.mxu0 %v1396
    %1490 = vmatprep.subr.mxu0 0.0
    %1491 = vmatpush1.msra.mxu0 %v1397
    %1492 = vmatprep.subr.mxu0 0.0
    %1493 = vmatpush1.msra.mxu0 %v1398
    %1494 = vmatprep.subr.mxu0 0.0
    %1495 = vmatpush1.msra.mxu0 %v1399
    %1496 = vmatprep.mubr.f32.mxu0 %v1349
    %1497 = vmatmul.mubr.f32.gmra.mrb[0].mxu0 %v1340
    %v1498 = vpop.f32.mrb[0].mxu0
    %v1499 = vadd.f32 0.0, %v1498
    %v1500 = vpop.f32.mrb[0].mxu0
    %1501 = vdwg.mxu0
    %1502 = vmatprep.subr.mxu0 0.0
    %1503 = vmatpush1.msra.mxu0 %v1400
    %1504 = vmatprep.subr.mxu0 0.0
    %1505 = vmatpush1.msra.mxu0 %v1401
    %1506 = vmatprep.subr.mxu0 0.0
    %1507 = vmatpush1.msra.mxu0 %v1402
    %1508 = vmatprep.subr.mxu0 0.0
    %1509 = vmatpush1.msra.mxu0 %v1403
    %1510 = vmatprep.subr.mxu0 0.0
    %1511 = vmatpush1.msra.mxu0 %v1404
    %1512 = vmatprep.subr.mxu0 0.0
    %1513 = vmatpush1.msra.mxu0 %v1405
    %1514 = vmatprep.subr.mxu0 0.0
    %1515 = vmatpush1.msra.mxu0 %v1406
    %1516 = vmatprep.subr.mxu0 0.0
    %1517 = vmatpush1.msra.mxu0 %v1407
    %1518 = vmatprep.subr.mxu0 0.0
    %1519 = vmatpush1.msra.mxu0 %v1408
    %1520 = vmatprep.subr.mxu0 0.0
    %1521 = vmatpush1.msra.mxu0 %v1409
    %1522 = vmatprep.subr.mxu0 0.0
    %1523 = vmatpush1.msra.mxu0 %v1410
    %1524 = vmatprep.subr.mxu0 0.0
    %1525 = vmatpush1.msra.mxu0 %v1411
    %1526 = vmatprep.subr.mxu0 0.0
    %1527 = vmatpush1.msra.mxu0 %v1412
    %1528 = vmatprep.subr.mxu0 0.0
    %1529 = vmatpush1.msra.mxu0 %v1413
    %1530 = vmatprep.subr.mxu0 0.0
    %1531 = vmatpush1.msra.mxu0 %v1414
    %1532 = vmatprep.subr.mxu0 0.0
    %1533 = vmatpush1.msra.mxu0 %v1415
    %1534 = vmatprep.subr.mxu0 0.0
    %1535 = vmatpush1.msra.mxu0 %v1416
    %1536 = vmatprep.subr.mxu0 0.0
    %1537 = vmatpush1.msra.mxu0 %v1417
    %1538 = vmatprep.subr.mxu0 0.0
    %1539 = vmatpush1.msra.mxu0 %v1418
    %1540 = vmatprep.subr.mxu0 0.0
    %1541 = vmatpush1.msra.mxu0 %v1419
    %1542 = vmatprep.subr.mxu0 0.0
    %1543 = vmatpush1.msra.mxu0 %v1420
    %1544 = vmatprep.subr.mxu0 0.0
    %1545 = vmatpush1.msra.mxu0 %v1421
    %1546 = vmatprep.subr.mxu0 0.0
    %1547 = vmatpush1.msra.mxu0 %v1422
    %1548 = vmatprep.subr.mxu0 0.0
    %1549 = vmatpush1.msra.mxu0 %v1423
    %1550 = vmatprep.subr.mxu0 0.0
    %1551 = vmatpush1.msra.mxu0 %v1424
    %1552 = vmatprep.subr.mxu0 0.0
    %1553 = vmatpush1.msra.mxu0 %v1425
    %1554 = vmatprep.subr.mxu0 0.0
    %1555 = vmatpush1.msra.mxu0 %v1426
    %1556 = vmatprep.subr.mxu0 0.0
    %1557 = vmatpush1.msra.mxu0 %v1427
    %1558 = vmatprep.subr.mxu0 0.0
    %1559 = vmatpush1.msra.mxu0 %v1428
    %1560 = vmatprep.subr.mxu0 0.0
    %1561 = vmatpush1.msra.mxu0 %v1429
    %1562 = vmatprep.subr.mxu0 0.0
    %1563 = vmatpush1.msra.mxu0 %v1430
    %1564 = vmatprep.subr.mxu0 0.0
    %1565 = vmatpush1.msra.mxu0 %v1431
    %1566 = vmatprep.mubr.f32.mxu0 %v1367
    %1567 = vmatmul.mubr.f32.gmra.mrb[0].mxu0 %v1358
    %v1568 = vpop.f32.mrb[0].mxu0
    %v1569 = vadd.f32 %v1499, %v1568
    %v1570 = vpop.f32.mrb[0].mxu0
    %1571 = vdwg.mxu0
    %v1572 = vmul.f32 %v1316, %v1316
    %v1573 = vmul.f32 %v1317, %v1317
    %v1574 = vmul.f32 %v1318, %v1318
    %v1575 = vmul.f32 %v1319, %v1319
    %v1576 = vmul.f32 %v1320, %v1320
    %v1577 = vmul.f32 %v1321, %v1321
    %v1578 = vmul.f32 %v1322, %v1322
    %v1579 = vmul.f32 %v1323, %v1323
    %v1580 = vmul.f32 %v1324, %v1324
    %v1581 = vmul.f32 %v1325, %v1325
    %v1582 = vmul.f32 %v1326, %v1326
    %v1583 = vmul.f32 %v1327, %v1327
    %v1584 = vmul.f32 %v1328, %v1328
    %v1585 = vmul.f32 %v1329, %v1329
    %v1586 = vmul.f32 %v1330, %v1330
    %v1587 = vmul.f32 %v1331, %v1331
    %v1588 = vadd.f32 %v1572, %v1576
    %v1589 = vadd.f32 %v1588, %v1580
    %v1590 = vadd.f32 %v1589, %v1584
    %v1591 = vrot.slane %v1590, 4
    %v1592 = vadd.f32 %v1590, %v1591
    %v1593 = vrot.slane %v1592, 2
    %v1594 = vadd.f32 %v1592, %v1593
    %v1595 = vrot.slane %v1594, 1
    %v1596 = vadd.f32 %v1594, %v1595
    %v1597 = vadd.f32 %v1573, %v1577
    %v1598 = vadd.f32 %v1597, %v1581
    %v1599 = vadd.f32 %v1598, %v1585
    %v1600 = vrot.slane %v1599, 4
    %v1601 = vadd.f32 %v1599, %v1600
    %v1602 = vrot.slane %v1601, 2
    %v1603 = vadd.f32 %v1601, %v1602
    %v1604 = vrot.slane %v1603, 1
    %v1605 = vadd.f32 %v1603, %v1604
    %v1606 = vadd.f32 %v1574, %v1578
    %v1607 = vadd.f32 %v1606, %v1582
    %v1608 = vadd.f32 %v1607, %v1586
    %v1609 = vrot.slane %v1608, 4
    %v1610 = vadd.f32 %v1608, %v1609
    %v1611 = vrot.slane %v1610, 2
    %v1612 = vadd.f32 %v1610, %v1611
    %v1613 = vrot.slane %v1612, 1
    %v1614 = vadd.f32 %v1612, %v1613
    %v1615 = vadd.f32 %v1575, %v1579
    %v1616 = vadd.f32 %v1615, %v1583
    %v1617 = vadd.f32 %v1616, %v1587
    %v1618 = vrot.slane %v1617, 4
    %v1619 = vadd.f32 %v1617, %v1618
    %v1620 = vrot.slane %v1619, 2
    %v1621 = vadd.f32 %v1619, %v1620
    %v1622 = vrot.slane %v1621, 1
    %v1623 = vadd.f32 %v1621, %v1622
    %1624 = vmatprep.subr.mxu0 0.0
    %1625 = vmatpush1.msra.mxu0 %v1368
    %1626 = vmatprep.subr.mxu0 0.0
    %1627 = vmatpush1.msra.mxu0 %v1369
    %1628 = vmatprep.subr.mxu0 0.0
    %1629 = vmatpush1.msra.mxu0 %v1370
    %1630 = vmatprep.subr.mxu0 0.0
    %1631 = vmatpush1.msra.mxu0 %v1371
    %1632 = vmatprep.subr.mxu0 0.0
    %1633 = vmatpush1.msra.mxu0 %v1372
    %1634 = vmatprep.subr.mxu0 0.0
    %1635 = vmatpush1.msra.mxu0 %v1373
    %1636 = vmatprep.subr.mxu0 0.0
    %1637 = vmatpush1.msra.mxu0 %v1374
    %1638 = vmatprep.subr.mxu0 0.0
    %1639 = vmatpush1.msra.mxu0 %v1375
    %1640 = vmatprep.subr.mxu0 0.0
    %1641 = vmatpush1.msra.mxu0 %v1376
    %1642 = vmatprep.subr.mxu0 0.0
    %1643 = vmatpush1.msra.mxu0 %v1377
    %1644 = vmatprep.subr.mxu0 0.0
    %1645 = vmatpush1.msra.mxu0 %v1378
    %1646 = vmatprep.subr.mxu0 0.0
    %1647 = vmatpush1.msra.mxu0 %v1379
    %1648 = vmatprep.subr.mxu0 0.0
    %1649 = vmatpush1.msra.mxu0 %v1380
    %1650 = vmatprep.subr.mxu0 0.0
    %1651 = vmatpush1.msra.mxu0 %v1381
    %1652 = vmatprep.subr.mxu0 0.0
    %1653 = vmatpush1.msra.mxu0 %v1382
    %1654 = vmatprep.subr.mxu0 0.0
    %1655 = vmatpush1.msra.mxu0 %v1383
    %1656 = vmatprep.subr.mxu0 0.0
    %1657 = vmatpush1.msra.mxu0 %v1384
    %1658 = vmatprep.subr.mxu0 0.0
    %1659 = vmatpush1.msra.mxu0 %v1385
    %1660 = vmatprep.subr.mxu0 0.0
    %1661 = vmatpush1.msra.mxu0 %v1386
    %1662 = vmatprep.subr.mxu0 0.0
    %1663 = vmatpush1.msra.mxu0 %v1387
    %1664 = vmatprep.subr.mxu0 0.0
    %1665 = vmatpush1.msra.mxu0 %v1388
    %1666 = vmatprep.subr.mxu0 0.0
    %1667 = vmatpush1.msra.mxu0 %v1389
    %1668 = vmatprep.subr.mxu0 0.0
    %1669 = vmatpush1.msra.mxu0 %v1390
    %1670 = vmatprep.subr.mxu0 0.0
    %1671 = vmatpush1.msra.mxu0 %v1391
    %1672 = vmatprep.subr.mxu0 0.0
    %1673 = vmatpush1.msra.mxu0 %v1392
    %1674 = vmatprep.subr.mxu0 0.0
    %1675 = vmatpush1.msra.mxu0 %v1393
    %1676 = vmatprep.subr.mxu0 0.0
    %1677 = vmatpush1.msra.mxu0 %v1394
    %1678 = vmatprep.subr.mxu0 0.0
    %1679 = vmatpush1.msra.mxu0 %v1395
    %1680 = vmatprep.subr.mxu0 0.0
    %1681 = vmatpush1.msra.mxu0 %v1396
    %1682 = vmatprep.subr.mxu0 0.0
    %1683 = vmatpush1.msra.mxu0 %v1397
    %1684 = vmatprep.subr.mxu0 0.0
    %1685 = vmatpush1.msra.mxu0 %v1398
    %1686 = vmatprep.subr.mxu0 0.0
    %1687 = vmatpush1.msra.mxu0 %v1399
    %1688 = vmatprep.mubr.f32.mxu0 %v1605
    %1689 = vmatmul.mubr.f32.gmra.mrb[0].mxu0 %v1596
    %v1690 = vpop.f32.mrb[0].mxu0
    %v1691 = vadd.f32 0.0, %v1690
    %v1692 = vpop.f32.mrb[0].mxu0
    %1693 = vdwg.mxu0
    %1694 = vmatprep.subr.mxu0 0.0
    %1695 = vmatpush1.msra.mxu0 %v1400
    %1696 = vmatprep.subr.mxu0 0.0
    %1697 = vmatpush1.msra.mxu0 %v1401
    %1698 = vmatprep.subr.mxu0 0.0
    %1699 = vmatpush1.msra.mxu0 %v1402
    %1700 = vmatprep.subr.mxu0 0.0
    %1701 = vmatpush1.msra.mxu0 %v1403
    %1702 = vmatprep.subr.mxu0 0.0
    %1703 = vmatpush1.msra.mxu0 %v1404
    %1704 = vmatprep.subr.mxu0 0.0
    %1705 = vmatpush1.msra.mxu0 %v1405
    %1706 = vmatprep.subr.mxu0 0.0
    %1707 = vmatpush1.msra.mxu0 %v1406
    %1708 = vmatprep.subr.mxu0 0.0
    %1709 = vmatpush1.msra.mxu0 %v1407
    %1710 = vmatprep.subr.mxu0 0.0
    %1711 = vmatpush1.msra.mxu0 %v1408
    %1712 = vmatprep.subr.mxu0 0.0
    %1713 = vmatpush1.msra.mxu0 %v1409
    %1714 = vmatprep.subr.mxu0 0.0
    %1715 = vmatpush1.msra.mxu0 %v1410
    %1716 = vmatprep.subr.mxu0 0.0
    %1717 = vmatpush1.msra.mxu0 %v1411
    %1718 = vmatprep.subr.mxu0 0.0
    %1719 = vmatpush1.msra.mxu0 %v1412
    %1720 = vmatprep.subr.mxu0 0.0
    %1721 = vmatpush1.msra.mxu0 %v1413
    %1722 = vmatprep.subr.mxu0 0.0
    %1723 = vmatpush1.msra.mxu0 %v1414
    %1724 = vmatprep.subr.mxu0 0.0
    %1725 = vmatpush1.msra.mxu0 %v1415
    %1726 = vmatprep.subr.mxu0 0.0
    %1727 = vmatpush1.msra.mxu0 %v1416
    %1728 = vmatprep.subr.mxu0 0.0
    %1729 = vmatpush1.msra.mxu0 %v1417
    %1730 = vmatprep.subr.mxu0 0.0
    %1731 = vmatpush1.msra.mxu0 %v1418
    %1732 = vmatprep.subr.mxu0 0.0
    %1733 = vmatpush1.msra.mxu0 %v1419
    %1734 = vmatprep.subr.mxu0 0.0
    %1735 = vmatpush1.msra.mxu0 %v1420
    %1736 = vmatprep.subr.mxu0 0.0
    %1737 = vmatpush1.msra.mxu0 %v1421
    %1738 = vmatprep.subr.mxu0 0.0
    %1739 = vmatpush1.msra.mxu0 %v1422
    %1740 = vmatprep.subr.mxu0 0.0
    %1741 = vmatpush1.msra.mxu0 %v1423
    %1742 = vmatprep.subr.mxu0 0.0
    %1743 = vmatpush1.msra.mxu0 %v1424
    %1744 = vmatprep.subr.mxu0 0.0
    %1745 = vmatpush1.msra.mxu0 %v1425
    %1746 = vmatprep.subr.mxu0 0.0
    %1747 = vmatpush1.msra.mxu0 %v1426
    %1748 = vmatprep.subr.mxu0 0.0
    %1749 = vmatpush1.msra.mxu0 %v1427
    %1750 = vmatprep.subr.mxu0 0.0
    %1751 = vmatpush1.msra.mxu0 %v1428
    %1752 = vmatprep.subr.mxu0 0.0
    %1753 = vmatpush1.msra.mxu0 %v1429
    %1754 = vmatprep.subr.mxu0 0.0
    %1755 = vmatpush1.msra.mxu0 %v1430
    %1756 = vmatprep.subr.mxu0 0.0
    %1757 = vmatpush1.msra.mxu0 %v1431
    %1758 = vmatprep.mubr.f32.mxu0 %v1623
    %1759 = vmatmul.mubr.f32.gmra.mrb[0].mxu0 %v1614
    %v1760 = vpop.f32.mrb[0].mxu0
    %v1761 = vadd.f32 %v1691, %v1760
    %v1762 = vpop.f32.mrb[0].mxu0
    %1763 = vdwg.mxu0
    %v1764 = vmul.f32 %v1569, 0.001953125
    %v1765 = vmul.f32 %v1761, 0.001953125
    %v1766 = vmul.f32 %v1764, %v1764
    %v1767 = vsub.f32 %v1765, %v1766
    %v1768 = vld [vmem:[%s3] sm:$0x1]
    %v1769 = vadd.f32 %v1767, 1e-05
    %v1770 = vrsqrt.pop %v1769
    %v1771 = vmul.f32 %v1768, %v1770
    %v1772 = vld [vmem:[%s4] sm:$0x1]
    %v1773 = vmul.f32 %v1764, %v1771
    %v1774 = vsub.f32 %v1772, %v1773
    %v1775 = vld [vmem:[%s6] sm:$0xff]
    %v1776 = vld [vmem:[%s6 + $0x8] sm:$0xff]
    %v1777 = vld [vmem:[%s6 + $0x10] sm:$0xff]
    %v1778 = vld [vmem:[%s6 + $0x18] sm:$0xff]
    %v1779 = vld [vmem:[%s6 + $0x20] sm:$0xff]
    %v1780 = vld [vmem:[%s6 + $0x28] sm:$0xff]
    %v1781 = vld [vmem:[%s6 + $0x30] sm:$0xff]
    %v1782 = vld [vmem:[%s6 + $0x38] sm:$0xff]
    %v1783 = vld [vmem:[%s6 + $0x40] sm:$0xff]
    %v1784 = vld [vmem:[%s6 + $0x48] sm:$0xff]
    %v1785 = vld [vmem:[%s6 + $0x50] sm:$0xff]
    %v1786 = vld [vmem:[%s6 + $0x58] sm:$0xff]
    %v1787 = vld [vmem:[%s6 + $0x60] sm:$0xff]
    %v1788 = vld [vmem:[%s6 + $0x68] sm:$0xff]
    %v1789 = vld [vmem:[%s6 + $0x70] sm:$0xff]
    %v1790 = vld [vmem:[%s6 + $0x78] sm:$0xff]
    %vm1791 = vcmask 261120
    %v1793 = vsel %vm1791, %v1771, 0
    %1795 = vmatprep.subr.mxu0 %v1776
    %1796 = vmatpush1.msra.mxu0 %v1775
    %1797 = vmatprep.subr.mxu0 %v1780
    %1798 = vmatpush1.msra.mxu0 %v1779
    %1799 = vmatprep.subr.mxu0 %v1784
    %1800 = vmatpush1.msra.mxu0 %v1783
    %1801 = vmatprep.subr.mxu0 %v1788
    %1802 = vmatpush1.msra.mxu0 %v1787
    %1803 = vmatprep.subr.mxu0 0.0
    %1804 = vmatpush1.msra.mxu0 0.0
    %1805 = vmatprep.subr.mxu0 0.0
    %1806 = vmatpush1.msra.mxu0 0.0
    %1807 = vmatprep.subr.mxu0 0.0
    %1808 = vmatpush1.msra.mxu0 0.0
    %1809 = vmatprep.subr.mxu0 0.0
    %1810 = vmatpush1.msra.mxu0 0.0
    %1811 = vmatprep.subr.mxu0 0.0
    %1812 = vmatpush1.msra.mxu0 0.0
    %1813 = vmatprep.subr.mxu0 0.0
    %1814 = vmatpush1.msra.mxu0 0.0
    %1815 = vmatprep.subr.mxu0 0.0
    %1816 = vmatpush1.msra.mxu0 0.0
    %1817 = vmatprep.subr.mxu0 0.0
    %1818 = vmatpush1.msra.mxu0 0.0
    %1819 = vmatprep.subr.mxu0 0.0
    %1820 = vmatpush1.msra.mxu0 0.0
    %1821 = vmatprep.subr.mxu0 0.0
    %1822 = vmatpush1.msra.mxu0 0.0
    %1823 = vmatprep.subr.mxu0 0.0
    %1824 = vmatpush1.msra.mxu0 0.0
    %1825 = vmatprep.subr.mxu0 0.0
    %1826 = vmatpush1.msra.mxu0 0.0
    %1827 = vmatprep.subr.mxu0 0.0
    %1828 = vmatpush1.msra.mxu0 0.0
    %1829 = vmatprep.subr.mxu0 0.0
    %1830 = vmatpush1.msra.mxu0 0.0
    %1831 = vmatprep.subr.mxu0 0.0
    %1832 = vmatpush1.msra.mxu0 0.0
    %1833 = vmatprep.subr.mxu0 0.0
    %1834 = vmatpush1.msra.mxu0 0.0
    %1835 = vmatprep.subr.mxu0 0.0
    %1836 = vmatpush1.msra.mxu0 0.0
    %1837 = vmatprep.subr.mxu0 0.0
    %1838 = vmatpush1.msra.mxu0 0.0
    %1839 = vmatprep.subr.mxu0 0.0
    %1840 = vmatpush1.msra.mxu0 0.0
    %1841 = vmatprep.subr.mxu0 0.0
    %1842 = vmatpush1.msra.mxu0 0.0
    %1843 = vmatprep.subr.mxu0 0.0
    %1844 = vmatpush1.msra.mxu0 0.0
    %1845 = vmatprep.subr.mxu0 0.0
    %1846 = vmatpush1.msra.mxu0 0.0
    %1847 = vmatprep.subr.mxu0 0.0
    %1848 = vmatpush1.msra.mxu0 0.0
    %1849 = vmatprep.subr.mxu0 0.0
    %1850 = vmatpush1.msra.mxu0 0.0
    %1851 = vmatprep.subr.mxu0 0.0
    %1852 = vmatpush1.msra.mxu0 0.0
    %1853 = vmatprep.subr.mxu0 0.0
    %1854 = vmatpush1.msra.mxu0 0.0
    %1855 = vmatprep.subr.mxu0 0.0
    %1856 = vmatpush1.msra.mxu0 0.0
    %1857 = vmatprep.subr.mxu0 0.0
    %1858 = vmatpush1.msra.mxu0 0.0
    %1859 = vmatprep.mubr.f32.mxu0 0.0
    %1860 = vmatmul.mubr.f32.gmra.mrb[0].mxu0 %v1793
    %v1861 = vpop.f32.mrb[0].mxu0
    %v1862 = vadd.f32 0.0, %v1861
    %v1863 = vpop.f32.mrb[0].mxu0
    %v1864 = vadd.f32 0.0, %v1863
    %1865 = vdwg.mxu0
    %1866 = vmatprep.subr.mxu0 %v1778
    %1867 = vmatpush1.msra.mxu0 %v1777
    %1868 = vmatprep.subr.mxu0 %v1782
    %1869 = vmatpush1.msra.mxu0 %v1781
    %1870 = vmatprep.subr.mxu0 %v1786
    %1871 = vmatpush1.msra.mxu0 %v1785
    %1872 = vmatprep.subr.mxu0 %v1790
    %1873 = vmatpush1.msra.mxu0 %v1789
    %1874 = vmatprep.subr.mxu0 0.0
    %1875 = vmatpush1.msra.mxu0 0.0
    %1876 = vmatprep.subr.mxu0 0.0
    %1877 = vmatpush1.msra.mxu0 0.0
    %1878 = vmatprep.subr.mxu0 0.0
    %1879 = vmatpush1.msra.mxu0 0.0
    %1880 = vmatprep.subr.mxu0 0.0
    %1881 = vmatpush1.msra.mxu0 0.0
    %1882 = vmatprep.subr.mxu0 0.0
    %1883 = vmatpush1.msra.mxu0 0.0
    %1884 = vmatprep.subr.mxu0 0.0
    %1885 = vmatpush1.msra.mxu0 0.0
    %1886 = vmatprep.subr.mxu0 0.0
    %1887 = vmatpush1.msra.mxu0 0.0
    %1888 = vmatprep.subr.mxu0 0.0
    %1889 = vmatpush1.msra.mxu0 0.0
    %1890 = vmatprep.subr.mxu0 0.0
    %1891 = vmatpush1.msra.mxu0 0.0
    %1892 = vmatprep.subr.mxu0 0.0
    %1893 = vmatpush1.msra.mxu0 0.0
    %1894 = vmatprep.subr.mxu0 0.0
    %1895 = vmatpush1.msra.mxu0 0.0
    %1896 = vmatprep.subr.mxu0 0.0
    %1897 = vmatpush1.msra.mxu0 0.0
    %1898 = vmatprep.subr.mxu0 0.0
    %1899 = vmatpush1.msra.mxu0 0.0
    %1900 = vmatprep.subr.mxu0 0.0
    %1901 = vmatpush1.msra.mxu0 0.0
    %1902 = vmatprep.subr.mxu0 0.0
    %1903 = vmatpush1.msra.mxu0 0.0
    %1904 = vmatprep.subr.mxu0 0.0
    %1905 = vmatpush1.msra.mxu0 0.0
    %1906 = vmatprep.subr.mxu0 0.0
    %1907 = vmatpush1.msra.mxu0 0.0
    %1908 = vmatprep.subr.mxu0 0.0
    %1909 = vmatpush1.msra.mxu0 0.0
    %1910 = vmatprep.subr.mxu0 0.0
    %1911 = vmatpush1.msra.mxu0 0.0
    %1912 = vmatprep.subr.mxu0 0.0
    %1913 = vmatpush1.msra.mxu0 0.0
    %1914 = vmatprep.subr.mxu0 0.0
    %1915 = vmatpush1.msra.mxu0 0.0
    %1916 = vmatprep.subr.mxu0 0.0
    %1917 = vmatpush1.msra.mxu0 0.0
    %1918 = vmatprep.subr.mxu0 0.0
    %1919 = vmatpush1.msra.mxu0 0.0
    %1920 = vmatprep.subr.mxu0 0.0
    %1921 = vmatpush1.msra.mxu0 0.0
    %1922 = vmatprep.subr.mxu0 0.0
    %1923 = vmatpush1.msra.mxu0 0.0
    %1924 = vmatprep.subr.mxu0 0.0
    %1925 = vmatpush1.msra.mxu0 0.0
    %1926 = vmatprep.subr.mxu0 0.0
    %1927 = vmatpush1.msra.mxu0 0.0
    %1928 = vmatprep.subr.mxu0 0.0
    %1929 = vmatpush1.msra.mxu0 0.0
    %1930 = vmatprep.mubr.f32.mxu0 0.0
    %1931 = vmatmul.mubr.f32.gmra.mrb[0].mxu0 %v1793
    %v1932 = vpop.f32.mrb[0].mxu0
    %v1933 = vadd.f32 0.0, %v1932
    %v1934 = vpop.f32.mrb[0].mxu0
    %v1935 = vadd.f32 0.0, %v1934
    %1936 = vdwg.mxu0
    %v1938 = vsel %vm1791, %v1774, 0
    %1940 = vmatprep.subr.mxu0 %v1776
    %1941 = vmatpush1.msra.mxu0 %v1775
    %1942 = vmatprep.subr.mxu0 %v1780
    %1943 = vmatpush1.msra.mxu0 %v1779
    %1944 = vmatprep.subr.mxu0 %v1784
    %1945 = vmatpush1.msra.mxu0 %v1783
    %1946 = vmatprep.subr.mxu0 %v1788
    %1947 = vmatpush1.msra.mxu0 %v1787
    %1948 = vmatprep.subr.mxu0 0.0
    %1949 = vmatpush1.msra.mxu0 0.0
    %1950 = vmatprep.subr.mxu0 0.0
    %1951 = vmatpush1.msra.mxu0 0.0
    %1952 = vmatprep.subr.mxu0 0.0
    %1953 = vmatpush1.msra.mxu0 0.0
    %1954 = vmatprep.subr.mxu0 0.0
    %1955 = vmatpush1.msra.mxu0 0.0
    %1956 = vmatprep.subr.mxu0 0.0
    %1957 = vmatpush1.msra.mxu0 0.0
    %1958 = vmatprep.subr.mxu0 0.0
    %1959 = vmatpush1.msra.mxu0 0.0
    %1960 = vmatprep.subr.mxu0 0.0
    %1961 = vmatpush1.msra.mxu0 0.0
    %1962 = vmatprep.subr.mxu0 0.0
    %1963 = vmatpush1.msra.mxu0 0.0
    %1964 = vmatprep.subr.mxu0 0.0
    %1965 = vmatpush1.msra.mxu0 0.0
    %1966 = vmatprep.subr.mxu0 0.0
    %1967 = vmatpush1.msra.mxu0 0.0
    %1968 = vmatprep.subr.mxu0 0.0
    %1969 = vmatpush1.msra.mxu0 0.0
    %1970 = vmatprep.subr.mxu0 0.0
    %1971 = vmatpush1.msra.mxu0 0.0
    %1972 = vmatprep.subr.mxu0 0.0
    %1973 = vmatpush1.msra.mxu0 0.0
    %1974 = vmatprep.subr.mxu0 0.0
    %1975 = vmatpush1.msra.mxu0 0.0
    %1976 = vmatprep.subr.mxu0 0.0
    %1977 = vmatpush1.msra.mxu0 0.0
    %1978 = vmatprep.subr.mxu0 0.0
    %1979 = vmatpush1.msra.mxu0 0.0
    %1980 = vmatprep.subr.mxu0 0.0
    %1981 = vmatpush1.msra.mxu0 0.0
    %1982 = vmatprep.subr.mxu0 0.0
    %1983 = vmatpush1.msra.mxu0 0.0
    %1984 = vmatprep.subr.mxu0 0.0
    %1985 = vmatpush1.msra.mxu0 0.0
    %1986 = vmatprep.subr.mxu0 0.0
    %1987 = vmatpush1.msra.mxu0 0.0
    %1988 = vmatprep.subr.mxu0 0.0
    %1989 = vmatpush1.msra.mxu0 0.0
    %1990 = vmatprep.subr.mxu0 0.0
    %1991 = vmatpush1.msra.mxu0 0.0
    %1992 = vmatprep.subr.mxu0 0.0
    %1993 = vmatpush1.msra.mxu0 0.0
    %1994 = vmatprep.subr.mxu0 0.0
    %1995 = vmatpush1.msra.mxu0 0.0
    %1996 = vmatprep.subr.mxu0 0.0
    %1997 = vmatpush1.msra.mxu0 0.0
    %1998 = vmatprep.subr.mxu0 0.0
    %1999 = vmatpush1.msra.mxu0 0.0
    %2000 = vmatprep.subr.mxu0 0.0
    %2001 = vmatpush1.msra.mxu0 0.0
    %2002 = vmatprep.subr.mxu0 0.0
    %2003 = vmatpush1.msra.mxu0 0.0
    %2004 = vmatprep.mubr.f32.mxu0 0.0
    %2005 = vmatmul.mubr.f32.gmra.mrb[0].mxu0 %v1938
    %v2006 = vpop.f32.mrb[0].mxu0
    %v2007 = vadd.f32 0.0, %v2006
    %v2008 = vpop.f32.mrb[0].mxu0
    %v2009 = vadd.f32 0.0, %v2008
    %2010 = vdwg.mxu0
    %2011 = vmatprep.subr.mxu0 %v1778
    %2012 = vmatpush1.msra.mxu0 %v1777
    %2013 = vmatprep.subr.mxu0 %v1782
    %2014 = vmatpush1.msra.mxu0 %v1781
    %2015 = vmatprep.subr.mxu0 %v1786
    %2016 = vmatpush1.msra.mxu0 %v1785
    %2017 = vmatprep.subr.mxu0 %v1790
    %2018 = vmatpush1.msra.mxu0 %v1789
    %2019 = vmatprep.subr.mxu0 0.0
    %2020 = vmatpush1.msra.mxu0 0.0
    %2021 = vmatprep.subr.mxu0 0.0
    %2022 = vmatpush1.msra.mxu0 0.0
    %2023 = vmatprep.subr.mxu0 0.0
    %2024 = vmatpush1.msra.mxu0 0.0
    %2025 = vmatprep.subr.mxu0 0.0
    %2026 = vmatpush1.msra.mxu0 0.0
    %2027 = vmatprep.subr.mxu0 0.0
    %2028 = vmatpush1.msra.mxu0 0.0
    %2029 = vmatprep.subr.mxu0 0.0
    %2030 = vmatpush1.msra.mxu0 0.0
    %2031 = vmatprep.subr.mxu0 0.0
    %2032 = vmatpush1.msra.mxu0 0.0
    %2033 = vmatprep.subr.mxu0 0.0
    %2034 = vmatpush1.msra.mxu0 0.0
    %2035 = vmatprep.subr.mxu0 0.0
    %2036 = vmatpush1.msra.mxu0 0.0
    %2037 = vmatprep.subr.mxu0 0.0
    %2038 = vmatpush1.msra.mxu0 0.0
    %2039 = vmatprep.subr.mxu0 0.0
    %2040 = vmatpush1.msra.mxu0 0.0
    %2041 = vmatprep.subr.mxu0 0.0
    %2042 = vmatpush1.msra.mxu0 0.0
    %2043 = vmatprep.subr.mxu0 0.0
    %2044 = vmatpush1.msra.mxu0 0.0
    %2045 = vmatprep.subr.mxu0 0.0
    %2046 = vmatpush1.msra.mxu0 0.0
    %2047 = vmatprep.subr.mxu0 0.0
    %2048 = vmatpush1.msra.mxu0 0.0
    %2049 = vmatprep.subr.mxu0 0.0
    %2050 = vmatpush1.msra.mxu0 0.0
    %2051 = vmatprep.subr.mxu0 0.0
    %2052 = vmatpush1.msra.mxu0 0.0
    %2053 = vmatprep.subr.mxu0 0.0
    %2054 = vmatpush1.msra.mxu0 0.0
    %2055 = vmatprep.subr.mxu0 0.0
    %2056 = vmatpush1.msra.mxu0 0.0
    %2057 = vmatprep.subr.mxu0 0.0
    %2058 = vmatpush1.msra.mxu0 0.0
    %2059 = vmatprep.subr.mxu0 0.0
    %2060 = vmatpush1.msra.mxu0 0.0
    %2061 = vmatprep.subr.mxu0 0.0
    %2062 = vmatpush1.msra.mxu0 0.0
    %2063 = vmatprep.subr.mxu0 0.0
    %2064 = vmatpush1.msra.mxu0 0.0
    %2065 = vmatprep.subr.mxu0 0.0
    %2066 = vmatpush1.msra.mxu0 0.0
    %2067 = vmatprep.subr.mxu0 0.0
    %2068 = vmatpush1.msra.mxu0 0.0
    %2069 = vmatprep.subr.mxu0 0.0
    %2070 = vmatpush1.msra.mxu0 0.0
    %2071 = vmatprep.subr.mxu0 0.0
    %2072 = vmatpush1.msra.mxu0 0.0
    %2073 = vmatprep.subr.mxu0 0.0
    %2074 = vmatpush1.msra.mxu0 0.0
    %2075 = vmatprep.mubr.f32.mxu0 0.0
    %2076 = vmatmul.mubr.f32.gmra.mrb[0].mxu0 %v1938
    %v2077 = vpop.f32.mrb[0].mxu0
    %v2078 = vadd.f32 0.0, %v2077
    %v2079 = vpop.f32.mrb[0].mxu0
    %v2080 = vadd.f32 0.0, %v2079
    %2081 = vdwg.mxu0
    %v2082 = vlaneseq
    %v2083 = vshrl.u32 %v2082, 7
    %v2084 = vsub.s32 0, %v2083
    %v2085 = vrot.slane %v1862, %v2084
    %v2086 = vlaneseq
    %v2087 = vshrl.u32 %v2086, 7
    %v2088 = vsub.s32 0, %v2087
    %v2089 = vrot.slane %v1864, %v2088
    %v2090 = vlaneseq
    %v2091 = vshrl.u32 %v2090, 7
    %v2092 = vsub.s32 0, %v2091
    %v2093 = vrot.slane %v1933, %v2092
    %v2094 = vlaneseq
    %v2095 = vshrl.u32 %v2094, 7
    %v2096 = vsub.s32 0, %v2095
    %v2097 = vrot.slane %v1935, %v2096
    %v2098 = vmul.f32 %v1316, %v2085
    %v2099 = vmul.f32 %v1317, %v2089
    %v2100 = vmul.f32 %v1318, %v2093
    %v2101 = vmul.f32 %v1319, %v2097
    %v2102 = vmul.f32 %v1320, %v2085
    %v2103 = vmul.f32 %v1321, %v2089
    %v2104 = vmul.f32 %v1322, %v2093
    %v2105 = vmul.f32 %v1323, %v2097
    %v2106 = vmul.f32 %v1324, %v2085
    %v2107 = vmul.f32 %v1325, %v2089
    %v2108 = vmul.f32 %v1326, %v2093
    %v2109 = vmul.f32 %v1327, %v2097
    %v2110 = vmul.f32 %v1328, %v2085
    %v2111 = vmul.f32 %v1329, %v2089
    %v2112 = vmul.f32 %v1330, %v2093
    %v2113 = vmul.f32 %v1331, %v2097
    %v2114 = vlaneseq
    %v2115 = vshrl.u32 %v2114, 7
    %v2116 = vsub.s32 0, %v2115
    %v2117 = vrot.slane %v2007, %v2116
    %v2118 = vlaneseq
    %v2119 = vshrl.u32 %v2118, 7
    %v2120 = vsub.s32 0, %v2119
    %v2121 = vrot.slane %v2009, %v2120
    %v2122 = vlaneseq
    %v2123 = vshrl.u32 %v2122, 7
    %v2124 = vsub.s32 0, %v2123
    %v2125 = vrot.slane %v2078, %v2124
    %v2126 = vlaneseq
    %v2127 = vshrl.u32 %v2126, 7
    %v2128 = vsub.s32 0, %v2127
    %v2129 = vrot.slane %v2080, %v2128
    %v2130 = vadd.f32 %v2098, %v2117
    %v2131 = vadd.f32 %v2099, %v2121
    %v2132 = vadd.f32 %v2100, %v2125
    %v2133 = vadd.f32 %v2101, %v2129
    %v2134 = vadd.f32 %v2102, %v2117
    %v2135 = vadd.f32 %v2103, %v2121
    %v2136 = vadd.f32 %v2104, %v2125
    %v2137 = vadd.f32 %v2105, %v2129
    %v2138 = vadd.f32 %v2106, %v2117
    %v2139 = vadd.f32 %v2107, %v2121
    %v2140 = vadd.f32 %v2108, %v2125
    %v2141 = vadd.f32 %v2109, %v2129
    %v2142 = vadd.f32 %v2110, %v2117
    %v2143 = vadd.f32 %v2111, %v2121
    %v2144 = vadd.f32 %v2112, %v2125
    %v2145 = vadd.f32 %v2113, %v2129
    %v2146 = vsub.f32 0.0, %v2130
    %v2147 = vsub.f32 0.0, %v2131
    %v2148 = vsub.f32 0.0, %v2132
    %v2149 = vsub.f32 0.0, %v2133
    %v2150 = vsub.f32 0.0, %v2134
    %v2151 = vsub.f32 0.0, %v2135
    %v2152 = vsub.f32 0.0, %v2136
    %v2153 = vsub.f32 0.0, %v2137
    %v2154 = vsub.f32 0.0, %v2138
    %v2155 = vsub.f32 0.0, %v2139
    %v2156 = vsub.f32 0.0, %v2140
    %v2157 = vsub.f32 0.0, %v2141
    %v2158 = vsub.f32 0.0, %v2142
    %v2159 = vsub.f32 0.0, %v2143
    %v2160 = vsub.f32 0.0, %v2144
    %v2161 = vsub.f32 0.0, %v2145
    %v2162 = vmul.f32 %v2146, 1.442695
    %v2163 = vpow.pop %v2162
    %v2164 = vmul.f32 %v2147, 1.442695
    %v2165 = vpow.pop %v2164
    %v2166 = vmul.f32 %v2148, 1.442695
    %v2167 = vpow.pop %v2166
    %v2168 = vmul.f32 %v2149, 1.442695
    %v2169 = vpow.pop %v2168
    %v2170 = vmul.f32 %v2150, 1.442695
    %v2171 = vpow.pop %v2170
    %v2172 = vmul.f32 %v2151, 1.442695
    %v2173 = vpow.pop %v2172
    %v2174 = vmul.f32 %v2152, 1.442695
    %v2175 = vpow.pop %v2174
    %v2176 = vmul.f32 %v2153, 1.442695
    %v2177 = vpow.pop %v2176
    %v2178 = vmul.f32 %v2154, 1.442695
    %v2179 = vpow.pop %v2178
    %v2180 = vmul.f32 %v2155, 1.442695
    %v2181 = vpow.pop %v2180
    %v2182 = vmul.f32 %v2156, 1.442695
    %v2183 = vpow.pop %v2182
    %v2184 = vmul.f32 %v2157, 1.442695
    %v2185 = vpow.pop %v2184
    %v2186 = vmul.f32 %v2158, 1.442695
    %v2187 = vpow.pop %v2186
    %v2188 = vmul.f32 %v2159, 1.442695
    %v2189 = vpow.pop %v2188
    %v2190 = vmul.f32 %v2160, 1.442695
    %v2191 = vpow.pop %v2190
    %v2192 = vmul.f32 %v2161, 1.442695
    %v2193 = vpow.pop %v2192
    %v2194 = vadd.f32 %v2163, 1.0
    %v2195 = vadd.f32 %v2165, 1.0
    %v2196 = vadd.f32 %v2167, 1.0
    %v2197 = vadd.f32 %v2169, 1.0
    %v2198 = vadd.f32 %v2171, 1.0
    %v2199 = vadd.f32 %v2173, 1.0
    %v2200 = vadd.f32 %v2175, 1.0
    %v2201 = vadd.f32 %v2177, 1.0
    %v2202 = vadd.f32 %v2179, 1.0
    %v2203 = vadd.f32 %v2181, 1.0
    %v2204 = vadd.f32 %v2183, 1.0
    %v2205 = vadd.f32 %v2185, 1.0
    %v2206 = vadd.f32 %v2187, 1.0
    %v2207 = vadd.f32 %v2189, 1.0
    %v2208 = vadd.f32 %v2191, 1.0
    %v2209 = vadd.f32 %v2193, 1.0
    %v2210 = vrcp.pop %v2194
    %v2211 = vrcp.pop %v2195
    %v2212 = vrcp.pop %v2196
    %v2213 = vrcp.pop %v2197
    %v2214 = vrcp.pop %v2198
    %v2215 = vrcp.pop %v2199
    %v2216 = vrcp.pop %v2200
    %v2217 = vrcp.pop %v2201
    %v2218 = vrcp.pop %v2202
    %v2219 = vrcp.pop %v2203
    %v2220 = vrcp.pop %v2204
    %v2221 = vrcp.pop %v2205
    %v2222 = vrcp.pop %v2206
    %v2223 = vrcp.pop %v2207
    %v2224 = vrcp.pop %v2208
    %v2225 = vrcp.pop %v2209
    %v2226 = vmul.f32 %v2130, %v2210
    %v2227 = vmul.f32 %v2131, %v2211
    %v2228 = vmul.f32 %v2132, %v2212
    %v2229 = vmul.f32 %v2133, %v2213
    %v2230 = vmul.f32 %v2134, %v2214
    %v2231 = vmul.f32 %v2135, %v2215
    %v2232 = vmul.f32 %v2136, %v2216
    %v2233 = vmul.f32 %v2137, %v2217
    %v2234 = vmul.f32 %v2138, %v2218
    %v2235 = vmul.f32 %v2139, %v2219
    %v2236 = vmul.f32 %v2140, %v2220
    %v2237 = vmul.f32 %v2141, %v2221
    %v2238 = vmul.f32 %v2142, %v2222
    %v2239 = vmul.f32 %v2143, %v2223
    %v2240 = vmul.f32 %v2144, %v2224
    %v2241 = vmul.f32 %v2145, %v2225
    %v2242 = vpack.c.bf16 %v2230, %v2226
    %v2243 = vpack.c.bf16 %v2231, %v2227
    %v2244 = vpack.c.bf16 %v2232, %v2228
    %v2245 = vpack.c.bf16 %v2233, %v2229
    %v2246 = vpack.c.bf16 %v2238, %v2234
    %v2247 = vpack.c.bf16 %v2239, %v2235
    %v2248 = vpack.c.bf16 %v2240, %v2236
    %v2249 = vpack.c.bf16 %v2241, %v2237
    %v2250 = vld [vmem:[%s7] sm:$0xf]
    %v2251 = vld [vmem:[%s7 + $0x4] sm:$0xf]
    %v2252 = vld [vmem:[%s7 + $0x8] sm:$0xf]
    %v2253 = vld [vmem:[%s7 + $0xc] sm:$0xf]
    %v2254 = vld [vmem:[%s7 + $0x10] sm:$0xf]
    %v2255 = vld [vmem:[%s7 + $0x14] sm:$0xf]
    %v2256 = vld [vmem:[%s7 + $0x18] sm:$0xf]
    %v2257 = vld [vmem:[%s7 + $0x1c] sm:$0xf]
    %v2258 = vld [vmem:[%s7 + $0x20] sm:$0xf]
    %v2259 = vld [vmem:[%s7 + $0x24] sm:$0xf]
    %v2260 = vld [vmem:[%s7 + $0x28] sm:$0xf]
    %v2261 = vld [vmem:[%s7 + $0x2c] sm:$0xf]
    %v2262 = vld [vmem:[%s7 + $0x30] sm:$0xf]
    %v2263 = vld [vmem:[%s7 + $0x34] sm:$0xf]
    %v2264 = vld [vmem:[%s7 + $0x38] sm:$0xf]
    %v2265 = vld [vmem:[%s7 + $0x3c] sm:$0xf]
    %v2266 = vld [vmem:[%s7 + $0x40] sm:$0xf]
    %v2267 = vld [vmem:[%s7 + $0x44] sm:$0xf]
    %v2268 = vld [vmem:[%s7 + $0x48] sm:$0xf]
    %v2269 = vld [vmem:[%s7 + $0x4c] sm:$0xf]
    %v2270 = vld [vmem:[%s7 + $0x50] sm:$0xf]
    %v2271 = vld [vmem:[%s7 + $0x54] sm:$0xf]
    %v2272 = vld [vmem:[%s7 + $0x58] sm:$0xf]
    %v2273 = vld [vmem:[%s7 + $0x5c] sm:$0xf]
    %v2274 = vld [vmem:[%s7 + $0x60] sm:$0xf]
    %v2275 = vld [vmem:[%s7 + $0x64] sm:$0xf]
    %v2276 = vld [vmem:[%s7 + $0x68] sm:$0xf]
    %v2277 = vld [vmem:[%s7 + $0x6c] sm:$0xf]
    %v2278 = vld [vmem:[%s7 + $0x70] sm:$0xf]
    %v2279 = vld [vmem:[%s7 + $0x74] sm:$0xf]
    %v2280 = vld [vmem:[%s7 + $0x78] sm:$0xf]
    %v2281 = vld [vmem:[%s7 + $0x7c] sm:$0xf]
    %v2282 = vld [vmem:[%s7 + $0x80] sm:$0xf]
    %v2283 = vld [vmem:[%s7 + $0x84] sm:$0xf]
    %v2284 = vld [vmem:[%s7 + $0x88] sm:$0xf]
    %v2285 = vld [vmem:[%s7 + $0x8c] sm:$0xf]
    %v2286 = vld [vmem:[%s7 + $0x90] sm:$0xf]
    %v2287 = vld [vmem:[%s7 + $0x94] sm:$0xf]
    %v2288 = vld [vmem:[%s7 + $0x98] sm:$0xf]
    %v2289 = vld [vmem:[%s7 + $0x9c] sm:$0xf]
    %v2290 = vld [vmem:[%s7 + $0xa0] sm:$0xf]
    %v2291 = vld [vmem:[%s7 + $0xa4] sm:$0xf]
    %v2292 = vld [vmem:[%s7 + $0xa8] sm:$0xf]
    %v2293 = vld [vmem:[%s7 + $0xac] sm:$0xf]
    %v2294 = vld [vmem:[%s7 + $0xb0] sm:$0xf]
    %v2295 = vld [vmem:[%s7 + $0xb4] sm:$0xf]
    %v2296 = vld [vmem:[%s7 + $0xb8] sm:$0xf]
    %v2297 = vld [vmem:[%s7 + $0xbc] sm:$0xf]
    %v2298 = vld [vmem:[%s7 + $0xc0] sm:$0xf]
    %v2299 = vld [vmem:[%s7 + $0xc4] sm:$0xf]
    %v2300 = vld [vmem:[%s7 + $0xc8] sm:$0xf]
    %v2301 = vld [vmem:[%s7 + $0xcc] sm:$0xf]
    %v2302 = vld [vmem:[%s7 + $0xd0] sm:$0xf]
    %v2303 = vld [vmem:[%s7 + $0xd4] sm:$0xf]
    %v2304 = vld [vmem:[%s7 + $0xd8] sm:$0xf]
    %v2305 = vld [vmem:[%s7 + $0xdc] sm:$0xf]
    %v2306 = vld [vmem:[%s7 + $0xe0] sm:$0xf]
    %v2307 = vld [vmem:[%s7 + $0xe4] sm:$0xf]
    %v2308 = vld [vmem:[%s7 + $0xe8] sm:$0xf]
    %v2309 = vld [vmem:[%s7 + $0xec] sm:$0xf]
    %v2310 = vld [vmem:[%s7 + $0xf0] sm:$0xf]
    %v2311 = vld [vmem:[%s7 + $0xf4] sm:$0xf]
    %v2312 = vld [vmem:[%s7 + $0xf8] sm:$0xf]
    %v2313 = vld [vmem:[%s7 + $0xfc] sm:$0xf]
    %v2378 = vunpack.c.l.b16 %v2250
    %v2379 = vunpack.c.l.b16 %v2251
    %v2380 = vunpack.c.l.b16 %v2252
    %v2381 = vunpack.c.l.b16 %v2253
    %v2382 = vunpack.c.l.b16 %v2254
    %v2383 = vunpack.c.l.b16 %v2255
    %v2384 = vunpack.c.l.b16 %v2256
    %v2385 = vunpack.c.l.b16 %v2257
    %v2386 = vunpack.c.l.b16 %v2258
    %v2387 = vunpack.c.l.b16 %v2259
    %v2388 = vunpack.c.l.b16 %v2260
    %v2389 = vunpack.c.l.b16 %v2261
    %v2390 = vunpack.c.l.b16 %v2262
    %v2391 = vunpack.c.l.b16 %v2263
    %v2392 = vunpack.c.l.b16 %v2264
    %v2393 = vunpack.c.l.b16 %v2265
    %v2394 = vunpack.c.l.b16 %v2266
    %v2395 = vunpack.c.l.b16 %v2267
    %v2396 = vunpack.c.l.b16 %v2268
    %v2397 = vunpack.c.l.b16 %v2269
    %v2398 = vunpack.c.l.b16 %v2270
    %v2399 = vunpack.c.l.b16 %v2271
    %v2400 = vunpack.c.l.b16 %v2272
    %v2401 = vunpack.c.l.b16 %v2273
    %v2402 = vunpack.c.l.b16 %v2274
    %v2403 = vunpack.c.l.b16 %v2275
    %v2404 = vunpack.c.l.b16 %v2276
    %v2405 = vunpack.c.l.b16 %v2277
    %v2406 = vunpack.c.l.b16 %v2278
    %v2407 = vunpack.c.l.b16 %v2279
    %v2408 = vunpack.c.l.b16 %v2280
    %v2409 = vunpack.c.l.b16 %v2281
    %v2410 = vunpack.c.l.b16 %v2282
    %v2411 = vunpack.c.l.b16 %v2283
    %v2412 = vunpack.c.l.b16 %v2284
    %v2413 = vunpack.c.l.b16 %v2285
    %v2414 = vunpack.c.l.b16 %v2286
    %v2415 = vunpack.c.l.b16 %v2287
    %v2416 = vunpack.c.l.b16 %v2288
    %v2417 = vunpack.c.l.b16 %v2289
    %v2418 = vunpack.c.l.b16 %v2290
    %v2419 = vunpack.c.l.b16 %v2291
    %v2420 = vunpack.c.l.b16 %v2292
    %v2421 = vunpack.c.l.b16 %v2293
    %v2422 = vunpack.c.l.b16 %v2294
    %v2423 = vunpack.c.l.b16 %v2295
    %v2424 = vunpack.c.l.b16 %v2296
    %v2425 = vunpack.c.l.b16 %v2297
    %v2426 = vunpack.c.l.b16 %v2298
    %v2427 = vunpack.c.l.b16 %v2299
    %v2428 = vunpack.c.l.b16 %v2300
    %v2429 = vunpack.c.l.b16 %v2301
    %v2430 = vunpack.c.l.b16 %v2302
    %v2431 = vunpack.c.l.b16 %v2303
    %v2432 = vunpack.c.l.b16 %v2304
    %v2433 = vunpack.c.l.b16 %v2305
    %v2434 = vunpack.c.l.b16 %v2306
    %v2435 = vunpack.c.l.b16 %v2307
    %v2436 = vunpack.c.l.b16 %v2308
    %v2437 = vunpack.c.l.b16 %v2309
    %v2438 = vunpack.c.l.b16 %v2310
    %v2439 = vunpack.c.l.b16 %v2311
    %v2440 = vunpack.c.l.b16 %v2312
    %v2441 = vunpack.c.l.b16 %v2313
    %v2442 = vpack.c.b16 %v2379, %v2378
    %v2443 = vpack.c.b16 %v2381, %v2380
    %v2444 = vpack.c.b16 %v2383, %v2382
    %v2445 = vpack.c.b16 %v2385, %v2384
    %v2446 = vpack.c.b16 %v2387, %v2386
    %v2447 = vpack.c.b16 %v2389, %v2388
    %v2448 = vpack.c.b16 %v2391, %v2390
    %v2449 = vpack.c.b16 %v2393, %v2392
    %v2450 = vpack.c.b16 %v2395, %v2394
    %v2451 = vpack.c.b16 %v2397, %v2396
    %v2452 = vpack.c.b16 %v2399, %v2398
    %v2453 = vpack.c.b16 %v2401, %v2400
    %v2454 = vpack.c.b16 %v2403, %v2402
    %v2455 = vpack.c.b16 %v2405, %v2404
    %v2456 = vpack.c.b16 %v2407, %v2406
    %v2457 = vpack.c.b16 %v2409, %v2408
    %v2458 = vpack.c.b16 %v2411, %v2410
    %v2459 = vpack.c.b16 %v2413, %v2412
    %v2460 = vpack.c.b16 %v2415, %v2414
    %v2461 = vpack.c.b16 %v2417, %v2416
    %v2462 = vpack.c.b16 %v2419, %v2418
    %v2463 = vpack.c.b16 %v2421, %v2420
    %v2464 = vpack.c.b16 %v2423, %v2422
    %v2465 = vpack.c.b16 %v2425, %v2424
    %v2466 = vpack.c.b16 %v2427, %v2426
    %v2467 = vpack.c.b16 %v2429, %v2428
    %v2468 = vpack.c.b16 %v2431, %v2430
    %v2469 = vpack.c.b16 %v2433, %v2432
    %v2470 = vpack.c.b16 %v2435, %v2434
    %v2471 = vpack.c.b16 %v2437, %v2436
    %v2472 = vpack.c.b16 %v2439, %v2438
    %v2473 = vpack.c.b16 %v2441, %v2440
    %2506 = vmatprep.subr.bf16.mxu0 0
    %2507 = vmatpush1.bf16.msra.mxu0 %v2442
    %2508 = vmatprep.subr.bf16.mxu0 0
    %2509 = vmatpush1.bf16.msra.mxu0 %v2443
    %2510 = vmatprep.subr.bf16.mxu0 0
    %2511 = vmatpush1.bf16.msra.mxu0 %v2444
    %2512 = vmatprep.subr.bf16.mxu0 0
    %2513 = vmatpush1.bf16.msra.mxu0 %v2445
    %2514 = vmatprep.subr.bf16.mxu0 0
    %2515 = vmatpush1.bf16.msra.mxu0 %v2446
    %2516 = vmatprep.subr.bf16.mxu0 0
    %2517 = vmatpush1.bf16.msra.mxu0 %v2447
    %2518 = vmatprep.subr.bf16.mxu0 0
    %2519 = vmatpush1.bf16.msra.mxu0 %v2448
    %2520 = vmatprep.subr.bf16.mxu0 0
    %2521 = vmatpush1.bf16.msra.mxu0 %v2449
    %2522 = vmatprep.subr.bf16.mxu0 0
    %2523 = vmatpush1.bf16.msra.mxu0 %v2450
    %2524 = vmatprep.subr.bf16.mxu0 0
    %2525 = vmatpush1.bf16.msra.mxu0 %v2451
    %2526 = vmatprep.subr.bf16.mxu0 0
    %2527 = vmatpush1.bf16.msra.mxu0 %v2452
    %2528 = vmatprep.subr.bf16.mxu0 0
    %2529 = vmatpush1.bf16.msra.mxu0 %v2453
    %2530 = vmatprep.subr.bf16.mxu0 0
    %2531 = vmatpush1.bf16.msra.mxu0 %v2454
    %2532 = vmatprep.subr.bf16.mxu0 0
    %2533 = vmatpush1.bf16.msra.mxu0 %v2455
    %2534 = vmatprep.subr.bf16.mxu0 0
    %2535 = vmatpush1.bf16.msra.mxu0 %v2456
    %2536 = vmatprep.subr.bf16.mxu0 0
    %2537 = vmatpush1.bf16.msra.mxu0 %v2457
    %2538 = vmatprep.mubr.bf16.mxu0 %v2243
    %2539 = vmatmul.mubr.bf16.gmra.mrb[0].mxu0 %v2242
    %v2540 = vpop.f32.mrb[0].mxu0
    %v2541 = vadd.f32 0.0, %v2540
    %v2542 = vpop.f32.mrb[0].mxu0
    %v2543 = vpop.f32.mrb[0].mxu0
    %v2544 = vadd.f32 0.0, %v2543
    %v2545 = vpop.f32.mrb[0].mxu0
    %2546 = vmatprep.mubr.bf16.mxu0 %v2247
    %2547 = vmatmul.mubr.bf16.gmra.mrb[0].mxu0 %v2246
    %v2548 = vpop.f32.mrb[0].mxu0
    %v2549 = vadd.f32 0.0, %v2548
    %v2550 = vpop.f32.mrb[0].mxu0
    %v2551 = vpop.f32.mrb[0].mxu0
    %v2552 = vadd.f32 0.0, %v2551
    %v2553 = vpop.f32.mrb[0].mxu0
    %2554 = vdwg.mxu0
    %2555 = vmatprep.subr.bf16.mxu0 0
    %2556 = vmatpush1.bf16.msra.mxu0 %v2458
    %2557 = vmatprep.subr.bf16.mxu0 0
    %2558 = vmatpush1.bf16.msra.mxu0 %v2459
    %2559 = vmatprep.subr.bf16.mxu0 0
    %2560 = vmatpush1.bf16.msra.mxu0 %v2460
    %2561 = vmatprep.subr.bf16.mxu0 0
    %2562 = vmatpush1.bf16.msra.mxu0 %v2461
    %2563 = vmatprep.subr.bf16.mxu0 0
    %2564 = vmatpush1.bf16.msra.mxu0 %v2462
    %2565 = vmatprep.subr.bf16.mxu0 0
    %2566 = vmatpush1.bf16.msra.mxu0 %v2463
    %2567 = vmatprep.subr.bf16.mxu0 0
    %2568 = vmatpush1.bf16.msra.mxu0 %v2464
    %2569 = vmatprep.subr.bf16.mxu0 0
    %2570 = vmatpush1.bf16.msra.mxu0 %v2465
    %2571 = vmatprep.subr.bf16.mxu0 0
    %2572 = vmatpush1.bf16.msra.mxu0 %v2466
    %2573 = vmatprep.subr.bf16.mxu0 0
    %2574 = vmatpush1.bf16.msra.mxu0 %v2467
    %2575 = vmatprep.subr.bf16.mxu0 0
    %2576 = vmatpush1.bf16.msra.mxu0 %v2468
    %2577 = vmatprep.subr.bf16.mxu0 0
    %2578 = vmatpush1.bf16.msra.mxu0 %v2469
    %2579 = vmatprep.subr.bf16.mxu0 0
    %2580 = vmatpush1.bf16.msra.mxu0 %v2470
    %2581 = vmatprep.subr.bf16.mxu0 0
    %2582 = vmatpush1.bf16.msra.mxu0 %v2471
    %2583 = vmatprep.subr.bf16.mxu0 0
    %2584 = vmatpush1.bf16.msra.mxu0 %v2472
    %2585 = vmatprep.subr.bf16.mxu0 0
    %2586 = vmatpush1.bf16.msra.mxu0 %v2473
    %2587 = vmatprep.mubr.bf16.mxu0 %v2245
    %2588 = vmatmul.mubr.bf16.gmra.mrb[0].mxu0 %v2244
    %v2589 = vpop.f32.mrb[0].mxu0
    %v2590 = vadd.f32 %v2541, %v2589
    %v2591 = vpop.f32.mrb[0].mxu0
    %v2592 = vpop.f32.mrb[0].mxu0
    %v2593 = vadd.f32 %v2544, %v2592
    %v2594 = vpop.f32.mrb[0].mxu0
    %2595 = vmatprep.mubr.bf16.mxu0 %v2249
    %2596 = vmatmul.mubr.bf16.gmra.mrb[0].mxu0 %v2248
    %v2597 = vpop.f32.mrb[0].mxu0
    %v2598 = vadd.f32 %v2549, %v2597
    %v2599 = vpop.f32.mrb[0].mxu0
    %v2600 = vpop.f32.mrb[0].mxu0
    %v2601 = vadd.f32 %v2552, %v2600
    %v2602 = vpop.f32.mrb[0].mxu0
    %2603 = vdwg.mxu0
    %v2604 = vpack.c.bf16 %v2593, %v2590
    %v2605 = vpack.c.bf16 %v2601, %v2598
    %vm2606 = vcmask 516096
    %vm2607 = vmand %vm2606, %vm228
    %v2608 = vld [vmem:[#allocation3] sm:$0x1]
    %v2609 = vsel %vm2607, 0, %v2608
    %2610 = vst [vmem:[#allocation3] sm:$0x1] %v2609
    %v2611 = vld [vmem:[#allocation3 + $0xc] sm:$0x1]
    %v2612 = vsel %vm2607, 0, %v2611
    %2613 = vst [vmem:[#allocation3 + $0xc] sm:$0x1] %v2612
    %vm2614 = vmand %vm2606, %vm236
    %v2615 = vld [vmem:[#allocation3 + $0x8] sm:$0x1]
    %v2616 = vsel %vm2614, 0, %v2615
    %2617 = vst [vmem:[#allocation3 + $0x8] sm:$0x1] %v2616
    %v2618 = vld [vmem:[#allocation3 + $0x14] sm:$0x1]
    %v2619 = vsel %vm2614, 0, %v2618
    %2620 = vst [vmem:[#allocation3 + $0x14] sm:$0x1] %v2619
    %v2623 = vunpack.c.l.b16 %v2604
    %v2624 = vunpack.c.h.b16 %v2604
    %v2625 = vunpack.c.l.b16 %v2605
    %v2626 = vunpack.c.h.b16 %v2605
    %v2627 = vpack.c.b16 %v2623, %v2623
    %v2628 = vpack.c.b16 %v2624, %v2624
    %v2629 = vpack.c.b16 %v2625, %v2625
    %v2630 = vpack.c.b16 %v2626, %v2626
    %v2632 = vshrl.u32 %v2627, 16
    %v2634 = vrot.slane %v2632, 7
    %v2635 = vshll.u32 %v2627, 16
    %v2637 = vor.u32 %v2634, %v2635
    %v2638 = vrot.slane %v2634, 4
    %v2640 = vshrl.u32 %v2628, 16
    %v2642 = vrot.slane %v2640, 7
    %v2643 = vshll.u32 %v2628, 16
    %v2645 = vor.u32 %v2642, %v2643
    %v2646 = vsel %vm255, %v2638, %v2645
    %v2647 = vrot.slane %v2642, 4
    %v2649 = vshrl.u32 %v2629, 16
    %v2651 = vrot.slane %v2649, 7
    %v2652 = vshll.u32 %v2629, 16
    %v2654 = vor.u32 %v2651, %v2652
    %v2655 = vrot.slane %v2651, 4
    %v2657 = vshrl.u32 %v2630, 16
    %v2659 = vrot.slane %v2657, 7
    %v2660 = vshll.u32 %v2630, 16
    %v2662 = vor.u32 %v2659, %v2660
    %v2663 = vsel %vm255, %v2655, %v2662
    %v2664 = vrot.slane %v2659, 4
    %vm2671 = vcmask 519168
    %vm2672 = vmand %vm2671, %vm236
    %v2673 = vld [vmem:[#allocation3] sm:$0xf]
    %v2674 = vsel %vm2672, %v2637, %v2673
    %2675 = vst [vmem:[#allocation3] sm:$0xf] %v2674
    %vm2676 = vcmask 519168
    %2677 = vst.msk [vmem:[#allocation3 + $0x4] sm:$0xf] %vm2676, %v2646
    %v2678 = vld [vmem:[#allocation3 + $0x8] sm:$0x1]
    %v2679 = vsel %vm2607, %v2647, %v2678
    %2680 = vst [vmem:[#allocation3 + $0x8] sm:$0x1] %v2679
    %v2681 = vld [vmem:[#allocation3 + $0xc] sm:$0xf]
    %v2682 = vsel %vm2672, %v2654, %v2681
    %2683 = vst [vmem:[#allocation3 + $0xc] sm:$0xf] %v2682
    %2684 = vst.msk [vmem:[#allocation3 + $0x10] sm:$0xf] %vm2676, %v2663
    %v2685 = vld [vmem:[#allocation3 + $0x14] sm:$0x1]
    %v2686 = vsel %vm2607, %v2664, %v2685
    %2687 = vst [vmem:[#allocation3 + $0x14] sm:$0x1] %v2686
    %v2688 = vld [vmem:[#allocation3] sm:$0xf]
    %v2689 = vld [vmem:[#allocation3 + $0x4] sm:$0xf]
    %v2690 = vld [vmem:[#allocation3 + $0xc] sm:$0xf]
    %v2691 = vld [vmem:[#allocation3 + $0x10] sm:$0xf]
    %v2692 = vld [vmem:[#allocation9] sm:$0xff]
    %v2693 = vld [vmem:[#allocation9 + $0x8] sm:$0xff]
    %v2694 = vld [vmem:[#allocation9 + $0x10] sm:$0xff]
    %v2695 = vld [vmem:[#allocation9 + $0x18] sm:$0xff]
    %v2696 = vld [vmem:[#allocation9 + $0x20] sm:$0xff]
    %v2697 = vld [vmem:[#allocation9 + $0x28] sm:$0xff]
    %v2698 = vld [vmem:[#allocation9 + $0x30] sm:$0xff]
    %v2699 = vld [vmem:[#allocation9 + $0x38] sm:$0xff]
    %v2700 = vld [vmem:[#allocation9 + $0x40] sm:$0xff]
    %v2701 = vld [vmem:[#allocation9 + $0x48] sm:$0xff]
    %v2702 = vld [vmem:[#allocation9 + $0x50] sm:$0xff]
    %v2703 = vld [vmem:[#allocation9 + $0x58] sm:$0xff]
    %v2704 = vld [vmem:[#allocation9 + $0x60] sm:$0xff]
    %v2705 = vld [vmem:[#allocation9 + $0x68] sm:$0xff]
    %v2706 = vld [vmem:[#allocation9 + $0x70] sm:$0xff]
    %v2707 = vld [vmem:[#allocation9 + $0x78] sm:$0xff]
    %v2708 = vld [vmem:[#allocation3 + $0x8] sm:$0x1]
    %v2709 = vld [vmem:[#allocation3 + $0x14] sm:$0x1]
    %v2711 = vshrl.u32 %v2688, 16
    %v2713 = vrot.slane %v2711, 4
    %v2714 = vshll.u32 %v2688, 16
    %v2716 = vrot.slane %v2714, 5
    %v2717 = vor.u32 %v2713, %v2716
    %v2718 = vrot.slane %v2717, 4
    %v2720 = vshll.u32 %v2689, 16
    %v2722 = vrot.slane %v2720, 5
    %v2723 = vsel %vm352, %v2718, %v2722
    %v2724 = vshrl.u32 %v2689, 16
    %v2726 = vrot.slane %v2724, 4
    %v2727 = vor.u32 %v2726, %v2722
    %v2728 = vrot.slane %v2727, 4
    %v2730 = vshll.u32 %v2708, 16
    %v2732 = vrot.slane %v2730, 5
    %v2733 = vsel %vm352, %v2728, %v2732
    %v2735 = vshrl.u32 %v2690, 16
    %v2737 = vrot.slane %v2735, 4
    %v2738 = vshll.u32 %v2690, 16
    %v2740 = vrot.slane %v2738, 5
    %v2741 = vor.u32 %v2737, %v2740
    %v2742 = vrot.slane %v2741, 4
    %v2744 = vshll.u32 %v2691, 16
    %v2746 = vrot.slane %v2744, 5
    %v2747 = vsel %vm352, %v2742, %v2746
    %v2748 = vshrl.u32 %v2691, 16
    %v2750 = vrot.slane %v2748, 4
    %v2751 = vor.u32 %v2750, %v2746
    %v2752 = vrot.slane %v2751, 4
    %v2754 = vshll.u32 %v2709, 16
    %v2756 = vrot.slane %v2754, 5
    %v2757 = vsel %vm352, %v2752, %v2756
    %s2758 = scalar_lea.vmem [#allocation9], 128
    %v2759 = vld [vmem:[%s2758] sm:$0xff]
    %v2760 = vld [vmem:[%s2758 + $0x8] sm:$0xff]
    %v2761 = vld [vmem:[%s2758 + $0x10] sm:$0xff]
    %v2762 = vld [vmem:[%s2758 + $0x18] sm:$0xff]
    %v2763 = vld [vmem:[%s2758 + $0x20] sm:$0xff]
    %v2764 = vld [vmem:[%s2758 + $0x28] sm:$0xff]
    %v2765 = vld [vmem:[%s2758 + $0x30] sm:$0xff]
    %v2766 = vld [vmem:[%s2758 + $0x38] sm:$0xff]
    %v2767 = vld [vmem:[%s2758 + $0x40] sm:$0xff]
    %v2768 = vld [vmem:[%s2758 + $0x48] sm:$0xff]
    %v2769 = vld [vmem:[%s2758 + $0x50] sm:$0xff]
    %v2770 = vld [vmem:[%s2758 + $0x58] sm:$0xff]
    %v2771 = vld [vmem:[%s2758 + $0x60] sm:$0xff]
    %v2772 = vld [vmem:[%s2758 + $0x68] sm:$0xff]
    %v2773 = vld [vmem:[%s2758 + $0x70] sm:$0xff]
    %v2774 = vld [vmem:[%s2758 + $0x78] sm:$0xff]
    %v2775 = vunpack.c.l.b16 %v2723
    %v2776 = vunpack.c.l.b16 %v2733
    %v2777 = vunpack.c.l.b16 %v2747
    %v2778 = vunpack.c.l.b16 %v2757
    %v2779 = vpack.c.b16 %v2776, %v2775
    %v2780 = vpack.c.b16 %v2778, %v2777
    %v2797 = vunpack.c.l.b16 %v2759
    %v2798 = vunpack.c.h.b16 %v2759
    %v2799 = vunpack.c.l.b16 %v2760
    %v2800 = vunpack.c.h.b16 %v2760
    %v2801 = vunpack.c.l.b16 %v2761
    %v2802 = vunpack.c.h.b16 %v2761
    %v2803 = vunpack.c.l.b16 %v2762
    %v2804 = vunpack.c.h.b16 %v2762
    %v2805 = vunpack.c.l.b16 %v2763
    %v2806 = vunpack.c.h.b16 %v2763
    %v2807 = vunpack.c.l.b16 %v2764
    %v2808 = vunpack.c.h.b16 %v2764
    %v2809 = vunpack.c.l.b16 %v2765
    %v2810 = vunpack.c.h.b16 %v2765
    %v2811 = vunpack.c.l.b16 %v2766
    %v2812 = vunpack.c.h.b16 %v2766
    %v2813 = vunpack.c.l.b16 %v2767
    %v2814 = vunpack.c.h.b16 %v2767
    %v2815 = vunpack.c.l.b16 %v2768
    %v2816 = vunpack.c.h.b16 %v2768
    %v2817 = vunpack.c.l.b16 %v2769
    %v2818 = vunpack.c.h.b16 %v2769
    %v2819 = vunpack.c.l.b16 %v2770
    %v2820 = vunpack.c.h.b16 %v2770
    %v2821 = vunpack.c.l.b16 %v2771
    %v2822 = vunpack.c.h.b16 %v2771
    %v2823 = vunpack.c.l.b16 %v2772
    %v2824 = vunpack.c.h.b16 %v2772
    %v2825 = vunpack.c.l.b16 %v2773
    %v2826 = vunpack.c.h.b16 %v2773
    %v2827 = vunpack.c.l.b16 %v2774
    %v2828 = vunpack.c.h.b16 %v2774
    %v2829 = vpack.c.b16 %v2801, %v2797
    %v2830 = vpack.c.b16 %v2802, %v2798
    %v2831 = vpack.c.b16 %v2803, %v2799
    %v2832 = vpack.c.b16 %v2804, %v2800
    %v2833 = vpack.c.b16 %v2809, %v2805
    %v2834 = vpack.c.b16 %v2810, %v2806
    %v2835 = vpack.c.b16 %v2811, %v2807
    %v2836 = vpack.c.b16 %v2812, %v2808
    %v2837 = vpack.c.b16 %v2817, %v2813
    %v2838 = vpack.c.b16 %v2818, %v2814
    %v2839 = vpack.c.b16 %v2819, %v2815
    %v2840 = vpack.c.b16 %v2820, %v2816
    %v2841 = vpack.c.b16 %v2825, %v2821
    %v2842 = vpack.c.b16 %v2826, %v2822
    %v2843 = vpack.c.b16 %v2827, %v2823
    %v2844 = vpack.c.b16 %v2828, %v2824
    %vm2861 = vcmask 523264
    %v2863 = vsel %vm2861, %v2779, 0
    %v2866 = vsel %vm2861, %v2780, 0
    %2868 = vmatprep.subr.bf16.mxu0 %v2830
    %2869 = vmatpush1.bf16.msra.mxu0 %v2829
    %2870 = vmatprep.subr.bf16.mxu0 %v2834
    %2871 = vmatpush1.bf16.msra.mxu0 %v2833
    %2872 = vmatprep.subr.bf16.mxu0 %v2838
    %2873 = vmatpush1.bf16.msra.mxu0 %v2837
    %2874 = vmatprep.subr.bf16.mxu0 %v2842
    %2875 = vmatpush1.bf16.msra.mxu0 %v2841
    %2876 = vmatprep.subr.bf16.mxu0 0
    %2877 = vmatpush1.bf16.msra.mxu0 0
    %2878 = vmatprep.subr.bf16.mxu0 0
    %2879 = vmatpush1.bf16.msra.mxu0 0
    %2880 = vmatprep.subr.bf16.mxu0 0
    %2881 = vmatpush1.bf16.msra.mxu0 0
    %2882 = vmatprep.subr.bf16.mxu0 0
    %2883 = vmatpush1.bf16.msra.mxu0 0
    %2884 = vmatprep.subr.bf16.mxu0 0
    %2885 = vmatpush1.bf16.msra.mxu0 0
    %2886 = vmatprep.subr.bf16.mxu0 0
    %2887 = vmatpush1.bf16.msra.mxu0 0
    %2888 = vmatprep.subr.bf16.mxu0 0
    %2889 = vmatpush1.bf16.msra.mxu0 0
    %2890 = vmatprep.subr.bf16.mxu0 0
    %2891 = vmatpush1.bf16.msra.mxu0 0
    %2892 = vmatprep.subr.bf16.mxu0 0
    %2893 = vmatpush1.bf16.msra.mxu0 0
    %2894 = vmatprep.subr.bf16.mxu0 0
    %2895 = vmatpush1.bf16.msra.mxu0 0
    %2896 = vmatprep.subr.bf16.mxu0 0
    %2897 = vmatpush1.bf16.msra.mxu0 0
    %2898 = vmatprep.subr.bf16.mxu0 0
    %2899 = vmatpush1.bf16.msra.mxu0 0
    %2900 = vmatprep.mubr.bf16.mxu0 0
    %2901 = vmatmul.mubr.bf16.gmra.mrb[0].mxu0 %v2863
    %v2902 = vpop.f32.mrb[0].mxu0
    %v2903 = vadd.f32 0.0, %v2902
    %v2904 = vpop.f32.mrb[0].mxu0
    %v2905 = vadd.f32 0.0, %v2904
    %v2906 = vpop.f32.mrb[0].mxu0
    %v2907 = vadd.f32 0.0, %v2906
    %v2908 = vpop.f32.mrb[0].mxu0
    %v2909 = vadd.f32 0.0, %v2908
    %2910 = vmatprep.mubr.bf16.mxu0 0
    %2911 = vmatmul.mubr.bf16.gmra.mrb[0].mxu0 %v2866
    %v2912 = vpop.f32.mrb[0].mxu0
    %v2913 = vadd.f32 0.0, %v2912
    %v2914 = vpop.f32.mrb[0].mxu0
    %v2915 = vadd.f32 0.0, %v2914
    %v2916 = vpop.f32.mrb[0].mxu0
    %v2917 = vadd.f32 0.0, %v2916
    %v2918 = vpop.f32.mrb[0].mxu0
    %v2919 = vadd.f32 0.0, %v2918
    %2920 = vdwg.mxu0
    %2921 = vmatprep.subr.bf16.mxu0 %v2832
    %2922 = vmatpush1.bf16.msra.mxu0 %v2831
    %2923 = vmatprep.subr.bf16.mxu0 %v2836
    %2924 = vmatpush1.bf16.msra.mxu0 %v2835
    %2925 = vmatprep.subr.bf16.mxu0 %v2840
    %2926 = vmatpush1.bf16.msra.mxu0 %v2839
    %2927 = vmatprep.subr.bf16.mxu0 %v2844
    %2928 = vmatpush1.bf16.msra.mxu0 %v2843
    %2929 = vmatprep.subr.bf16.mxu0 0
    %2930 = vmatpush1.bf16.msra.mxu0 0
    %2931 = vmatprep.subr.bf16.mxu0 0
    %2932 = vmatpush1.bf16.msra.mxu0 0
    %2933 = vmatprep.subr.bf16.mxu0 0
    %2934 = vmatpush1.bf16.msra.mxu0 0
    %2935 = vmatprep.subr.bf16.mxu0 0
    %2936 = vmatpush1.bf16.msra.mxu0 0
    %2937 = vmatprep.subr.bf16.mxu0 0
    %2938 = vmatpush1.bf16.msra.mxu0 0
    %2939 = vmatprep.subr.bf16.mxu0 0
    %2940 = vmatpush1.bf16.msra.mxu0 0
    %2941 = vmatprep.subr.bf16.mxu0 0
    %2942 = vmatpush1.bf16.msra.mxu0 0
    %2943 = vmatprep.subr.bf16.mxu0 0
    %2944 = vmatpush1.bf16.msra.mxu0 0
    %2945 = vmatprep.subr.bf16.mxu0 0
    %2946 = vmatpush1.bf16.msra.mxu0 0
    %2947 = vmatprep.subr.bf16.mxu0 0
    %2948 = vmatpush1.bf16.msra.mxu0 0
    %2949 = vmatprep.subr.bf16.mxu0 0
    %2950 = vmatpush1.bf16.msra.mxu0 0
    %2951 = vmatprep.subr.bf16.mxu0 0
    %2952 = vmatpush1.bf16.msra.mxu0 0
    %2953 = vmatprep.mubr.bf16.mxu0 0
    %2954 = vmatmul.mubr.bf16.gmra.mrb[0].mxu0 %v2863
    %v2955 = vpop.f32.mrb[0].mxu0
    %v2956 = vadd.f32 0.0, %v2955
    %v2957 = vpop.f32.mrb[0].mxu0
    %v2958 = vadd.f32 0.0, %v2957
    %v2959 = vpop.f32.mrb[0].mxu0
    %v2960 = vadd.f32 0.0, %v2959
    %v2961 = vpop.f32.mrb[0].mxu0
    %v2962 = vadd.f32 0.0, %v2961
    %2963 = vmatprep.mubr.bf16.mxu0 0
    %2964 = vmatmul.mubr.bf16.gmra.mrb[0].mxu0 %v2866
    %v2965 = vpop.f32.mrb[0].mxu0
    %v2966 = vadd.f32 0.0, %v2965
    %v2967 = vpop.f32.mrb[0].mxu0
    %v2968 = vadd.f32 0.0, %v2967
    %v2969 = vpop.f32.mrb[0].mxu0
    %v2970 = vadd.f32 0.0, %v2969
    %v2971 = vpop.f32.mrb[0].mxu0
    %v2972 = vadd.f32 0.0, %v2971
    %2973 = vdwg.mxu0
    %v2978 = vunpack.c.l.b16 %v2688
    %v2979 = vunpack.c.l.b16 %v2689
    %v2980 = vunpack.c.l.b16 %v2690
    %v2981 = vunpack.c.l.b16 %v2691
    %v2982 = vpack.c.b16 %v2979, %v2978
    %v2983 = vpack.c.b16 %v2981, %v2980
    %v3000 = vunpack.c.l.b16 %v2692
    %v3001 = vunpack.c.h.b16 %v2692
    %v3002 = vunpack.c.l.b16 %v2693
    %v3003 = vunpack.c.h.b16 %v2693
    %v3004 = vunpack.c.l.b16 %v2694
    %v3005 = vunpack.c.h.b16 %v2694
    %v3006 = vunpack.c.l.b16 %v2695
    %v3007 = vunpack.c.h.b16 %v2695
    %v3008 = vunpack.c.l.b16 %v2696
    %v3009 = vunpack.c.h.b16 %v2696
    %v3010 = vunpack.c.l.b16 %v2697
    %v3011 = vunpack.c.h.b16 %v2697
    %v3012 = vunpack.c.l.b16 %v2698
    %v3013 = vunpack.c.h.b16 %v2698
    %v3014 = vunpack.c.l.b16 %v2699
    %v3015 = vunpack.c.h.b16 %v2699
    %v3016 = vunpack.c.l.b16 %v2700
    %v3017 = vunpack.c.h.b16 %v2700
    %v3018 = vunpack.c.l.b16 %v2701
    %v3019 = vunpack.c.h.b16 %v2701
    %v3020 = vunpack.c.l.b16 %v2702
    %v3021 = vunpack.c.h.b16 %v2702
    %v3022 = vunpack.c.l.b16 %v2703
    %v3023 = vunpack.c.h.b16 %v2703
    %v3024 = vunpack.c.l.b16 %v2704
    %v3025 = vunpack.c.h.b16 %v2704
    %v3026 = vunpack.c.l.b16 %v2705
    %v3027 = vunpack.c.h.b16 %v2705
    %v3028 = vunpack.c.l.b16 %v2706
    %v3029 = vunpack.c.h.b16 %v2706
    %v3030 = vunpack.c.l.b16 %v2707
    %v3031 = vunpack.c.h.b16 %v2707
    %v3032 = vpack.c.b16 %v3004, %v3000
    %v3033 = vpack.c.b16 %v3005, %v3001
    %v3034 = vpack.c.b16 %v3006, %v3002
    %v3035 = vpack.c.b16 %v3007, %v3003
    %v3036 = vpack.c.b16 %v3012, %v3008
    %v3037 = vpack.c.b16 %v3013, %v3009
    %v3038 = vpack.c.b16 %v3014, %v3010
    %v3039 = vpack.c.b16 %v3015, %v3011
    %v3040 = vpack.c.b16 %v3020, %v3016
    %v3041 = vpack.c.b16 %v3021, %v3017
    %v3042 = vpack.c.b16 %v3022, %v3018
    %v3043 = vpack.c.b16 %v3023, %v3019
    %v3044 = vpack.c.b16 %v3028, %v3024
    %v3045 = vpack.c.b16 %v3029, %v3025
    %v3046 = vpack.c.b16 %v3030, %v3026
    %v3047 = vpack.c.b16 %v3031, %v3027
    %v3065 = vsel %vm2861, %v2982, 0
    %v3068 = vsel %vm2861, %v2983, 0
    %3070 = vmatprep.subr.bf16.mxu0 %v3033
    %3071 = vmatpush1.bf16.msra.mxu0 %v3032
    %3072 = vmatprep.subr.bf16.mxu0 %v3037
    %3073 = vmatpush1.bf16.msra.mxu0 %v3036
    %3074 = vmatprep.subr.bf16.mxu0 %v3041
    %3075 = vmatpush1.bf16.msra.mxu0 %v3040
    %3076 = vmatprep.subr.bf16.mxu0 %v3045
    %3077 = vmatpush1.bf16.msra.mxu0 %v3044
    %3078 = vmatprep.subr.bf16.mxu0 0
    %3079 = vmatpush1.bf16.msra.mxu0 0
    %3080 = vmatprep.subr.bf16.mxu0 0
    %3081 = vmatpush1.bf16.msra.mxu0 0
    %3082 = vmatprep.subr.bf16.mxu0 0
    %3083 = vmatpush1.bf16.msra.mxu0 0
    %3084 = vmatprep.subr.bf16.mxu0 0
    %3085 = vmatpush1.bf16.msra.mxu0 0
    %3086 = vmatprep.subr.bf16.mxu0 0
    %3087 = vmatpush1.bf16.msra.mxu0 0
    %3088 = vmatprep.subr.bf16.mxu0 0
    %3089 = vmatpush1.bf16.msra.mxu0 0
    %3090 = vmatprep.subr.bf16.mxu0 0
    %3091 = vmatpush1.bf16.msra.mxu0 0
    %3092 = vmatprep.subr.bf16.mxu0 0
    %3093 = vmatpush1.bf16.msra.mxu0 0
    %3094 = vmatprep.subr.bf16.mxu0 0
    %3095 = vmatpush1.bf16.msra.mxu0 0
    %3096 = vmatprep.subr.bf16.mxu0 0
    %3097 = vmatpush1.bf16.msra.mxu0 0
    %3098 = vmatprep.subr.bf16.mxu0 0
    %3099 = vmatpush1.bf16.msra.mxu0 0
    %3100 = vmatprep.subr.bf16.mxu0 0
    %3101 = vmatpush1.bf16.msra.mxu0 0
    %3102 = vmatprep.mubr.bf16.mxu0 0
    %3103 = vmatmul.mubr.bf16.gmra.mrb[0].mxu0 %v3065
    %v3104 = vpop.f32.mrb[0].mxu0
    %v3105 = vadd.f32 %v2903, %v3104
    %v3106 = vpop.f32.mrb[0].mxu0
    %v3107 = vadd.f32 %v2905, %v3106
    %v3108 = vpop.f32.mrb[0].mxu0
    %v3109 = vadd.f32 %v2907, %v3108
    %v3110 = vpop.f32.mrb[0].mxu0
    %v3111 = vadd.f32 %v2909, %v3110
    %3112 = vmatprep.mubr.bf16.mxu0 0
    %3113 = vmatmul.mubr.bf16.gmra.mrb[0].mxu0 %v3068
    %v3114 = vpop.f32.mrb[0].mxu0
    %v3115 = vadd.f32 %v2913, %v3114
    %v3116 = vpop.f32.mrb[0].mxu0
    %v3117 = vadd.f32 %v2915, %v3116
    %v3118 = vpop.f32.mrb[0].mxu0
    %v3119 = vadd.f32 %v2917, %v3118
    %v3120 = vpop.f32.mrb[0].mxu0
    %v3121 = vadd.f32 %v2919, %v3120
    %3122 = vdwg.mxu0
    %3123 = vmatprep.subr.bf16.mxu0 %v3035
    %3124 = vmatpush1.bf16.msra.mxu0 %v3034
    %3125 = vmatprep.subr.bf16.mxu0 %v3039
    %3126 = vmatpush1.bf16.msra.mxu0 %v3038
    %3127 = vmatprep.subr.bf16.mxu0 %v3043
    %3128 = vmatpush1.bf16.msra.mxu0 %v3042
    %3129 = vmatprep.subr.bf16.mxu0 %v3047
    %3130 = vmatpush1.bf16.msra.mxu0 %v3046
    %3131 = vmatprep.subr.bf16.mxu0 0
    %3132 = vmatpush1.bf16.msra.mxu0 0
    %3133 = vmatprep.subr.bf16.mxu0 0
    %3134 = vmatpush1.bf16.msra.mxu0 0
    %3135 = vmatprep.subr.bf16.mxu0 0
    %3136 = vmatpush1.bf16.msra.mxu0 0
    %3137 = vmatprep.subr.bf16.mxu0 0
    %3138 = vmatpush1.bf16.msra.mxu0 0
    %3139 = vmatprep.subr.bf16.mxu0 0
    %3140 = vmatpush1.bf16.msra.mxu0 0
    %3141 = vmatprep.subr.bf16.mxu0 0
    %3142 = vmatpush1.bf16.msra.mxu0 0
    %3143 = vmatprep.subr.bf16.mxu0 0
    %3144 = vmatpush1.bf16.msra.mxu0 0
    %3145 = vmatprep.subr.bf16.mxu0 0
    %3146 = vmatpush1.bf16.msra.mxu0 0
    %3147 = vmatprep.subr.bf16.mxu0 0
    %3148 = vmatpush1.bf16.msra.mxu0 0
    %3149 = vmatprep.subr.bf16.mxu0 0
    %3150 = vmatpush1.bf16.msra.mxu0 0
    %3151 = vmatprep.subr.bf16.mxu0 0
    %3152 = vmatpush1.bf16.msra.mxu0 0
    %3153 = vmatprep.subr.bf16.mxu0 0
    %3154 = vmatpush1.bf16.msra.mxu0 0
    %3155 = vmatprep.mubr.bf16.mxu0 0
    %3156 = vmatmul.mubr.bf16.gmra.mrb[0].mxu0 %v3065
    %v3157 = vpop.f32.mrb[0].mxu0
    %v3158 = vadd.f32 %v2956, %v3157
    %v3159 = vpop.f32.mrb[0].mxu0
    %v3160 = vadd.f32 %v2958, %v3159
    %v3161 = vpop.f32.mrb[0].mxu0
    %v3162 = vadd.f32 %v2960, %v3161
    %v3163 = vpop.f32.mrb[0].mxu0
    %v3164 = vadd.f32 %v2962, %v3163
    %3165 = vmatprep.mubr.bf16.mxu0 0
    %3166 = vmatmul.mubr.bf16.gmra.mrb[0].mxu0 %v3068
    %v3167 = vpop.f32.mrb[0].mxu0
    %v3168 = vadd.f32 %v2966, %v3167
    %v3169 = vpop.f32.mrb[0].mxu0
    %v3170 = vadd.f32 %v2968, %v3169
    %v3171 = vpop.f32.mrb[0].mxu0
    %v3172 = vadd.f32 %v2970, %v3171
    %v3173 = vpop.f32.mrb[0].mxu0
    %v3174 = vadd.f32 %v2972, %v3173
    %3175 = vdwg.mxu0
    %v3176 = vld [vmem:[#allocation3] sm:$0xe]
    %v3177 = vld [vmem:[#allocation3 + $0xc] sm:$0xe]
    %v3182 = vrot.slane %v3176, 5
    %v3183 = vrot.slane %v3182, 4
    %v3184 = vrot.slane %v2689, 5
    %v3185 = vsel %vm994, %v3183, %v3184
    %v3186 = vrot.slane %v3184, 4
    %v3187 = vrot.slane %v2708, 5
    %v3188 = vsel %vm994, %v3186, %v3187
    %v3189 = vrot.slane %v3177, 5
    %v3190 = vrot.slane %v3189, 4
    %v3191 = vrot.slane %v2691, 5
    %v3192 = vsel %vm994, %v3190, %v3191
    %v3193 = vrot.slane %v3191, 4
    %v3194 = vrot.slane %v2709, 5
    %v3195 = vsel %vm994, %v3193, %v3194
    %s3196 = scalar_lea.vmem [#allocation9], 256
    %v3197 = vld [vmem:[%s3196] sm:$0xff]
    %v3198 = vld [vmem:[%s3196 + $0x8] sm:$0xff]
    %v3199 = vld [vmem:[%s3196 + $0x10] sm:$0xff]
    %v3200 = vld [vmem:[%s3196 + $0x18] sm:$0xff]
    %v3201 = vld [vmem:[%s3196 + $0x20] sm:$0xff]
    %v3202 = vld [vmem:[%s3196 + $0x28] sm:$0xff]
    %v3203 = vld [vmem:[%s3196 + $0x30] sm:$0xff]
    %v3204 = vld [vmem:[%s3196 + $0x38] sm:$0xff]
    %v3205 = vld [vmem:[%s3196 + $0x40] sm:$0xff]
    %v3206 = vld [vmem:[%s3196 + $0x48] sm:$0xff]
    %v3207 = vld [vmem:[%s3196 + $0x50] sm:$0xff]
    %v3208 = vld [vmem:[%s3196 + $0x58] sm:$0xff]
    %v3209 = vld [vmem:[%s3196 + $0x60] sm:$0xff]
    %v3210 = vld [vmem:[%s3196 + $0x68] sm:$0xff]
    %v3211 = vld [vmem:[%s3196 + $0x70] sm:$0xff]
    %v3212 = vld [vmem:[%s3196 + $0x78] sm:$0xff]
    %v3213 = vunpack.c.l.b16 %v3185
    %v3214 = vunpack.c.l.b16 %v3188
    %v3215 = vunpack.c.l.b16 %v3192
    %v3216 = vunpack.c.l.b16 %v3195
    %v3217 = vpack.c.b16 %v3214, %v3213
    %v3218 = vpack.c.b16 %v3216, %v3215
    %v3235 = vunpack.c.l.b16 %v3197
    %v3236 = vunpack.c.h.b16 %v3197
    %v3237 = vunpack.c.l.b16 %v3198
    %v3238 = vunpack.c.h.b16 %v3198
    %v3239 = vunpack.c.l.b16 %v3199
    %v3240 = vunpack.c.h.b16 %v3199
    %v3241 = vunpack.c.l.b16 %v3200
    %v3242 = vunpack.c.h.b16 %v3200
    %v3243 = vunpack.c.l.b16 %v3201
    %v3244 = vunpack.c.h.b16 %v3201
    %v3245 = vunpack.c.l.b16 %v3202
    %v3246 = vunpack.c.h.b16 %v3202
    %v3247 = vunpack.c.l.b16 %v3203
    %v3248 = vunpack.c.h.b16 %v3203
    %v3249 = vunpack.c.l.b16 %v3204
    %v3250 = vunpack.c.h.b16 %v3204
    %v3251 = vunpack.c.l.b16 %v3205
    %v3252 = vunpack.c.h.b16 %v3205
    %v3253 = vunpack.c.l.b16 %v3206
    %v3254 = vunpack.c.h.b16 %v3206
    %v3255 = vunpack.c.l.b16 %v3207
    %v3256 = vunpack.c.h.b16 %v3207
    %v3257 = vunpack.c.l.b16 %v3208
    %v3258 = vunpack.c.h.b16 %v3208
    %v3259 = vunpack.c.l.b16 %v3209
    %v3260 = vunpack.c.h.b16 %v3209
    %v3261 = vunpack.c.l.b16 %v3210
    %v3262 = vunpack.c.h.b16 %v3210
    %v3263 = vunpack.c.l.b16 %v3211
    %v3264 = vunpack.c.h.b16 %v3211
    %v3265 = vunpack.c.l.b16 %v3212
    %v3266 = vunpack.c.h.b16 %v3212
    %v3267 = vpack.c.b16 %v3239, %v3235
    %v3268 = vpack.c.b16 %v3240, %v3236
    %v3269 = vpack.c.b16 %v3241, %v3237
    %v3270 = vpack.c.b16 %v3242, %v3238
    %v3271 = vpack.c.b16 %v3247, %v3243
    %v3272 = vpack.c.b16 %v3248, %v3244
    %v3273 = vpack.c.b16 %v3249, %v3245
    %v3274 = vpack.c.b16 %v3250, %v3246
    %v3275 = vpack.c.b16 %v3255, %v3251
    %v3276 = vpack.c.b16 %v3256, %v3252
    %v3277 = vpack.c.b16 %v3257, %v3253
    %v3278 = vpack.c.b16 %v3258, %v3254
    %v3279 = vpack.c.b16 %v3263, %v3259
    %v3280 = vpack.c.b16 %v3264, %v3260
    %v3281 = vpack.c.b16 %v3265, %v3261
    %v3282 = vpack.c.b16 %v3266, %v3262
    %v3300 = vsel %vm2861, %v3217, 0
    %v3303 = vsel %vm2861, %v3218, 0
    %3305 = vmatprep.subr.bf16.mxu0 %v3268
    %3306 = vmatpush1.bf16.msra.mxu0 %v3267
    %3307 = vmatprep.subr.bf16.mxu0 %v3272
    %3308 = vmatpush1.bf16.msra.mxu0 %v3271
    %3309 = vmatprep.subr.bf16.mxu0 %v3276
    %3310 = vmatpush1.bf16.msra.mxu0 %v3275
    %3311 = vmatprep.subr.bf16.mxu0 %v3280
    %3312 = vmatpush1.bf16.msra.mxu0 %v3279
    %3313 = vmatprep.subr.bf16.mxu0 0
    %3314 = vmatpush1.bf16.msra.mxu0 0
    %3315 = vmatprep.subr.bf16.mxu0 0
    %3316 = vmatpush1.bf16.msra.mxu0 0
    %3317 = vmatprep.subr.bf16.mxu0 0
    %3318 = vmatpush1.bf16.msra.mxu0 0
    %3319 = vmatprep.subr.bf16.mxu0 0
    %3320 = vmatpush1.bf16.msra.mxu0 0
    %3321 = vmatprep.subr.bf16.mxu0 0
    %3322 = vmatpush1.bf16.msra.mxu0 0
    %3323 = vmatprep.subr.bf16.mxu0 0
    %3324 = vmatpush1.bf16.msra.mxu0 0
    %3325 = vmatprep.subr.bf16.mxu0 0
    %3326 = vmatpush1.bf16.msra.mxu0 0
    %3327 = vmatprep.subr.bf16.mxu0 0
    %3328 = vmatpush1.bf16.msra.mxu0 0
    %3329 = vmatprep.subr.bf16.mxu0 0
    %3330 = vmatpush1.bf16.msra.mxu0 0
    %3331 = vmatprep.subr.bf16.mxu0 0
    %3332 = vmatpush1.bf16.msra.mxu0 0
    %3333 = vmatprep.subr.bf16.mxu0 0
    %3334 = vmatpush1.bf16.msra.mxu0 0
    %3335 = vmatprep.subr.bf16.mxu0 0
    %3336 = vmatpush1.bf16.msra.mxu0 0
    %3337 = vmatprep.mubr.bf16.mxu0 0
    %3338 = vmatmul.mubr.bf16.gmra.mrb[0].mxu0 %v3300
    %v3339 = vpop.f32.mrb[0].mxu0
    %v3340 = vadd.f32 0.0, %v3339
    %v3341 = vpop.f32.mrb[0].mxu0
    %v3342 = vadd.f32 0.0, %v3341
    %v3343 = vpop.f32.mrb[0].mxu0
    %v3344 = vadd.f32 0.0, %v3343
    %v3345 = vpop.f32.mrb[0].mxu0
    %v3346 = vadd.f32 0.0, %v3345
    %3347 = vmatprep.mubr.bf16.mxu0 0
    %3348 = vmatmul.mubr.bf16.gmra.mrb[0].mxu0 %v3303
    %v3349 = vpop.f32.mrb[0].mxu0
    %v3350 = vadd.f32 0.0, %v3349
    %v3351 = vpop.f32.mrb[0].mxu0
    %v3352 = vadd.f32 0.0, %v3351
    %v3353 = vpop.f32.mrb[0].mxu0
    %v3354 = vadd.f32 0.0, %v3353
    %v3355 = vpop.f32.mrb[0].mxu0
    %v3356 = vadd.f32 0.0, %v3355
    %3357 = vdwg.mxu0
    %3358 = vmatprep.subr.bf16.mxu0 %v3270
    %3359 = vmatpush1.bf16.msra.mxu0 %v3269
    %3360 = vmatprep.subr.bf16.mxu0 %v3274
    %3361 = vmatpush1.bf16.msra.mxu0 %v3273
    %3362 = vmatprep.subr.bf16.mxu0 %v3278
    %3363 = vmatpush1.bf16.msra.mxu0 %v3277
    %3364 = vmatprep.subr.bf16.mxu0 %v3282
    %3365 = vmatpush1.bf16.msra.mxu0 %v3281
    %3366 = vmatprep.subr.bf16.mxu0 0
    %3367 = vmatpush1.bf16.msra.mxu0 0
    %3368 = vmatprep.subr.bf16.mxu0 0
    %3369 = vmatpush1.bf16.msra.mxu0 0
    %3370 = vmatprep.subr.bf16.mxu0 0
    %3371 = vmatpush1.bf16.msra.mxu0 0
    %3372 = vmatprep.subr.bf16.mxu0 0
    %3373 = vmatpush1.bf16.msra.mxu0 0
    %3374 = vmatprep.subr.bf16.mxu0 0
    %3375 = vmatpush1.bf16.msra.mxu0 0
    %3376 = vmatprep.subr.bf16.mxu0 0
    %3377 = vmatpush1.bf16.msra.mxu0 0
    %3378 = vmatprep.subr.bf16.mxu0 0
    %3379 = vmatpush1.bf16.msra.mxu0 0
    %3380 = vmatprep.subr.bf16.mxu0 0
    %3381 = vmatpush1.bf16.msra.mxu0 0
    %3382 = vmatprep.subr.bf16.mxu0 0
    %3383 = vmatpush1.bf16.msra.mxu0 0
    %3384 = vmatprep.subr.bf16.mxu0 0
    %3385 = vmatpush1.bf16.msra.mxu0 0
    %3386 = vmatprep.subr.bf16.mxu0 0
    %3387 = vmatpush1.bf16.msra.mxu0 0
    %3388 = vmatprep.subr.bf16.mxu0 0
    %3389 = vmatpush1.bf16.msra.mxu0 0
    %3390 = vmatprep.mubr.bf16.mxu0 0
    %3391 = vmatmul.mubr.bf16.gmra.mrb[0].mxu0 %v3300
    %v3392 = vpop.f32.mrb[0].mxu0
    %v3393 = vadd.f32 0.0, %v3392
    %v3394 = vpop.f32.mrb[0].mxu0
    %v3395 = vadd.f32 0.0, %v3394
    %v3396 = vpop.f32.mrb[0].mxu0
    %v3397 = vadd.f32 0.0, %v3396
    %v3398 = vpop.f32.mrb[0].mxu0
    %v3399 = vadd.f32 0.0, %v3398
    %3400 = vmatprep.mubr.bf16.mxu0 0
    %3401 = vmatmul.mubr.bf16.gmra.mrb[0].mxu0 %v3303
    %v3402 = vpop.f32.mrb[0].mxu0
    %v3403 = vadd.f32 0.0, %v3402
    %v3404 = vpop.f32.mrb[0].mxu0
    %v3405 = vadd.f32 0.0, %v3404
    %v3406 = vpop.f32.mrb[0].mxu0
    %v3407 = vadd.f32 0.0, %v3406
    %v3408 = vpop.f32.mrb[0].mxu0
    %v3409 = vadd.f32 0.0, %v3408
    %3410 = vdwg.mxu0
    %v3411 = vadd.f32 %v3105, %v3340
    %v3412 = vadd.f32 %v3107, %v3342
    %v3413 = vadd.f32 %v3158, %v3393
    %v3414 = vadd.f32 %v3160, %v3395
    %v3415 = vadd.f32 %v3109, %v3344
    %v3416 = vadd.f32 %v3111, %v3346
    %v3417 = vadd.f32 %v3162, %v3397
    %v3418 = vadd.f32 %v3164, %v3399
    %v3419 = vadd.f32 %v3115, %v3350
    %v3420 = vadd.f32 %v3117, %v3352
    %v3421 = vadd.f32 %v3168, %v3403
    %v3422 = vadd.f32 %v3170, %v3405
    %v3423 = vadd.f32 %v3119, %v3354
    %v3424 = vadd.f32 %v3121, %v3356
    %v3425 = vadd.f32 %v3172, %v3407
    %v3426 = vadd.f32 %v3174, %v3409
    %v3427 = vsub.f32 0.0, %v3411
    %v3428 = vsub.f32 0.0, %v3412
    %v3429 = vsub.f32 0.0, %v3413
    %v3430 = vsub.f32 0.0, %v3414
    %v3431 = vsub.f32 0.0, %v3415
    %v3432 = vsub.f32 0.0, %v3416
    %v3433 = vsub.f32 0.0, %v3417
    %v3434 = vsub.f32 0.0, %v3418
    %v3435 = vsub.f32 0.0, %v3419
    %v3436 = vsub.f32 0.0, %v3420
    %v3437 = vsub.f32 0.0, %v3421
    %v3438 = vsub.f32 0.0, %v3422
    %v3439 = vsub.f32 0.0, %v3423
    %v3440 = vsub.f32 0.0, %v3424
    %v3441 = vsub.f32 0.0, %v3425
    %v3442 = vsub.f32 0.0, %v3426
    %v3443 = vmul.f32 %v3427, 1.442695
    %v3444 = vpow.pop %v3443
    %v3445 = vmul.f32 %v3428, 1.442695
    %v3446 = vpow.pop %v3445
    %v3447 = vmul.f32 %v3429, 1.442695
    %v3448 = vpow.pop %v3447
    %v3449 = vmul.f32 %v3430, 1.442695
    %v3450 = vpow.pop %v3449
    %v3451 = vmul.f32 %v3431, 1.442695
    %v3452 = vpow.pop %v3451
    %v3453 = vmul.f32 %v3432, 1.442695
    %v3454 = vpow.pop %v3453
    %v3455 = vmul.f32 %v3433, 1.442695
    %v3456 = vpow.pop %v3455
    %v3457 = vmul.f32 %v3434, 1.442695
    %v3458 = vpow.pop %v3457
    %v3459 = vmul.f32 %v3435, 1.442695
    %v3460 = vpow.pop %v3459
    %v3461 = vmul.f32 %v3436, 1.442695
    %v3462 = vpow.pop %v3461
    %v3463 = vmul.f32 %v3437, 1.442695
    %v3464 = vpow.pop %v3463
    %v3465 = vmul.f32 %v3438, 1.442695
    %v3466 = vpow.pop %v3465
    %v3467 = vmul.f32 %v3439, 1.442695
    %v3468 = vpow.pop %v3467
    %v3469 = vmul.f32 %v3440, 1.442695
    %v3470 = vpow.pop %v3469
    %v3471 = vmul.f32 %v3441, 1.442695
    %v3472 = vpow.pop %v3471
    %v3473 = vmul.f32 %v3442, 1.442695
    %v3474 = vpow.pop %v3473
    %v3475 = vadd.f32 %v3444, 1.0
    %v3476 = vadd.f32 %v3446, 1.0
    %v3477 = vadd.f32 %v3448, 1.0
    %v3478 = vadd.f32 %v3450, 1.0
    %v3479 = vadd.f32 %v3452, 1.0
    %v3480 = vadd.f32 %v3454, 1.0
    %v3481 = vadd.f32 %v3456, 1.0
    %v3482 = vadd.f32 %v3458, 1.0
    %v3483 = vadd.f32 %v3460, 1.0
    %v3484 = vadd.f32 %v3462, 1.0
    %v3485 = vadd.f32 %v3464, 1.0
    %v3486 = vadd.f32 %v3466, 1.0
    %v3487 = vadd.f32 %v3468, 1.0
    %v3488 = vadd.f32 %v3470, 1.0
    %v3489 = vadd.f32 %v3472, 1.0
    %v3490 = vadd.f32 %v3474, 1.0
    %v3491 = vrcp.pop %v3475
    %v3492 = vrcp.pop %v3476
    %v3493 = vrcp.pop %v3477
    %v3494 = vrcp.pop %v3478
    %v3495 = vrcp.pop %v3479
    %v3496 = vrcp.pop %v3480
    %v3497 = vrcp.pop %v3481
    %v3498 = vrcp.pop %v3482
    %v3499 = vrcp.pop %v3483
    %v3500 = vrcp.pop %v3484
    %v3501 = vrcp.pop %v3485
    %v3502 = vrcp.pop %v3486
    %v3503 = vrcp.pop %v3487
    %v3504 = vrcp.pop %v3488
    %v3505 = vrcp.pop %v3489
    %v3506 = vrcp.pop %v3490
    %v3507 = vmul.f32 %v2226, %v3491
    %v3508 = vmul.f32 %v2227, %v3492
    %v3509 = vmul.f32 %v2228, %v3493
    %v3510 = vmul.f32 %v2229, %v3494
    %v3511 = vmul.f32 %v2230, %v3495
    %v3512 = vmul.f32 %v2231, %v3496
    %v3513 = vmul.f32 %v2232, %v3497
    %v3514 = vmul.f32 %v2233, %v3498
    %v3515 = vmul.f32 %v2234, %v3499
    %v3516 = vmul.f32 %v2235, %v3500
    %v3517 = vmul.f32 %v2236, %v3501
    %v3518 = vmul.f32 %v2237, %v3502
    %v3519 = vmul.f32 %v2238, %v3503
    %v3520 = vmul.f32 %v2239, %v3504
    %v3521 = vmul.f32 %v2240, %v3505
    %v3522 = vmul.f32 %v2241, %v3506
    %3523 = vst [vmem:[#allocation10] sm:$0xff] %v3507
    %3524 = vst [vmem:[#allocation10 + $0x8] sm:$0xff] %v3508
    %3525 = vst [vmem:[#allocation10 + $0x10] sm:$0xff] %v3509
    %3526 = vst [vmem:[#allocation10 + $0x18] sm:$0xff] %v3510
    %3527 = vst [vmem:[#allocation10 + $0x20] sm:$0xff] %v3511
    %3528 = vst [vmem:[#allocation10 + $0x28] sm:$0xff] %v3512
    %3529 = vst [vmem:[#allocation10 + $0x30] sm:$0xff] %v3513
    %3530 = vst [vmem:[#allocation10 + $0x38] sm:$0xff] %v3514
    %3531 = vst [vmem:[#allocation10 + $0x40] sm:$0xff] %v3515
    %3532 = vst [vmem:[#allocation10 + $0x48] sm:$0xff] %v3516
    %3533 = vst [vmem:[#allocation10 + $0x50] sm:$0xff] %v3517
    %3534 = vst [vmem:[#allocation10 + $0x58] sm:$0xff] %v3518
    %3535 = vst [vmem:[#allocation10 + $0x60] sm:$0xff] %v3519
    %3536 = vst [vmem:[#allocation10 + $0x68] sm:$0xff] %v3520
    %3537 = vst [vmem:[#allocation10 + $0x70] sm:$0xff] %v3521
    %3538 = vst [vmem:[#allocation10 + $0x78] sm:$0xff] %v3522
    // Predicated region
    $region50: #{tpu_custom_call.1} parent=1 // pred_check
      _
    $region51: #{tpu_custom_call.1} parent=1 // pred_check_branch
      %3540 = sbr.rel (0) target = $region53
    $region52: #{tpu_custom_call.1} parent=1 // pred_region
      %s3542 = ssub.s32 2048, 2048
      %3543 = vsyncadd [#allocation6], %s3542
      %s3544 = sshll.u32 [#allocation10], 4
      %s3545 = int_to_ptr.vmem [resolvable:$true] %s3544
      %3550 = dma.vmem_to_hbm [thread:$0]  %s3545, 2048, %s9, [#allocation6], 512, 512, 32
    $region53: #{tpu_custom_call.1} parent=1 // pred_fallthru
      _
    // Predicated region
    $region54: #{tpu_custom_call.1} parent=1 // pred_check
      _
    $region55: #{tpu_custom_call.1} parent=1 // pred_check_branch
      %3552 = sbr.rel (0) target = $region57
    $region56: #{tpu_custom_call.1} parent=1 // pred_region
      %3553 = dma.done [#allocation6], 2048
    $region57: #{tpu_custom_call.1} parent=1 // pred_fallthru
      _
    %3554 = vsyncpa [#allocation5], 1
    %3555 = vsyncpa [#allocation8], 1
    %3556 = vsyncpa [#allocation6], 1

</llo_original>
